<compile_context>
chip_gen: v7x
topology: tpu7x:2x2x1
jax: 0.10.0
libtpu: 0.0.40
codegen_flags: <defaults>
</compile_context>

<pallas_src>
import math
import functools

import jax
import jax.numpy as jnp
import numpy as np
from jax.experimental import pallas as pl
from jax.experimental.pallas import tpu as pltpu

EPS = 1e-5
DILATIONS = [1, 2, 4, 8, 1, 1]
C_MID = 32    # hidden channel count


# ----------------------------------------------------------------------------
# Fused Pallas kernel: 8 conv layers, activations resident in a bf16 VMEM
# scratch laid out (C_MID, H*W)  -> lane dim = H*W (lane-dense).
# ----------------------------------------------------------------------------
def _make_fused_kernel(H, W):
    HW = H * W

    def shift_flat(x, s):
        """y[:, p] = x[:, p + s] for 0 <= p + s < HW, else 0 (s static)."""
        c = x.shape[0]
        if s == 0:
            return x
        if abs(s) >= HW:
            return jnp.zeros_like(x)
        pad = jnp.zeros((c, abs(s)), x.dtype)
        if s > 0:
            return jnp.concatenate([x[:, s:], pad], axis=1)
        return jnp.concatenate([pad, x[:, :HW + s]], axis=1)

    def conv_cols(act, dil, col_idx):
        """Flat im2col: (Cin, HW) -> (9*Cin, HW).  Zero-padded 3x3 taps with
        dilation `dil`, built from lane shifts (vertical shift's zero-extension
        handles row validity) plus column-wrap masks."""
        taps = []
        for kh in range(3):
            dh = (kh - 1) * dil
            vert = shift_flat(act, dh * W)
            for kw in range(3):
                dw = (kw - 1) * dil
                t = shift_flat(vert, dw)
                if dw > 0:
                    t = jnp.where(col_idx < (W - dw), t, 0)
                elif dw < 0:
                    t = jnp.where(col_idx >= (-dw), t, 0)
                taps.append(t)
        return jnp.concatenate(taps, axis=0)                      # (9*Cin, HW)

    def kernel(x_ref, w_in_ref, w_mid_ref, w_out_ref, ss_ref, col_ref,
               disp_ref, o_ref, a_ref):
        # a_ref: (C_MID, HW) bf16 scratch; fully overwritten every layer, so no
        # zeroing / halo init is ever needed (safe with the 'parallel' grid).
        ss = ss_ref[...]                                          # (8, 32, 2) f32
        col_idx = col_ref[...]                                    # (1, HW) int32

        # --- layer 0: res_in (4 -> 32), conv + bias -------------------------
        cols = conv_cols(x_ref[0], 1, col_idx)                    # (36, HW) bf16
        acc = jnp.dot(w_in_ref[...], cols,
                      preferred_element_type=jnp.float32)         # (32, HW) f32
        acc = acc * ss[0, :, 0:1] + ss[0, :, 1:2]
        a_ref[...] = acc.astype(jnp.bfloat16)

        # --- layers 1..6: dilated conv -> folded BN affine -> LeakyReLU(0.2) -
        for i, d in enumerate(DILATIONS):
            cols = conv_cols(a_ref[...], d, col_idx)              # (288, HW) bf16
            acc = jnp.dot(w_mid_ref[i], cols,
                          preferred_element_type=jnp.float32)     # (32, HW) f32
            acc = acc * ss[i + 1, :, 0:1] + ss[i + 1, :, 1:2]
            acc = jnp.where(acc >= 0, acc, 0.2 * acc)
            a_ref[...] = acc.astype(jnp.bfloat16)

        # --- layer 7: res_out (32 -> 1) + bias + disp residual + ReLU --------
        cols = conv_cols(a_ref[...], 1, col_idx)                  # (288, HW) bf16
        res = jnp.dot(w_out_ref[...], cols,
                      preferred_element_type=jnp.float32)         # (1, HW) f32
        res = jnp.maximum(res + disp_ref[0] + ss[7, 0:1, 1:2], 0.0)
        o_ref[...] = res.reshape(1, 1, HW)                        # lane-dense store

    return kernel


# ----------------------------------------------------------------------------
# Parameter init (deterministic, xavier-uniform like PyTorch init_weights)
# ----------------------------------------------------------------------------
def _xavier(key, kh, kw, cin, cout):
    fan_in, fan_out = cin * kh * kw, cout * kh * kw
    limit = math.sqrt(6.0 / (fan_in + fan_out))
    w = jax.random.uniform(key, (kh, kw, cin, cout), jnp.float32, -limit, limit)
    return w.reshape(kh * kw, cin, cout)  # (9, Cin, Cout), tap-major


def init_params(key):
    keys = jax.random.split(key, 32)
    ki = iter(keys)
    params = {
        "res_in": {"w9": _xavier(next(ki), 3, 3, 4, C_MID),
                   "b": jnp.zeros((C_MID,), jnp.float32)},
        "res_conv": [],
        "res_out": {"w9": _xavier(next(ki), 3, 3, C_MID, 1),
                    "b": jnp.zeros((1,), jnp.float32)},
    }
    for _ in range(6):
        params["res_conv"].append({
            "w9": _xavier(next(ki), 3, 3, C_MID, C_MID),
            "b": jnp.zeros((C_MID,), jnp.float32),
            "gamma": 1.0 + 0.1 * jax.random.normal(next(ki), (C_MID,), jnp.float32),
            "beta": 0.1 * jax.random.normal(next(ki), (C_MID,), jnp.float32),
            "mean": 0.05 * jax.random.normal(next(ki), (C_MID,), jnp.float32),
            "var": jnp.abs(1.0 + 0.1 * jax.random.normal(next(ki), (C_MID,), jnp.float32)),
        })
    return params


def _fold_tables(params):
    """(8, C_MID, 2) table: rows 0..6 = (scale, shift) per layer, channel on
    sublanes; row 7 slot [0, 1] carries the res_out bias (added in-kernel)."""
    scales = [jnp.ones((C_MID,), jnp.float32)]
    shifts = [params["res_in"]["b"].astype(jnp.float32)]
    for p in params["res_conv"]:
        a = p["gamma"] * jax.lax.rsqrt(p["var"] + EPS)
        scales.append(a)
        shifts.append((p["b"] - p["mean"]) * a + p["beta"])
    scales.append(jnp.zeros((C_MID,), jnp.float32))
    shifts.append(jnp.zeros((C_MID,), jnp.float32).at[0].set(
        params["res_out"]["b"][0]))
    return jnp.stack([jnp.stack(scales), jnp.stack(shifts)], axis=-1)


def _vmem_limit_bytes():
    # Raise the scoped-VMEM limit (defaults: 16 MiB v5e / 32 MiB v6e,v7x) while
    # keeping headroom below physical capacity (64 MiB v7x / 128 MiB v5e,v6e).
    try:
        cap = int(pltpu.get_tpu_info().vmem_capacity_bytes)
    except Exception:
        cap = 64 * 1024 * 1024
    return int(max(48 * 1024 * 1024, (cap * 3) // 4))


# ----------------------------------------------------------------------------
# Forward pass (NCHW in / NCHW out, matching the PyTorch module)
# ----------------------------------------------------------------------------
@jax.jit
def dense_net_forward(params, image, disp_c):
    # image: (N,3,H,W) in [-1,1]; disp_c: (N,1,H,W) in [0,1]
    N, _, H, W = image.shape
    HW = H * W

    # Channel-first, spatially flattened, bf16 (halves input DMA; the MXU
    # operands were going to be bf16 anyway).
    x_flat = jnp.concatenate([image, disp_c], axis=1).reshape(
        N, 4, HW).astype(jnp.bfloat16)
    disp_flat = disp_c.reshape(N, 1, HW).astype(jnp.float32)      # f32 residual
    col_idx = (jnp.arange(HW, dtype=jnp.int32) % W).reshape(1, HW)

    # Pre-transposed packed weights: (Cout, 9*Cin), tap-major K, bf16.
    w_in_t = params["res_in"]["w9"].reshape(9 * 4, C_MID).T.astype(jnp.bfloat16)
    w_mid_t = jnp.stack([p["w9"].reshape(9 * C_MID, C_MID).T
                         for p in params["res_conv"]]).astype(jnp.bfloat16)
    w_out_t = params["res_out"]["w9"].reshape(9 * C_MID, 1).T.astype(jnp.bfloat16)
    ss = _fold_tables(params)                                     # (8, 32, 2) f32

    # NOTE: for v7x megacore, N >= 2 keeps both TensorCores busy (demo uses 2).
    out_flat = pl.pallas_call(
        _make_fused_kernel(H, W),
        out_shape=jax.ShapeDtypeStruct((N, 1, HW), jnp.float32),
        grid=(N,),
        in_specs=[
            pl.BlockSpec((1, 4, HW), lambda n: (n, 0, 0)),
            pl.BlockSpec((C_MID, 9 * 4), lambda n: (0, 0)),
            pl.BlockSpec((6, C_MID, 9 * C_MID), lambda n: (0, 0, 0)),
            pl.BlockSpec((1, 9 * C_MID), lambda n: (0, 0)),
            pl.BlockSpec((8, C_MID, 2), lambda n: (0, 0, 0)),
            pl.BlockSpec((1, HW), lambda n: (0, 0)),
            pl.BlockSpec((1, 1, HW), lambda n: (n, 0, 0)),
        ],
        out_specs=pl.BlockSpec((1, 1, HW), lambda n: (n, 0, 0)),
        scratch_shapes=[pltpu.VMEM((C_MID, HW), jnp.bfloat16)],
        compiler_params=pltpu.CompilerParams(
            dimension_semantics=("parallel",),
            vmem_limit_bytes=_vmem_limit_bytes()),
    )(x_flat, w_in_t, w_mid_t, w_out_t, ss, col_idx, disp_flat)

    return out_flat.reshape(N, 1, H, W)                           # NCHW


# ----------------------------------------------------------------------------
# Pure-JAX reference (f32, lax.conv HIGHEST) for correctness checking
# ----------------------------------------------------------------------------
def _ref_conv(x_nchw, w9, b, dil):
    cin, cout = w9.shape[1], w9.shape[2]
    w_oihw = jnp.transpose(w9.reshape(3, 3, cin, cout), (3, 2, 0, 1))
    y = jax.lax.conv_general_dilated(
        x_nchw, w_oihw, window_strides=(1, 1),
        padding=[(dil, dil), (dil, dil)], rhs_dilation=(dil, dil),
        dimension_numbers=("NCHW", "OIHW", "NCHW"),
        precision=jax.lax.Precision.HIGHEST)
    return y + b[None, :, None, None]


def reference_forward(params, image, disp_c):
    x = jnp.concatenate([image, disp_c], axis=1)
    h = _ref_conv(x, params["res_in"]["w9"], params["res_in"]["b"], 1)
    for i, d in enumerate(DILATIONS):
        p = params["res_conv"][i]
        h = _ref_conv(h, p["w9"], p["b"], d)
        h = (h - p["mean"][None, :, None, None]) / jnp.sqrt(
            p["var"][None, :, None, None] + EPS)
        h = h * p["gamma"][None, :, None, None] + p["beta"][None, :, None, None]
        h = jnp.where(h >= 0, h, 0.2 * h)
    r = _ref_conv(h, params["res_out"]["w9"], params["res_out"]["b"], 1)
    return jnp.maximum(r + disp_c, 0.0)


# ----------------------------------------------------------------------------
if __name__ == "__main__":
    key = jax.random.PRNGKey(0)
    kp, ki, kd = jax.random.split(key, 3)

    N, H, W = 2, 16, 16
    params = init_params(kp)
    image = jax.random.uniform(ki, (N, 3, H, W), jnp.float32, -1.0, 1.0)
    disp_c = jax.random.uniform(kd, (N, 1, H, W), jnp.float32, 0.0, 1.0)

    out = jax.block_until_ready(dense_net_forward(params, image, disp_c))
    ref = jax.block_until_ready(reference_forward(params, image, disp_c))

    assert out.shape == (N, 1, H, W), out.shape
    # bf16 MXU operands vs f32 HIGHEST reference over 8 conv layers -> loose tol.
    np.testing.assert_allclose(np.asarray(out), np.asarray(ref),
                               rtol=3e-2, atol=3e-2)
    print("KERNEL_OK")
</pallas_src>

<mosaic_0001>
module attributes {stable_mosaic.version = 11 : i64} {
  func.func @kernel(%arg0: i32, %arg1: memref<1x4x256xbf16, #tpu.memory_space<vmem>>, %arg2: memref<32x36xbf16, #tpu.memory_space<vmem>>, %arg3: memref<6x32x288xbf16, #tpu.memory_space<vmem>>, %arg4: memref<1x288xbf16, #tpu.memory_space<vmem>>, %arg5: memref<8x32x2xf32, #tpu.memory_space<vmem>>, %arg6: memref<1x256xi32, #tpu.memory_space<vmem>>, %arg7: memref<1x1x256xf32, #tpu.memory_space<vmem>>, %arg8: memref<1x1x256xf32, #tpu.memory_space<vmem>>, %arg9: memref<32x256xbf16, #tpu.memory_space<vmem>>) attributes {dimension_semantics = [#tpu.dimension_semantics<parallel>], iteration_bounds = array<i64: 2>, scalar_prefetch = 0 : i64, scratch_operands = 1 : i64, tpu.core_type = #tpu.core_type<tc>, window_params = [{transform_indices = @transform_0, window_bounds = array<i64: 1, 4, 256>}, {pipeline_mode = #tpu.pipeline_mode<synchronous>, transform_indices = @transform_1, window_bounds = array<i64: 32, 36>}, {pipeline_mode = #tpu.pipeline_mode<synchronous>, transform_indices = @transform_2, window_bounds = array<i64: 6, 32, 288>}, {pipeline_mode = #tpu.pipeline_mode<synchronous>, transform_indices = @transform_3, window_bounds = array<i64: 1, 288>}, {pipeline_mode = #tpu.pipeline_mode<synchronous>, transform_indices = @transform_4, window_bounds = array<i64: 8, 32, 2>}, {pipeline_mode = #tpu.pipeline_mode<synchronous>, transform_indices = @transform_5, window_bounds = array<i64: 1, 256>}, {transform_indices = @transform_6, window_bounds = array<i64: 1, 1, 256>}, {transform_indices = @transform_7, window_bounds = array<i64: 1, 1, 256>}]} {
    %c0 = arith.constant 0 : index
    %c0_0 = arith.constant 0 : index
    %c0_1 = arith.constant 0 : index
    %0 = vector.load %arg5[%c0, %c0_0, %c0_1] : memref<8x32x2xf32, #tpu.memory_space<vmem>>, vector<8x32x2xf32>
    %c0_2 = arith.constant 0 : index
    %c0_3 = arith.constant 0 : index
    %1 = vector.load %arg6[%c0_2, %c0_3] : memref<1x256xi32, #tpu.memory_space<vmem>>, vector<1x256xi32>
    %c0_4 = arith.constant 0 : index
    %c0_5 = arith.constant 0 : index
    %c0_6 = arith.constant 0 : index
    %2 = vector.load %arg1[%c0_4, %c0_5, %c0_6] : memref<1x4x256xbf16, #tpu.memory_space<vmem>>, vector<1x4x256xbf16>
    %3 = vector.shape_cast %2 : vector<1x4x256xbf16> to vector<4x256xbf16>
    %cst = arith.constant 0.000000e+00 : bf16
    %4 = vector.broadcast %cst : bf16 to vector<4x16xbf16>
    %5 = vector.extract_strided_slice %3 {offsets = [0, 0], sizes = [4, 240], strides = [1, 1]} : vector<4x256xbf16> to vector<4x240xbf16>
    %6 = tpu.concatenate %4, %5 in 1 : vector<4x16xbf16>, vector<4x240xbf16> -> vector<4x256xbf16>
    %cst_7 = arith.constant 0.000000e+00 : bf16
    %7 = vector.broadcast %cst_7 : bf16 to vector<4x1xbf16>
    %8 = vector.extract_strided_slice %6 {offsets = [0, 0], sizes = [4, 255], strides = [1, 1]} : vector<4x256xbf16> to vector<4x255xbf16>
    %9 = tpu.concatenate %7, %8 in 1 : vector<4x1xbf16>, vector<4x255xbf16> -> vector<4x256xbf16>
    %c1_i32 = arith.constant 1 : i32
    %10 = vector.broadcast %c1_i32 : i32 to vector<1x256xi32>
    %11 = arith.cmpi sge, %1, %10 : vector<1x256xi32>
    %c0_i32 = arith.constant 0 : i32
    %12 = arith.sitofp %c0_i32 : i32 to bf16
    %13 = vector.shape_cast %11 : vector<1x256xi1> to vector<1x256xi1>
    %14 = vector.broadcast %13 : vector<1x256xi1> to vector<4x256xi1>
    %15 = vector.broadcast %12 : bf16 to vector<4x256xbf16>
    %16 = arith.select %14, %9, %15 : vector<4x256xi1>, vector<4x256xbf16>
    %cst_8 = arith.constant 0.000000e+00 : bf16
    %17 = vector.broadcast %cst_8 : bf16 to vector<4x1xbf16>
    %18 = vector.extract_strided_slice %6 {offsets = [0, 1], sizes = [4, 255], strides = [1, 1]} : vector<4x256xbf16> to vector<4x255xbf16>
    %19 = tpu.concatenate %18, %17 in 1 : vector<4x255xbf16>, vector<4x1xbf16> -> vector<4x256xbf16>
    %c15_i32 = arith.constant 15 : i32
    %20 = vector.broadcast %c15_i32 : i32 to vector<1x256xi32>
    %21 = arith.cmpi slt, %1, %20 : vector<1x256xi32>
    %c0_i32_9 = arith.constant 0 : i32
    %22 = arith.sitofp %c0_i32_9 : i32 to bf16
    %23 = vector.shape_cast %21 : vector<1x256xi1> to vector<1x256xi1>
    %24 = vector.broadcast %23 : vector<1x256xi1> to vector<4x256xi1>
    %25 = vector.broadcast %22 : bf16 to vector<4x256xbf16>
    %26 = arith.select %24, %19, %25 : vector<4x256xi1>, vector<4x256xbf16>
    %cst_10 = arith.constant 0.000000e+00 : bf16
    %27 = vector.broadcast %cst_10 : bf16 to vector<4x1xbf16>
    %28 = vector.extract_strided_slice %3 {offsets = [0, 0], sizes = [4, 255], strides = [1, 1]} : vector<4x256xbf16> to vector<4x255xbf16>
    %29 = tpu.concatenate %27, %28 in 1 : vector<4x1xbf16>, vector<4x255xbf16> -> vector<4x256xbf16>
    %c1_i32_11 = arith.constant 1 : i32
    %30 = vector.broadcast %c1_i32_11 : i32 to vector<1x256xi32>
    %31 = arith.cmpi sge, %1, %30 : vector<1x256xi32>
    %c0_i32_12 = arith.constant 0 : i32
    %32 = arith.sitofp %c0_i32_12 : i32 to bf16
    %33 = vector.shape_cast %31 : vector<1x256xi1> to vector<1x256xi1>
    %34 = vector.broadcast %33 : vector<1x256xi1> to vector<4x256xi1>
    %35 = vector.broadcast %32 : bf16 to vector<4x256xbf16>
    %36 = arith.select %34, %29, %35 : vector<4x256xi1>, vector<4x256xbf16>
    %cst_13 = arith.constant 0.000000e+00 : bf16
    %37 = vector.broadcast %cst_13 : bf16 to vector<4x1xbf16>
    %38 = vector.extract_strided_slice %3 {offsets = [0, 1], sizes = [4, 255], strides = [1, 1]} : vector<4x256xbf16> to vector<4x255xbf16>
    %39 = tpu.concatenate %38, %37 in 1 : vector<4x255xbf16>, vector<4x1xbf16> -> vector<4x256xbf16>
    %c15_i32_14 = arith.constant 15 : i32
    %40 = vector.broadcast %c15_i32_14 : i32 to vector<1x256xi32>
    %41 = arith.cmpi slt, %1, %40 : vector<1x256xi32>
    %c0_i32_15 = arith.constant 0 : i32
    %42 = arith.sitofp %c0_i32_15 : i32 to bf16
    %43 = vector.shape_cast %41 : vector<1x256xi1> to vector<1x256xi1>
    %44 = vector.broadcast %43 : vector<1x256xi1> to vector<4x256xi1>
    %45 = vector.broadcast %42 : bf16 to vector<4x256xbf16>
    %46 = arith.select %44, %39, %45 : vector<4x256xi1>, vector<4x256xbf16>
    %cst_16 = arith.constant 0.000000e+00 : bf16
    %47 = vector.broadcast %cst_16 : bf16 to vector<4x16xbf16>
    %48 = vector.extract_strided_slice %3 {offsets = [0, 16], sizes = [4, 240], strides = [1, 1]} : vector<4x256xbf16> to vector<4x240xbf16>
    %49 = tpu.concatenate %48, %47 in 1 : vector<4x240xbf16>, vector<4x16xbf16> -> vector<4x256xbf16>
    %cst_17 = arith.constant 0.000000e+00 : bf16
    %50 = vector.broadcast %cst_17 : bf16 to vector<4x1xbf16>
    %51 = vector.extract_strided_slice %49 {offsets = [0, 0], sizes = [4, 255], strides = [1, 1]} : vector<4x256xbf16> to vector<4x255xbf16>
    %52 = tpu.concatenate %50, %51 in 1 : vector<4x1xbf16>, vector<4x255xbf16> -> vector<4x256xbf16>
    %c1_i32_18 = arith.constant 1 : i32
    %53 = vector.broadcast %c1_i32_18 : i32 to vector<1x256xi32>
    %54 = arith.cmpi sge, %1, %53 : vector<1x256xi32>
    %c0_i32_19 = arith.constant 0 : i32
    %55 = arith.sitofp %c0_i32_19 : i32 to bf16
    %56 = vector.shape_cast %54 : vector<1x256xi1> to vector<1x256xi1>
    %57 = vector.broadcast %56 : vector<1x256xi1> to vector<4x256xi1>
    %58 = vector.broadcast %55 : bf16 to vector<4x256xbf16>
    %59 = arith.select %57, %52, %58 : vector<4x256xi1>, vector<4x256xbf16>
    %cst_20 = arith.constant 0.000000e+00 : bf16
    %60 = vector.broadcast %cst_20 : bf16 to vector<4x1xbf16>
    %61 = vector.extract_strided_slice %49 {offsets = [0, 1], sizes = [4, 255], strides = [1, 1]} : vector<4x256xbf16> to vector<4x255xbf16>
    %62 = tpu.concatenate %61, %60 in 1 : vector<4x255xbf16>, vector<4x1xbf16> -> vector<4x256xbf16>
    %c15_i32_21 = arith.constant 15 : i32
    %63 = vector.broadcast %c15_i32_21 : i32 to vector<1x256xi32>
    %64 = arith.cmpi slt, %1, %63 : vector<1x256xi32>
    %c0_i32_22 = arith.constant 0 : i32
    %65 = arith.sitofp %c0_i32_22 : i32 to bf16
    %66 = vector.shape_cast %64 : vector<1x256xi1> to vector<1x256xi1>
    %67 = vector.broadcast %66 : vector<1x256xi1> to vector<4x256xi1>
    %68 = vector.broadcast %65 : bf16 to vector<4x256xbf16>
    %69 = arith.select %67, %62, %68 : vector<4x256xi1>, vector<4x256xbf16>
    %70 = tpu.concatenate %16, %6, %26, %36, %3, %46, %59, %49, %69 in 0 : vector<4x256xbf16>, vector<4x256xbf16>, vector<4x256xbf16>, vector<4x256xbf16>, vector<4x256xbf16>, vector<4x256xbf16>, vector<4x256xbf16>, vector<4x256xbf16>, vector<4x256xbf16> -> vector<36x256xbf16>
    %c0_23 = arith.constant 0 : index
    %c0_24 = arith.constant 0 : index
    %71 = vector.load %arg2[%c0_23, %c0_24] : memref<32x36xbf16, #tpu.memory_space<vmem>>, vector<32x36xbf16>
    %cst_25 = arith.constant dense<0.000000e+00> : vector<32x256xf32>
    %72 = tpu.matmul %71, %70, %cst_25 {dimension_numbers = #tpu.dot_dimension_numbers<[1], [0], [0], [1], [0, 0, 1, 1], [], []>} : vector<32x36xbf16>, vector<36x256xbf16>, vector<32x256xf32> -> vector<32x256xf32>
    %73 = vector.extract_strided_slice %0 {offsets = [0, 0, 0], sizes = [1, 32, 1], strides = [1, 1, 1]} : vector<8x32x2xf32> to vector<1x32x1xf32>
    %74 = vector.shape_cast %73 : vector<1x32x1xf32> to vector<32x1xf32>
    %75 = vector.broadcast %74 : vector<32x1xf32> to vector<32x256xf32>
    %76 = arith.mulf %72, %75 : vector<32x256xf32>
    %77 = vector.extract_strided_slice %0 {offsets = [0, 0, 1], sizes = [1, 32, 1], strides = [1, 1, 1]} : vector<8x32x2xf32> to vector<1x32x1xf32>
    %78 = vector.shape_cast %77 : vector<1x32x1xf32> to vector<32x1xf32>
    %79 = vector.broadcast %78 : vector<32x1xf32> to vector<32x256xf32>
    %80 = arith.addf %76, %79 : vector<32x256xf32>
    %81 = arith.truncf %80 : vector<32x256xf32> to vector<32x256xbf16>
    %c0_26 = arith.constant 0 : index
    %c0_27 = arith.constant 0 : index
    %82 = vector.load %arg9[%c0_26, %c0_27] : memref<32x256xbf16, #tpu.memory_space<vmem>>, vector<32x256xbf16>
    tpu.vector_store %arg9[%c0_26, %c0_27], %81 {strides = array<i32>} : memref<32x256xbf16, #tpu.memory_space<vmem>>, vector<32x256xbf16>,
    %c0_28 = arith.constant 0 : index
    %c0_29 = arith.constant 0 : index
    %83 = vector.load %arg9[%c0_28, %c0_29] : memref<32x256xbf16, #tpu.memory_space<vmem>>, vector<32x256xbf16>
    %cst_30 = arith.constant 0.000000e+00 : bf16
    %84 = vector.broadcast %cst_30 : bf16 to vector<32x16xbf16>
    %85 = vector.extract_strided_slice %83 {offsets = [0, 0], sizes = [32, 240], strides = [1, 1]} : vector<32x256xbf16> to vector<32x240xbf16>
    %86 = tpu.concatenate %84, %85 in 1 : vector<32x16xbf16>, vector<32x240xbf16> -> vector<32x256xbf16>
    %cst_31 = arith.constant 0.000000e+00 : bf16
    %87 = vector.broadcast %cst_31 : bf16 to vector<32x1xbf16>
    %88 = vector.extract_strided_slice %86 {offsets = [0, 0], sizes = [32, 255], strides = [1, 1]} : vector<32x256xbf16> to vector<32x255xbf16>
    %89 = tpu.concatenate %87, %88 in 1 : vector<32x1xbf16>, vector<32x255xbf16> -> vector<32x256xbf16>
    %c1_i32_32 = arith.constant 1 : i32
    %90 = vector.broadcast %c1_i32_32 : i32 to vector<1x256xi32>
    %91 = arith.cmpi sge, %1, %90 : vector<1x256xi32>
    %c0_i32_33 = arith.constant 0 : i32
    %92 = arith.sitofp %c0_i32_33 : i32 to bf16
    %93 = vector.shape_cast %91 : vector<1x256xi1> to vector<1x256xi1>
    %94 = vector.broadcast %93 : vector<1x256xi1> to vector<32x256xi1>
    %95 = vector.broadcast %92 : bf16 to vector<32x256xbf16>
    %96 = arith.select %94, %89, %95 : vector<32x256xi1>, vector<32x256xbf16>
    %cst_34 = arith.constant 0.000000e+00 : bf16
    %97 = vector.broadcast %cst_34 : bf16 to vector<32x1xbf16>
    %98 = vector.extract_strided_slice %86 {offsets = [0, 1], sizes = [32, 255], strides = [1, 1]} : vector<32x256xbf16> to vector<32x255xbf16>
    %99 = tpu.concatenate %98, %97 in 1 : vector<32x255xbf16>, vector<32x1xbf16> -> vector<32x256xbf16>
    %c15_i32_35 = arith.constant 15 : i32
    %100 = vector.broadcast %c15_i32_35 : i32 to vector<1x256xi32>
    %101 = arith.cmpi slt, %1, %100 : vector<1x256xi32>
    %c0_i32_36 = arith.constant 0 : i32
    %102 = arith.sitofp %c0_i32_36 : i32 to bf16
    %103 = vector.shape_cast %101 : vector<1x256xi1> to vector<1x256xi1>
    %104 = vector.broadcast %103 : vector<1x256xi1> to vector<32x256xi1>
    %105 = vector.broadcast %102 : bf16 to vector<32x256xbf16>
    %106 = arith.select %104, %99, %105 : vector<32x256xi1>, vector<32x256xbf16>
    %cst_37 = arith.constant 0.000000e+00 : bf16
    %107 = vector.broadcast %cst_37 : bf16 to vector<32x1xbf16>
    %108 = vector.extract_strided_slice %83 {offsets = [0, 0], sizes = [32, 255], strides = [1, 1]} : vector<32x256xbf16> to vector<32x255xbf16>
    %109 = tpu.concatenate %107, %108 in 1 : vector<32x1xbf16>, vector<32x255xbf16> -> vector<32x256xbf16>
    %c1_i32_38 = arith.constant 1 : i32
    %110 = vector.broadcast %c1_i32_38 : i32 to vector<1x256xi32>
    %111 = arith.cmpi sge, %1, %110 : vector<1x256xi32>
    %c0_i32_39 = arith.constant 0 : i32
    %112 = arith.sitofp %c0_i32_39 : i32 to bf16
    %113 = vector.shape_cast %111 : vector<1x256xi1> to vector<1x256xi1>
    %114 = vector.broadcast %113 : vector<1x256xi1> to vector<32x256xi1>
    %115 = vector.broadcast %112 : bf16 to vector<32x256xbf16>
    %116 = arith.select %114, %109, %115 : vector<32x256xi1>, vector<32x256xbf16>
    %cst_40 = arith.constant 0.000000e+00 : bf16
    %117 = vector.broadcast %cst_40 : bf16 to vector<32x1xbf16>
    %118 = vector.extract_strided_slice %83 {offsets = [0, 1], sizes = [32, 255], strides = [1, 1]} : vector<32x256xbf16> to vector<32x255xbf16>
    %119 = tpu.concatenate %118, %117 in 1 : vector<32x255xbf16>, vector<32x1xbf16> -> vector<32x256xbf16>
    %c15_i32_41 = arith.constant 15 : i32
    %120 = vector.broadcast %c15_i32_41 : i32 to vector<1x256xi32>
    %121 = arith.cmpi slt, %1, %120 : vector<1x256xi32>
    %c0_i32_42 = arith.constant 0 : i32
    %122 = arith.sitofp %c0_i32_42 : i32 to bf16
    %123 = vector.shape_cast %121 : vector<1x256xi1> to vector<1x256xi1>
    %124 = vector.broadcast %123 : vector<1x256xi1> to vector<32x256xi1>
    %125 = vector.broadcast %122 : bf16 to vector<32x256xbf16>
    %126 = arith.select %124, %119, %125 : vector<32x256xi1>, vector<32x256xbf16>
    %cst_43 = arith.constant 0.000000e+00 : bf16
    %127 = vector.broadcast %cst_43 : bf16 to vector<32x16xbf16>
    %128 = vector.extract_strided_slice %83 {offsets = [0, 16], sizes = [32, 240], strides = [1, 1]} : vector<32x256xbf16> to vector<32x240xbf16>
    %129 = tpu.concatenate %128, %127 in 1 : vector<32x240xbf16>, vector<32x16xbf16> -> vector<32x256xbf16>
    %cst_44 = arith.constant 0.000000e+00 : bf16
    %130 = vector.broadcast %cst_44 : bf16 to vector<32x1xbf16>
    %131 = vector.extract_strided_slice %129 {offsets = [0, 0], sizes = [32, 255], strides = [1, 1]} : vector<32x256xbf16> to vector<32x255xbf16>
    %132 = tpu.concatenate %130, %131 in 1 : vector<32x1xbf16>, vector<32x255xbf16> -> vector<32x256xbf16>
    %c1_i32_45 = arith.constant 1 : i32
    %133 = vector.broadcast %c1_i32_45 : i32 to vector<1x256xi32>
    %134 = arith.cmpi sge, %1, %133 : vector<1x256xi32>
    %c0_i32_46 = arith.constant 0 : i32
    %135 = arith.sitofp %c0_i32_46 : i32 to bf16
    %136 = vector.shape_cast %134 : vector<1x256xi1> to vector<1x256xi1>
    %137 = vector.broadcast %136 : vector<1x256xi1> to vector<32x256xi1>
    %138 = vector.broadcast %135 : bf16 to vector<32x256xbf16>
    %139 = arith.select %137, %132, %138 : vector<32x256xi1>, vector<32x256xbf16>
    %cst_47 = arith.constant 0.000000e+00 : bf16
    %140 = vector.broadcast %cst_47 : bf16 to vector<32x1xbf16>
    %141 = vector.extract_strided_slice %129 {offsets = [0, 1], sizes = [32, 255], strides = [1, 1]} : vector<32x256xbf16> to vector<32x255xbf16>
    %142 = tpu.concatenate %141, %140 in 1 : vector<32x255xbf16>, vector<32x1xbf16> -> vector<32x256xbf16>
    %c15_i32_48 = arith.constant 15 : i32
    %143 = vector.broadcast %c15_i32_48 : i32 to vector<1x256xi32>
    %144 = arith.cmpi slt, %1, %143 : vector<1x256xi32>
    %c0_i32_49 = arith.constant 0 : i32
    %145 = arith.sitofp %c0_i32_49 : i32 to bf16
    %146 = vector.shape_cast %144 : vector<1x256xi1> to vector<1x256xi1>
    %147 = vector.broadcast %146 : vector<1x256xi1> to vector<32x256xi1>
    %148 = vector.broadcast %145 : bf16 to vector<32x256xbf16>
    %149 = arith.select %147, %142, %148 : vector<32x256xi1>, vector<32x256xbf16>
    %150 = tpu.concatenate %96, %86, %106, %116, %83, %126, %139, %129, %149 in 0 : vector<32x256xbf16>, vector<32x256xbf16>, vector<32x256xbf16>, vector<32x256xbf16>, vector<32x256xbf16>, vector<32x256xbf16>, vector<32x256xbf16>, vector<32x256xbf16>, vector<32x256xbf16> -> vector<288x256xbf16>
    %c0_50 = arith.constant 0 : index
    %c0_51 = arith.constant 0 : index
    %c0_52 = arith.constant 0 : index
    %151 = vector.load %arg3[%c0_50, %c0_51, %c0_52] : memref<6x32x288xbf16, #tpu.memory_space<vmem>>, vector<1x32x288xbf16>
    %152 = vector.shape_cast %151 : vector<1x32x288xbf16> to vector<32x288xbf16>
    %cst_53 = arith.constant dense<0.000000e+00> : vector<32x256xf32>
    %153 = tpu.matmul %152, %150, %cst_53 {dimension_numbers = #tpu.dot_dimension_numbers<[1], [0], [0], [1], [0, 0, 1, 1], [], []>} : vector<32x288xbf16>, vector<288x256xbf16>, vector<32x256xf32> -> vector<32x256xf32>
    %154 = vector.extract_strided_slice %0 {offsets = [1, 0, 0], sizes = [1, 32, 1], strides = [1, 1, 1]} : vector<8x32x2xf32> to vector<1x32x1xf32>
    %155 = vector.shape_cast %154 : vector<1x32x1xf32> to vector<32x1xf32>
    %156 = vector.broadcast %155 : vector<32x1xf32> to vector<32x256xf32>
    %157 = arith.mulf %153, %156 : vector<32x256xf32>
    %158 = vector.extract_strided_slice %0 {offsets = [1, 0, 1], sizes = [1, 32, 1], strides = [1, 1, 1]} : vector<8x32x2xf32> to vector<1x32x1xf32>
    %159 = vector.shape_cast %158 : vector<1x32x1xf32> to vector<32x1xf32>
    %160 = vector.broadcast %159 : vector<32x1xf32> to vector<32x256xf32>
    %161 = arith.addf %157, %160 : vector<32x256xf32>
    %cst_54 = arith.constant 0.000000e+00 : f32
    %162 = vector.broadcast %cst_54 : f32 to vector<32x256xf32>
    %163 = arith.cmpf oge, %161, %162 : vector<32x256xf32>
    %cst_55 = arith.constant 2.000000e-01 : f32
    %164 = vector.broadcast %cst_55 : f32 to vector<32x256xf32>
    %165 = arith.mulf %164, %161 : vector<32x256xf32>
    %166 = arith.select %163, %161, %165 : vector<32x256xi1>, vector<32x256xf32>
    %167 = arith.truncf %166 : vector<32x256xf32> to vector<32x256xbf16>
    %c0_56 = arith.constant 0 : index
    %c0_57 = arith.constant 0 : index
    %168 = vector.load %arg9[%c0_56, %c0_57] : memref<32x256xbf16, #tpu.memory_space<vmem>>, vector<32x256xbf16>
    tpu.vector_store %arg9[%c0_56, %c0_57], %167 {strides = array<i32>} : memref<32x256xbf16, #tpu.memory_space<vmem>>, vector<32x256xbf16>,
    %c0_58 = arith.constant 0 : index
    %c0_59 = arith.constant 0 : index
    %169 = vector.load %arg9[%c0_58, %c0_59] : memref<32x256xbf16, #tpu.memory_space<vmem>>, vector<32x256xbf16>
    %cst_60 = arith.constant 0.000000e+00 : bf16
    %170 = vector.broadcast %cst_60 : bf16 to vector<32x32xbf16>
    %171 = vector.extract_strided_slice %169 {offsets = [0, 0], sizes = [32, 224], strides = [1, 1]} : vector<32x256xbf16> to vector<32x224xbf16>
    %172 = tpu.concatenate %170, %171 in 1 : vector<32x32xbf16>, vector<32x224xbf16> -> vector<32x256xbf16>
    %cst_61 = arith.constant 0.000000e+00 : bf16
    %173 = vector.broadcast %cst_61 : bf16 to vector<32x2xbf16>
    %174 = vector.extract_strided_slice %172 {offsets = [0, 0], sizes = [32, 254], strides = [1, 1]} : vector<32x256xbf16> to vector<32x254xbf16>
    %175 = tpu.concatenate %173, %174 in 1 : vector<32x2xbf16>, vector<32x254xbf16> -> vector<32x256xbf16>
    %c2_i32 = arith.constant 2 : i32
    %176 = vector.broadcast %c2_i32 : i32 to vector<1x256xi32>
    %177 = arith.cmpi sge, %1, %176 : vector<1x256xi32>
    %c0_i32_62 = arith.constant 0 : i32
    %178 = arith.sitofp %c0_i32_62 : i32 to bf16
    %179 = vector.shape_cast %177 : vector<1x256xi1> to vector<1x256xi1>
    %180 = vector.broadcast %179 : vector<1x256xi1> to vector<32x256xi1>
    %181 = vector.broadcast %178 : bf16 to vector<32x256xbf16>
    %182 = arith.select %180, %175, %181 : vector<32x256xi1>, vector<32x256xbf16>
    %cst_63 = arith.constant 0.000000e+00 : bf16
    %183 = vector.broadcast %cst_63 : bf16 to vector<32x2xbf16>
    %184 = vector.extract_strided_slice %172 {offsets = [0, 2], sizes = [32, 254], strides = [1, 1]} : vector<32x256xbf16> to vector<32x254xbf16>
    %185 = tpu.concatenate %184, %183 in 1 : vector<32x254xbf16>, vector<32x2xbf16> -> vector<32x256xbf16>
    %c14_i32 = arith.constant 14 : i32
    %186 = vector.broadcast %c14_i32 : i32 to vector<1x256xi32>
    %187 = arith.cmpi slt, %1, %186 : vector<1x256xi32>
    %c0_i32_64 = arith.constant 0 : i32
    %188 = arith.sitofp %c0_i32_64 : i32 to bf16
    %189 = vector.shape_cast %187 : vector<1x256xi1> to vector<1x256xi1>
    %190 = vector.broadcast %189 : vector<1x256xi1> to vector<32x256xi1>
    %191 = vector.broadcast %188 : bf16 to vector<32x256xbf16>
    %192 = arith.select %190, %185, %191 : vector<32x256xi1>, vector<32x256xbf16>
    %cst_65 = arith.constant 0.000000e+00 : bf16
    %193 = vector.broadcast %cst_65 : bf16 to vector<32x2xbf16>
    %194 = vector.extract_strided_slice %169 {offsets = [0, 0], sizes = [32, 254], strides = [1, 1]} : vector<32x256xbf16> to vector<32x254xbf16>
    %195 = tpu.concatenate %193, %194 in 1 : vector<32x2xbf16>, vector<32x254xbf16> -> vector<32x256xbf16>
    %c2_i32_66 = arith.constant 2 : i32
    %196 = vector.broadcast %c2_i32_66 : i32 to vector<1x256xi32>
    %197 = arith.cmpi sge, %1, %196 : vector<1x256xi32>
    %c0_i32_67 = arith.constant 0 : i32
    %198 = arith.sitofp %c0_i32_67 : i32 to bf16
    %199 = vector.shape_cast %197 : vector<1x256xi1> to vector<1x256xi1>
    %200 = vector.broadcast %199 : vector<1x256xi1> to vector<32x256xi1>
    %201 = vector.broadcast %198 : bf16 to vector<32x256xbf16>
    %202 = arith.select %200, %195, %201 : vector<32x256xi1>, vector<32x256xbf16>
    %cst_68 = arith.constant 0.000000e+00 : bf16
    %203 = vector.broadcast %cst_68 : bf16 to vector<32x2xbf16>
    %204 = vector.extract_strided_slice %169 {offsets = [0, 2], sizes = [32, 254], strides = [1, 1]} : vector<32x256xbf16> to vector<32x254xbf16>
    %205 = tpu.concatenate %204, %203 in 1 : vector<32x254xbf16>, vector<32x2xbf16> -> vector<32x256xbf16>
    %c14_i32_69 = arith.constant 14 : i32
    %206 = vector.broadcast %c14_i32_69 : i32 to vector<1x256xi32>
    %207 = arith.cmpi slt, %1, %206 : vector<1x256xi32>
    %c0_i32_70 = arith.constant 0 : i32
    %208 = arith.sitofp %c0_i32_70 : i32 to bf16
    %209 = vector.shape_cast %207 : vector<1x256xi1> to vector<1x256xi1>
    %210 = vector.broadcast %209 : vector<1x256xi1> to vector<32x256xi1>
    %211 = vector.broadcast %208 : bf16 to vector<32x256xbf16>
    %212 = arith.select %210, %205, %211 : vector<32x256xi1>, vector<32x256xbf16>
    %cst_71 = arith.constant 0.000000e+00 : bf16
    %213 = vector.broadcast %cst_71 : bf16 to vector<32x32xbf16>
    %214 = vector.extract_strided_slice %169 {offsets = [0, 32], sizes = [32, 224], strides = [1, 1]} : vector<32x256xbf16> to vector<32x224xbf16>
    %215 = tpu.concatenate %214, %213 in 1 : vector<32x224xbf16>, vector<32x32xbf16> -> vector<32x256xbf16>
    %cst_72 = arith.constant 0.000000e+00 : bf16
    %216 = vector.broadcast %cst_72 : bf16 to vector<32x2xbf16>
    %217 = vector.extract_strided_slice %215 {offsets = [0, 0], sizes = [32, 254], strides = [1, 1]} : vector<32x256xbf16> to vector<32x254xbf16>
    %218 = tpu.concatenate %216, %217 in 1 : vector<32x2xbf16>, vector<32x254xbf16> -> vector<32x256xbf16>
    %c2_i32_73 = arith.constant 2 : i32
    %219 = vector.broadcast %c2_i32_73 : i32 to vector<1x256xi32>
    %220 = arith.cmpi sge, %1, %219 : vector<1x256xi32>
    %c0_i32_74 = arith.constant 0 : i32
    %221 = arith.sitofp %c0_i32_74 : i32 to bf16
    %222 = vector.shape_cast %220 : vector<1x256xi1> to vector<1x256xi1>
    %223 = vector.broadcast %222 : vector<1x256xi1> to vector<32x256xi1>
    %224 = vector.broadcast %221 : bf16 to vector<32x256xbf16>
    %225 = arith.select %223, %218, %224 : vector<32x256xi1>, vector<32x256xbf16>
    %cst_75 = arith.constant 0.000000e+00 : bf16
    %226 = vector.broadcast %cst_75 : bf16 to vector<32x2xbf16>
    %227 = vector.extract_strided_slice %215 {offsets = [0, 2], sizes = [32, 254], strides = [1, 1]} : vector<32x256xbf16> to vector<32x254xbf16>
    %228 = tpu.concatenate %227, %226 in 1 : vector<32x254xbf16>, vector<32x2xbf16> -> vector<32x256xbf16>
    %c14_i32_76 = arith.constant 14 : i32
    %229 = vector.broadcast %c14_i32_76 : i32 to vector<1x256xi32>
    %230 = arith.cmpi slt, %1, %229 : vector<1x256xi32>
    %c0_i32_77 = arith.constant 0 : i32
    %231 = arith.sitofp %c0_i32_77 : i32 to bf16
    %232 = vector.shape_cast %230 : vector<1x256xi1> to vector<1x256xi1>
    %233 = vector.broadcast %232 : vector<1x256xi1> to vector<32x256xi1>
    %234 = vector.broadcast %231 : bf16 to vector<32x256xbf16>
    %235 = arith.select %233, %228, %234 : vector<32x256xi1>, vector<32x256xbf16>
    %236 = tpu.concatenate %182, %172, %192, %202, %169, %212, %225, %215, %235 in 0 : vector<32x256xbf16>, vector<32x256xbf16>, vector<32x256xbf16>, vector<32x256xbf16>, vector<32x256xbf16>, vector<32x256xbf16>, vector<32x256xbf16>, vector<32x256xbf16>, vector<32x256xbf16> -> vector<288x256xbf16>
    %c1 = arith.constant 1 : index
    %c0_78 = arith.constant 0 : index
    %c0_79 = arith.constant 0 : index
    %237 = vector.load %arg3[%c1, %c0_78, %c0_79] : memref<6x32x288xbf16, #tpu.memory_space<vmem>>, vector<1x32x288xbf16>
    %238 = vector.shape_cast %237 : vector<1x32x288xbf16> to vector<32x288xbf16>
    %cst_80 = arith.constant dense<0.000000e+00> : vector<32x256xf32>
    %239 = tpu.matmul %238, %236, %cst_80 {dimension_numbers = #tpu.dot_dimension_numbers<[1], [0], [0], [1], [0, 0, 1, 1], [], []>} : vector<32x288xbf16>, vector<288x256xbf16>, vector<32x256xf32> -> vector<32x256xf32>
    %240 = vector.extract_strided_slice %0 {offsets = [2, 0, 0], sizes = [1, 32, 1], strides = [1, 1, 1]} : vector<8x32x2xf32> to vector<1x32x1xf32>
    %241 = vector.shape_cast %240 : vector<1x32x1xf32> to vector<32x1xf32>
    %242 = vector.broadcast %241 : vector<32x1xf32> to vector<32x256xf32>
    %243 = arith.mulf %239, %242 : vector<32x256xf32>
    %244 = vector.extract_strided_slice %0 {offsets = [2, 0, 1], sizes = [1, 32, 1], strides = [1, 1, 1]} : vector<8x32x2xf32> to vector<1x32x1xf32>
    %245 = vector.shape_cast %244 : vector<1x32x1xf32> to vector<32x1xf32>
    %246 = vector.broadcast %245 : vector<32x1xf32> to vector<32x256xf32>
    %247 = arith.addf %243, %246 : vector<32x256xf32>
    %cst_81 = arith.constant 0.000000e+00 : f32
    %248 = vector.broadcast %cst_81 : f32 to vector<32x256xf32>
    %249 = arith.cmpf oge, %247, %248 : vector<32x256xf32>
    %cst_82 = arith.constant 2.000000e-01 : f32
    %250 = vector.broadcast %cst_82 : f32 to vector<32x256xf32>
    %251 = arith.mulf %250, %247 : vector<32x256xf32>
    %252 = arith.select %249, %247, %251 : vector<32x256xi1>, vector<32x256xf32>
    %253 = arith.truncf %252 : vector<32x256xf32> to vector<32x256xbf16>
    %c0_83 = arith.constant 0 : index
    %c0_84 = arith.constant 0 : index
    %254 = vector.load %arg9[%c0_83, %c0_84] : memref<32x256xbf16, #tpu.memory_space<vmem>>, vector<32x256xbf16>
    tpu.vector_store %arg9[%c0_83, %c0_84], %253 {strides = array<i32>} : memref<32x256xbf16, #tpu.memory_space<vmem>>, vector<32x256xbf16>,
    %c0_85 = arith.constant 0 : index
    %c0_86 = arith.constant 0 : index
    %255 = vector.load %arg9[%c0_85, %c0_86] : memref<32x256xbf16, #tpu.memory_space<vmem>>, vector<32x256xbf16>
    %cst_87 = arith.constant 0.000000e+00 : bf16
    %256 = vector.broadcast %cst_87 : bf16 to vector<32x64xbf16>
    %257 = vector.extract_strided_slice %255 {offsets = [0, 0], sizes = [32, 192], strides = [1, 1]} : vector<32x256xbf16> to vector<32x192xbf16>
    %258 = tpu.concatenate %256, %257 in 1 : vector<32x64xbf16>, vector<32x192xbf16> -> vector<32x256xbf16>
    %cst_88 = arith.constant 0.000000e+00 : bf16
    %259 = vector.broadcast %cst_88 : bf16 to vector<32x4xbf16>
    %260 = vector.extract_strided_slice %258 {offsets = [0, 0], sizes = [32, 252], strides = [1, 1]} : vector<32x256xbf16> to vector<32x252xbf16>
    %261 = tpu.concatenate %259, %260 in 1 : vector<32x4xbf16>, vector<32x252xbf16> -> vector<32x256xbf16>
    %c4_i32 = arith.constant 4 : i32
    %262 = vector.broadcast %c4_i32 : i32 to vector<1x256xi32>
    %263 = arith.cmpi sge, %1, %262 : vector<1x256xi32>
    %c0_i32_89 = arith.constant 0 : i32
    %264 = arith.sitofp %c0_i32_89 : i32 to bf16
    %265 = vector.shape_cast %263 : vector<1x256xi1> to vector<1x256xi1>
    %266 = vector.broadcast %265 : vector<1x256xi1> to vector<32x256xi1>
    %267 = vector.broadcast %264 : bf16 to vector<32x256xbf16>
    %268 = arith.select %266, %261, %267 : vector<32x256xi1>, vector<32x256xbf16>
    %cst_90 = arith.constant 0.000000e+00 : bf16
    %269 = vector.broadcast %cst_90 : bf16 to vector<32x4xbf16>
    %270 = vector.extract_strided_slice %258 {offsets = [0, 4], sizes = [32, 252], strides = [1, 1]} : vector<32x256xbf16> to vector<32x252xbf16>
    %271 = tpu.concatenate %270, %269 in 1 : vector<32x252xbf16>, vector<32x4xbf16> -> vector<32x256xbf16>
    %c12_i32 = arith.constant 12 : i32
    %272 = vector.broadcast %c12_i32 : i32 to vector<1x256xi32>
    %273 = arith.cmpi slt, %1, %272 : vector<1x256xi32>
    %c0_i32_91 = arith.constant 0 : i32
    %274 = arith.sitofp %c0_i32_91 : i32 to bf16
    %275 = vector.shape_cast %273 : vector<1x256xi1> to vector<1x256xi1>
    %276 = vector.broadcast %275 : vector<1x256xi1> to vector<32x256xi1>
    %277 = vector.broadcast %274 : bf16 to vector<32x256xbf16>
    %278 = arith.select %276, %271, %277 : vector<32x256xi1>, vector<32x256xbf16>
    %cst_92 = arith.constant 0.000000e+00 : bf16
    %279 = vector.broadcast %cst_92 : bf16 to vector<32x4xbf16>
    %280 = vector.extract_strided_slice %255 {offsets = [0, 0], sizes = [32, 252], strides = [1, 1]} : vector<32x256xbf16> to vector<32x252xbf16>
    %281 = tpu.concatenate %279, %280 in 1 : vector<32x4xbf16>, vector<32x252xbf16> -> vector<32x256xbf16>
    %c4_i32_93 = arith.constant 4 : i32
    %282 = vector.broadcast %c4_i32_93 : i32 to vector<1x256xi32>
    %283 = arith.cmpi sge, %1, %282 : vector<1x256xi32>
    %c0_i32_94 = arith.constant 0 : i32
    %284 = arith.sitofp %c0_i32_94 : i32 to bf16
    %285 = vector.shape_cast %283 : vector<1x256xi1> to vector<1x256xi1>
    %286 = vector.broadcast %285 : vector<1x256xi1> to vector<32x256xi1>
    %287 = vector.broadcast %284 : bf16 to vector<32x256xbf16>
    %288 = arith.select %286, %281, %287 : vector<32x256xi1>, vector<32x256xbf16>
    %cst_95 = arith.constant 0.000000e+00 : bf16
    %289 = vector.broadcast %cst_95 : bf16 to vector<32x4xbf16>
    %290 = vector.extract_strided_slice %255 {offsets = [0, 4], sizes = [32, 252], strides = [1, 1]} : vector<32x256xbf16> to vector<32x252xbf16>
    %291 = tpu.concatenate %290, %289 in 1 : vector<32x252xbf16>, vector<32x4xbf16> -> vector<32x256xbf16>
    %c12_i32_96 = arith.constant 12 : i32
    %292 = vector.broadcast %c12_i32_96 : i32 to vector<1x256xi32>
    %293 = arith.cmpi slt, %1, %292 : vector<1x256xi32>
    %c0_i32_97 = arith.constant 0 : i32
    %294 = arith.sitofp %c0_i32_97 : i32 to bf16
    %295 = vector.shape_cast %293 : vector<1x256xi1> to vector<1x256xi1>
    %296 = vector.broadcast %295 : vector<1x256xi1> to vector<32x256xi1>
    %297 = vector.broadcast %294 : bf16 to vector<32x256xbf16>
    %298 = arith.select %296, %291, %297 : vector<32x256xi1>, vector<32x256xbf16>
    %cst_98 = arith.constant 0.000000e+00 : bf16
    %299 = vector.broadcast %cst_98 : bf16 to vector<32x64xbf16>
    %300 = vector.extract_strided_slice %255 {offsets = [0, 64], sizes = [32, 192], strides = [1, 1]} : vector<32x256xbf16> to vector<32x192xbf16>
    %301 = tpu.concatenate %300, %299 in 1 : vector<32x192xbf16>, vector<32x64xbf16> -> vector<32x256xbf16>
    %cst_99 = arith.constant 0.000000e+00 : bf16
    %302 = vector.broadcast %cst_99 : bf16 to vector<32x4xbf16>
    %303 = vector.extract_strided_slice %301 {offsets = [0, 0], sizes = [32, 252], strides = [1, 1]} : vector<32x256xbf16> to vector<32x252xbf16>
    %304 = tpu.concatenate %302, %303 in 1 : vector<32x4xbf16>, vector<32x252xbf16> -> vector<32x256xbf16>
    %c4_i32_100 = arith.constant 4 : i32
    %305 = vector.broadcast %c4_i32_100 : i32 to vector<1x256xi32>
    %306 = arith.cmpi sge, %1, %305 : vector<1x256xi32>
    %c0_i32_101 = arith.constant 0 : i32
    %307 = arith.sitofp %c0_i32_101 : i32 to bf16
    %308 = vector.shape_cast %306 : vector<1x256xi1> to vector<1x256xi1>
    %309 = vector.broadcast %308 : vector<1x256xi1> to vector<32x256xi1>
    %310 = vector.broadcast %307 : bf16 to vector<32x256xbf16>
    %311 = arith.select %309, %304, %310 : vector<32x256xi1>, vector<32x256xbf16>
    %cst_102 = arith.constant 0.000000e+00 : bf16
    %312 = vector.broadcast %cst_102 : bf16 to vector<32x4xbf16>
    %313 = vector.extract_strided_slice %301 {offsets = [0, 4], sizes = [32, 252], strides = [1, 1]} : vector<32x256xbf16> to vector<32x252xbf16>
    %314 = tpu.concatenate %313, %312 in 1 : vector<32x252xbf16>, vector<32x4xbf16> -> vector<32x256xbf16>
    %c12_i32_103 = arith.constant 12 : i32
    %315 = vector.broadcast %c12_i32_103 : i32 to vector<1x256xi32>
    %316 = arith.cmpi slt, %1, %315 : vector<1x256xi32>
    %c0_i32_104 = arith.constant 0 : i32
    %317 = arith.sitofp %c0_i32_104 : i32 to bf16
    %318 = vector.shape_cast %316 : vector<1x256xi1> to vector<1x256xi1>
    %319 = vector.broadcast %318 : vector<1x256xi1> to vector<32x256xi1>
    %320 = vector.broadcast %317 : bf16 to vector<32x256xbf16>
    %321 = arith.select %319, %314, %320 : vector<32x256xi1>, vector<32x256xbf16>
    %322 = tpu.concatenate %268, %258, %278, %288, %255, %298, %311, %301, %321 in 0 : vector<32x256xbf16>, vector<32x256xbf16>, vector<32x256xbf16>, vector<32x256xbf16>, vector<32x256xbf16>, vector<32x256xbf16>, vector<32x256xbf16>, vector<32x256xbf16>, vector<32x256xbf16> -> vector<288x256xbf16>
    %c2 = arith.constant 2 : index
    %c0_105 = arith.constant 0 : index
    %c0_106 = arith.constant 0 : index
    %323 = vector.load %arg3[%c2, %c0_105, %c0_106] : memref<6x32x288xbf16, #tpu.memory_space<vmem>>, vector<1x32x288xbf16>
    %324 = vector.shape_cast %323 : vector<1x32x288xbf16> to vector<32x288xbf16>
    %cst_107 = arith.constant dense<0.000000e+00> : vector<32x256xf32>
    %325 = tpu.matmul %324, %322, %cst_107 {dimension_numbers = #tpu.dot_dimension_numbers<[1], [0], [0], [1], [0, 0, 1, 1], [], []>} : vector<32x288xbf16>, vector<288x256xbf16>, vector<32x256xf32> -> vector<32x256xf32>
    %326 = vector.extract_strided_slice %0 {offsets = [3, 0, 0], sizes = [1, 32, 1], strides = [1, 1, 1]} : vector<8x32x2xf32> to vector<1x32x1xf32>
    %327 = vector.shape_cast %326 : vector<1x32x1xf32> to vector<32x1xf32>
    %328 = vector.broadcast %327 : vector<32x1xf32> to vector<32x256xf32>
    %329 = arith.mulf %325, %328 : vector<32x256xf32>
    %330 = vector.extract_strided_slice %0 {offsets = [3, 0, 1], sizes = [1, 32, 1], strides = [1, 1, 1]} : vector<8x32x2xf32> to vector<1x32x1xf32>
    %331 = vector.shape_cast %330 : vector<1x32x1xf32> to vector<32x1xf32>
    %332 = vector.broadcast %331 : vector<32x1xf32> to vector<32x256xf32>
    %333 = arith.addf %329, %332 : vector<32x256xf32>
    %cst_108 = arith.constant 0.000000e+00 : f32
    %334 = vector.broadcast %cst_108 : f32 to vector<32x256xf32>
    %335 = arith.cmpf oge, %333, %334 : vector<32x256xf32>
    %cst_109 = arith.constant 2.000000e-01 : f32
    %336 = vector.broadcast %cst_109 : f32 to vector<32x256xf32>
    %337 = arith.mulf %336, %333 : vector<32x256xf32>
    %338 = arith.select %335, %333, %337 : vector<32x256xi1>, vector<32x256xf32>
    %339 = arith.truncf %338 : vector<32x256xf32> to vector<32x256xbf16>
    %c0_110 = arith.constant 0 : index
    %c0_111 = arith.constant 0 : index
    %340 = vector.load %arg9[%c0_110, %c0_111] : memref<32x256xbf16, #tpu.memory_space<vmem>>, vector<32x256xbf16>
    tpu.vector_store %arg9[%c0_110, %c0_111], %339 {strides = array<i32>} : memref<32x256xbf16, #tpu.memory_space<vmem>>, vector<32x256xbf16>,
    %c0_112 = arith.constant 0 : index
    %c0_113 = arith.constant 0 : index
    %341 = vector.load %arg9[%c0_112, %c0_113] : memref<32x256xbf16, #tpu.memory_space<vmem>>, vector<32x256xbf16>
    %cst_114 = arith.constant 0.000000e+00 : bf16
    %342 = vector.broadcast %cst_114 : bf16 to vector<32x128xbf16>
    %343 = vector.extract_strided_slice %341 {offsets = [0, 0], sizes = [32, 128], strides = [1, 1]} : vector<32x256xbf16> to vector<32x128xbf16>
    %344 = tpu.concatenate %342, %343 in 1 : vector<32x128xbf16>, vector<32x128xbf16> -> vector<32x256xbf16>
    %cst_115 = arith.constant 0.000000e+00 : bf16
    %345 = vector.broadcast %cst_115 : bf16 to vector<32x8xbf16>
    %346 = vector.extract_strided_slice %344 {offsets = [0, 0], sizes = [32, 248], strides = [1, 1]} : vector<32x256xbf16> to vector<32x248xbf16>
    %347 = tpu.concatenate %345, %346 in 1 : vector<32x8xbf16>, vector<32x248xbf16> -> vector<32x256xbf16>
    %c8_i32 = arith.constant 8 : i32
    %348 = vector.broadcast %c8_i32 : i32 to vector<1x256xi32>
    %349 = arith.cmpi sge, %1, %348 : vector<1x256xi32>
    %c0_i32_116 = arith.constant 0 : i32
    %350 = arith.sitofp %c0_i32_116 : i32 to bf16
    %351 = vector.shape_cast %349 : vector<1x256xi1> to vector<1x256xi1>
    %352 = vector.broadcast %351 : vector<1x256xi1> to vector<32x256xi1>
    %353 = vector.broadcast %350 : bf16 to vector<32x256xbf16>
    %354 = arith.select %352, %347, %353 : vector<32x256xi1>, vector<32x256xbf16>
    %cst_117 = arith.constant 0.000000e+00 : bf16
    %355 = vector.broadcast %cst_117 : bf16 to vector<32x8xbf16>
    %356 = vector.extract_strided_slice %344 {offsets = [0, 8], sizes = [32, 248], strides = [1, 1]} : vector<32x256xbf16> to vector<32x248xbf16>
    %357 = tpu.concatenate %356, %355 in 1 : vector<32x248xbf16>, vector<32x8xbf16> -> vector<32x256xbf16>
    %c8_i32_118 = arith.constant 8 : i32
    %358 = vector.broadcast %c8_i32_118 : i32 to vector<1x256xi32>
    %359 = arith.cmpi slt, %1, %358 : vector<1x256xi32>
    %c0_i32_119 = arith.constant 0 : i32
    %360 = arith.sitofp %c0_i32_119 : i32 to bf16
    %361 = vector.shape_cast %359 : vector<1x256xi1> to vector<1x256xi1>
    %362 = vector.broadcast %361 : vector<1x256xi1> to vector<32x256xi1>
    %363 = vector.broadcast %360 : bf16 to vector<32x256xbf16>
    %364 = arith.select %362, %357, %363 : vector<32x256xi1>, vector<32x256xbf16>
    %cst_120 = arith.constant 0.000000e+00 : bf16
    %365 = vector.broadcast %cst_120 : bf16 to vector<32x8xbf16>
    %366 = vector.extract_strided_slice %341 {offsets = [0, 0], sizes = [32, 248], strides = [1, 1]} : vector<32x256xbf16> to vector<32x248xbf16>
    %367 = tpu.concatenate %365, %366 in 1 : vector<32x8xbf16>, vector<32x248xbf16> -> vector<32x256xbf16>
    %c8_i32_121 = arith.constant 8 : i32
    %368 = vector.broadcast %c8_i32_121 : i32 to vector<1x256xi32>
    %369 = arith.cmpi sge, %1, %368 : vector<1x256xi32>
    %c0_i32_122 = arith.constant 0 : i32
    %370 = arith.sitofp %c0_i32_122 : i32 to bf16
    %371 = vector.shape_cast %369 : vector<1x256xi1> to vector<1x256xi1>
    %372 = vector.broadcast %371 : vector<1x256xi1> to vector<32x256xi1>
    %373 = vector.broadcast %370 : bf16 to vector<32x256xbf16>
    %374 = arith.select %372, %367, %373 : vector<32x256xi1>, vector<32x256xbf16>
    %cst_123 = arith.constant 0.000000e+00 : bf16
    %375 = vector.broadcast %cst_123 : bf16 to vector<32x8xbf16>
    %376 = vector.extract_strided_slice %341 {offsets = [0, 8], sizes = [32, 248], strides = [1, 1]} : vector<32x256xbf16> to vector<32x248xbf16>
    %377 = tpu.concatenate %376, %375 in 1 : vector<32x248xbf16>, vector<32x8xbf16> -> vector<32x256xbf16>
    %c8_i32_124 = arith.constant 8 : i32
    %378 = vector.broadcast %c8_i32_124 : i32 to vector<1x256xi32>
    %379 = arith.cmpi slt, %1, %378 : vector<1x256xi32>
    %c0_i32_125 = arith.constant 0 : i32
    %380 = arith.sitofp %c0_i32_125 : i32 to bf16
    %381 = vector.shape_cast %379 : vector<1x256xi1> to vector<1x256xi1>
    %382 = vector.broadcast %381 : vector<1x256xi1> to vector<32x256xi1>
    %383 = vector.broadcast %380 : bf16 to vector<32x256xbf16>
    %384 = arith.select %382, %377, %383 : vector<32x256xi1>, vector<32x256xbf16>
    %cst_126 = arith.constant 0.000000e+00 : bf16
    %385 = vector.broadcast %cst_126 : bf16 to vector<32x128xbf16>
    %386 = vector.extract_strided_slice %341 {offsets = [0, 128], sizes = [32, 128], strides = [1, 1]} : vector<32x256xbf16> to vector<32x128xbf16>
    %387 = tpu.concatenate %386, %385 in 1 : vector<32x128xbf16>, vector<32x128xbf16> -> vector<32x256xbf16>
    %cst_127 = arith.constant 0.000000e+00 : bf16
    %388 = vector.broadcast %cst_127 : bf16 to vector<32x8xbf16>
    %389 = vector.extract_strided_slice %387 {offsets = [0, 0], sizes = [32, 248], strides = [1, 1]} : vector<32x256xbf16> to vector<32x248xbf16>
    %390 = tpu.concatenate %388, %389 in 1 : vector<32x8xbf16>, vector<32x248xbf16> -> vector<32x256xbf16>
    %c8_i32_128 = arith.constant 8 : i32
    %391 = vector.broadcast %c8_i32_128 : i32 to vector<1x256xi32>
    %392 = arith.cmpi sge, %1, %391 : vector<1x256xi32>
    %c0_i32_129 = arith.constant 0 : i32
    %393 = arith.sitofp %c0_i32_129 : i32 to bf16
    %394 = vector.shape_cast %392 : vector<1x256xi1> to vector<1x256xi1>
    %395 = vector.broadcast %394 : vector<1x256xi1> to vector<32x256xi1>
    %396 = vector.broadcast %393 : bf16 to vector<32x256xbf16>
    %397 = arith.select %395, %390, %396 : vector<32x256xi1>, vector<32x256xbf16>
    %cst_130 = arith.constant 0.000000e+00 : bf16
    %398 = vector.broadcast %cst_130 : bf16 to vector<32x8xbf16>
    %399 = vector.extract_strided_slice %387 {offsets = [0, 8], sizes = [32, 248], strides = [1, 1]} : vector<32x256xbf16> to vector<32x248xbf16>
    %400 = tpu.concatenate %399, %398 in 1 : vector<32x248xbf16>, vector<32x8xbf16> -> vector<32x256xbf16>
    %c8_i32_131 = arith.constant 8 : i32
    %401 = vector.broadcast %c8_i32_131 : i32 to vector<1x256xi32>
    %402 = arith.cmpi slt, %1, %401 : vector<1x256xi32>
    %c0_i32_132 = arith.constant 0 : i32
    %403 = arith.sitofp %c0_i32_132 : i32 to bf16
    %404 = vector.shape_cast %402 : vector<1x256xi1> to vector<1x256xi1>
    %405 = vector.broadcast %404 : vector<1x256xi1> to vector<32x256xi1>
    %406 = vector.broadcast %403 : bf16 to vector<32x256xbf16>
    %407 = arith.select %405, %400, %406 : vector<32x256xi1>, vector<32x256xbf16>
    %408 = tpu.concatenate %354, %344, %364, %374, %341, %384, %397, %387, %407 in 0 : vector<32x256xbf16>, vector<32x256xbf16>, vector<32x256xbf16>, vector<32x256xbf16>, vector<32x256xbf16>, vector<32x256xbf16>, vector<32x256xbf16>, vector<32x256xbf16>, vector<32x256xbf16> -> vector<288x256xbf16>
    %c3 = arith.constant 3 : index
    %c0_133 = arith.constant 0 : index
    %c0_134 = arith.constant 0 : index
    %409 = vector.load %arg3[%c3, %c0_133, %c0_134] : memref<6x32x288xbf16, #tpu.memory_space<vmem>>, vector<1x32x288xbf16>
    %410 = vector.shape_cast %409 : vector<1x32x288xbf16> to vector<32x288xbf16>
    %cst_135 = arith.constant dense<0.000000e+00> : vector<32x256xf32>
    %411 = tpu.matmul %410, %408, %cst_135 {dimension_numbers = #tpu.dot_dimension_numbers<[1], [0], [0], [1], [0, 0, 1, 1], [], []>} : vector<32x288xbf16>, vector<288x256xbf16>, vector<32x256xf32> -> vector<32x256xf32>
    %412 = vector.extract_strided_slice %0 {offsets = [4, 0, 0], sizes = [1, 32, 1], strides = [1, 1, 1]} : vector<8x32x2xf32> to vector<1x32x1xf32>
    %413 = vector.shape_cast %412 : vector<1x32x1xf32> to vector<32x1xf32>
    %414 = vector.broadcast %413 : vector<32x1xf32> to vector<32x256xf32>
    %415 = arith.mulf %411, %414 : vector<32x256xf32>
    %416 = vector.extract_strided_slice %0 {offsets = [4, 0, 1], sizes = [1, 32, 1], strides = [1, 1, 1]} : vector<8x32x2xf32> to vector<1x32x1xf32>
    %417 = vector.shape_cast %416 : vector<1x32x1xf32> to vector<32x1xf32>
    %418 = vector.broadcast %417 : vector<32x1xf32> to vector<32x256xf32>
    %419 = arith.addf %415, %418 : vector<32x256xf32>
    %cst_136 = arith.constant 0.000000e+00 : f32
    %420 = vector.broadcast %cst_136 : f32 to vector<32x256xf32>
    %421 = arith.cmpf oge, %419, %420 : vector<32x256xf32>
    %cst_137 = arith.constant 2.000000e-01 : f32
    %422 = vector.broadcast %cst_137 : f32 to vector<32x256xf32>
    %423 = arith.mulf %422, %419 : vector<32x256xf32>
    %424 = arith.select %421, %419, %423 : vector<32x256xi1>, vector<32x256xf32>
    %425 = arith.truncf %424 : vector<32x256xf32> to vector<32x256xbf16>
    %c0_138 = arith.constant 0 : index
    %c0_139 = arith.constant 0 : index
    %426 = vector.load %arg9[%c0_138, %c0_139] : memref<32x256xbf16, #tpu.memory_space<vmem>>, vector<32x256xbf16>
    tpu.vector_store %arg9[%c0_138, %c0_139], %425 {strides = array<i32>} : memref<32x256xbf16, #tpu.memory_space<vmem>>, vector<32x256xbf16>,
    %c0_140 = arith.constant 0 : index
    %c0_141 = arith.constant 0 : index
    %427 = vector.load %arg9[%c0_140, %c0_141] : memref<32x256xbf16, #tpu.memory_space<vmem>>, vector<32x256xbf16>
    %cst_142 = arith.constant 0.000000e+00 : bf16
    %428 = vector.broadcast %cst_142 : bf16 to vector<32x16xbf16>
    %429 = vector.extract_strided_slice %427 {offsets = [0, 0], sizes = [32, 240], strides = [1, 1]} : vector<32x256xbf16> to vector<32x240xbf16>
    %430 = tpu.concatenate %428, %429 in 1 : vector<32x16xbf16>, vector<32x240xbf16> -> vector<32x256xbf16>
    %cst_143 = arith.constant 0.000000e+00 : bf16
    %431 = vector.broadcast %cst_143 : bf16 to vector<32x1xbf16>
    %432 = vector.extract_strided_slice %430 {offsets = [0, 0], sizes = [32, 255], strides = [1, 1]} : vector<32x256xbf16> to vector<32x255xbf16>
    %433 = tpu.concatenate %431, %432 in 1 : vector<32x1xbf16>, vector<32x255xbf16> -> vector<32x256xbf16>
    %c1_i32_144 = arith.constant 1 : i32
    %434 = vector.broadcast %c1_i32_144 : i32 to vector<1x256xi32>
    %435 = arith.cmpi sge, %1, %434 : vector<1x256xi32>
    %c0_i32_145 = arith.constant 0 : i32
    %436 = arith.sitofp %c0_i32_145 : i32 to bf16
    %437 = vector.shape_cast %435 : vector<1x256xi1> to vector<1x256xi1>
    %438 = vector.broadcast %437 : vector<1x256xi1> to vector<32x256xi1>
    %439 = vector.broadcast %436 : bf16 to vector<32x256xbf16>
    %440 = arith.select %438, %433, %439 : vector<32x256xi1>, vector<32x256xbf16>
    %cst_146 = arith.constant 0.000000e+00 : bf16
    %441 = vector.broadcast %cst_146 : bf16 to vector<32x1xbf16>
    %442 = vector.extract_strided_slice %430 {offsets = [0, 1], sizes = [32, 255], strides = [1, 1]} : vector<32x256xbf16> to vector<32x255xbf16>
    %443 = tpu.concatenate %442, %441 in 1 : vector<32x255xbf16>, vector<32x1xbf16> -> vector<32x256xbf16>
    %c15_i32_147 = arith.constant 15 : i32
    %444 = vector.broadcast %c15_i32_147 : i32 to vector<1x256xi32>
    %445 = arith.cmpi slt, %1, %444 : vector<1x256xi32>
    %c0_i32_148 = arith.constant 0 : i32
    %446 = arith.sitofp %c0_i32_148 : i32 to bf16
    %447 = vector.shape_cast %445 : vector<1x256xi1> to vector<1x256xi1>
    %448 = vector.broadcast %447 : vector<1x256xi1> to vector<32x256xi1>
    %449 = vector.broadcast %446 : bf16 to vector<32x256xbf16>
    %450 = arith.select %448, %443, %449 : vector<32x256xi1>, vector<32x256xbf16>
    %cst_149 = arith.constant 0.000000e+00 : bf16
    %451 = vector.broadcast %cst_149 : bf16 to vector<32x1xbf16>
    %452 = vector.extract_strided_slice %427 {offsets = [0, 0], sizes = [32, 255], strides = [1, 1]} : vector<32x256xbf16> to vector<32x255xbf16>
    %453 = tpu.concatenate %451, %452 in 1 : vector<32x1xbf16>, vector<32x255xbf16> -> vector<32x256xbf16>
    %c1_i32_150 = arith.constant 1 : i32
    %454 = vector.broadcast %c1_i32_150 : i32 to vector<1x256xi32>
    %455 = arith.cmpi sge, %1, %454 : vector<1x256xi32>
    %c0_i32_151 = arith.constant 0 : i32
    %456 = arith.sitofp %c0_i32_151 : i32 to bf16
    %457 = vector.shape_cast %455 : vector<1x256xi1> to vector<1x256xi1>
    %458 = vector.broadcast %457 : vector<1x256xi1> to vector<32x256xi1>
    %459 = vector.broadcast %456 : bf16 to vector<32x256xbf16>
    %460 = arith.select %458, %453, %459 : vector<32x256xi1>, vector<32x256xbf16>
    %cst_152 = arith.constant 0.000000e+00 : bf16
    %461 = vector.broadcast %cst_152 : bf16 to vector<32x1xbf16>
    %462 = vector.extract_strided_slice %427 {offsets = [0, 1], sizes = [32, 255], strides = [1, 1]} : vector<32x256xbf16> to vector<32x255xbf16>
    %463 = tpu.concatenate %462, %461 in 1 : vector<32x255xbf16>, vector<32x1xbf16> -> vector<32x256xbf16>
    %c15_i32_153 = arith.constant 15 : i32
    %464 = vector.broadcast %c15_i32_153 : i32 to vector<1x256xi32>
    %465 = arith.cmpi slt, %1, %464 : vector<1x256xi32>
    %c0_i32_154 = arith.constant 0 : i32
    %466 = arith.sitofp %c0_i32_154 : i32 to bf16
    %467 = vector.shape_cast %465 : vector<1x256xi1> to vector<1x256xi1>
    %468 = vector.broadcast %467 : vector<1x256xi1> to vector<32x256xi1>
    %469 = vector.broadcast %466 : bf16 to vector<32x256xbf16>
    %470 = arith.select %468, %463, %469 : vector<32x256xi1>, vector<32x256xbf16>
    %cst_155 = arith.constant 0.000000e+00 : bf16
    %471 = vector.broadcast %cst_155 : bf16 to vector<32x16xbf16>
    %472 = vector.extract_strided_slice %427 {offsets = [0, 16], sizes = [32, 240], strides = [1, 1]} : vector<32x256xbf16> to vector<32x240xbf16>
    %473 = tpu.concatenate %472, %471 in 1 : vector<32x240xbf16>, vector<32x16xbf16> -> vector<32x256xbf16>
    %cst_156 = arith.constant 0.000000e+00 : bf16
    %474 = vector.broadcast %cst_156 : bf16 to vector<32x1xbf16>
    %475 = vector.extract_strided_slice %473 {offsets = [0, 0], sizes = [32, 255], strides = [1, 1]} : vector<32x256xbf16> to vector<32x255xbf16>
    %476 = tpu.concatenate %474, %475 in 1 : vector<32x1xbf16>, vector<32x255xbf16> -> vector<32x256xbf16>
    %c1_i32_157 = arith.constant 1 : i32
    %477 = vector.broadcast %c1_i32_157 : i32 to vector<1x256xi32>
    %478 = arith.cmpi sge, %1, %477 : vector<1x256xi32>
    %c0_i32_158 = arith.constant 0 : i32
    %479 = arith.sitofp %c0_i32_158 : i32 to bf16
    %480 = vector.shape_cast %478 : vector<1x256xi1> to vector<1x256xi1>
    %481 = vector.broadcast %480 : vector<1x256xi1> to vector<32x256xi1>
    %482 = vector.broadcast %479 : bf16 to vector<32x256xbf16>
    %483 = arith.select %481, %476, %482 : vector<32x256xi1>, vector<32x256xbf16>
    %cst_159 = arith.constant 0.000000e+00 : bf16
    %484 = vector.broadcast %cst_159 : bf16 to vector<32x1xbf16>
    %485 = vector.extract_strided_slice %473 {offsets = [0, 1], sizes = [32, 255], strides = [1, 1]} : vector<32x256xbf16> to vector<32x255xbf16>
    %486 = tpu.concatenate %485, %484 in 1 : vector<32x255xbf16>, vector<32x1xbf16> -> vector<32x256xbf16>
    %c15_i32_160 = arith.constant 15 : i32
    %487 = vector.broadcast %c15_i32_160 : i32 to vector<1x256xi32>
    %488 = arith.cmpi slt, %1, %487 : vector<1x256xi32>
    %c0_i32_161 = arith.constant 0 : i32
    %489 = arith.sitofp %c0_i32_161 : i32 to bf16
    %490 = vector.shape_cast %488 : vector<1x256xi1> to vector<1x256xi1>
    %491 = vector.broadcast %490 : vector<1x256xi1> to vector<32x256xi1>
    %492 = vector.broadcast %489 : bf16 to vector<32x256xbf16>
    %493 = arith.select %491, %486, %492 : vector<32x256xi1>, vector<32x256xbf16>
    %494 = tpu.concatenate %440, %430, %450, %460, %427, %470, %483, %473, %493 in 0 : vector<32x256xbf16>, vector<32x256xbf16>, vector<32x256xbf16>, vector<32x256xbf16>, vector<32x256xbf16>, vector<32x256xbf16>, vector<32x256xbf16>, vector<32x256xbf16>, vector<32x256xbf16> -> vector<288x256xbf16>
    %c4 = arith.constant 4 : index
    %c0_162 = arith.constant 0 : index
    %c0_163 = arith.constant 0 : index
    %495 = vector.load %arg3[%c4, %c0_162, %c0_163] : memref<6x32x288xbf16, #tpu.memory_space<vmem>>, vector<1x32x288xbf16>
    %496 = vector.shape_cast %495 : vector<1x32x288xbf16> to vector<32x288xbf16>
    %cst_164 = arith.constant dense<0.000000e+00> : vector<32x256xf32>
    %497 = tpu.matmul %496, %494, %cst_164 {dimension_numbers = #tpu.dot_dimension_numbers<[1], [0], [0], [1], [0, 0, 1, 1], [], []>} : vector<32x288xbf16>, vector<288x256xbf16>, vector<32x256xf32> -> vector<32x256xf32>
    %498 = vector.extract_strided_slice %0 {offsets = [5, 0, 0], sizes = [1, 32, 1], strides = [1, 1, 1]} : vector<8x32x2xf32> to vector<1x32x1xf32>
    %499 = vector.shape_cast %498 : vector<1x32x1xf32> to vector<32x1xf32>
    %500 = vector.broadcast %499 : vector<32x1xf32> to vector<32x256xf32>
    %501 = arith.mulf %497, %500 : vector<32x256xf32>
    %502 = vector.extract_strided_slice %0 {offsets = [5, 0, 1], sizes = [1, 32, 1], strides = [1, 1, 1]} : vector<8x32x2xf32> to vector<1x32x1xf32>
    %503 = vector.shape_cast %502 : vector<1x32x1xf32> to vector<32x1xf32>
    %504 = vector.broadcast %503 : vector<32x1xf32> to vector<32x256xf32>
    %505 = arith.addf %501, %504 : vector<32x256xf32>
    %cst_165 = arith.constant 0.000000e+00 : f32
    %506 = vector.broadcast %cst_165 : f32 to vector<32x256xf32>
    %507 = arith.cmpf oge, %505, %506 : vector<32x256xf32>
    %cst_166 = arith.constant 2.000000e-01 : f32
    %508 = vector.broadcast %cst_166 : f32 to vector<32x256xf32>
    %509 = arith.mulf %508, %505 : vector<32x256xf32>
    %510 = arith.select %507, %505, %509 : vector<32x256xi1>, vector<32x256xf32>
    %511 = arith.truncf %510 : vector<32x256xf32> to vector<32x256xbf16>
    %c0_167 = arith.constant 0 : index
    %c0_168 = arith.constant 0 : index
    %512 = vector.load %arg9[%c0_167, %c0_168] : memref<32x256xbf16, #tpu.memory_space<vmem>>, vector<32x256xbf16>
    tpu.vector_store %arg9[%c0_167, %c0_168], %511 {strides = array<i32>} : memref<32x256xbf16, #tpu.memory_space<vmem>>, vector<32x256xbf16>,
    %c0_169 = arith.constant 0 : index
    %c0_170 = arith.constant 0 : index
    %513 = vector.load %arg9[%c0_169, %c0_170] : memref<32x256xbf16, #tpu.memory_space<vmem>>, vector<32x256xbf16>
    %cst_171 = arith.constant 0.000000e+00 : bf16
    %514 = vector.broadcast %cst_171 : bf16 to vector<32x16xbf16>
    %515 = vector.extract_strided_slice %513 {offsets = [0, 0], sizes = [32, 240], strides = [1, 1]} : vector<32x256xbf16> to vector<32x240xbf16>
    %516 = tpu.concatenate %514, %515 in 1 : vector<32x16xbf16>, vector<32x240xbf16> -> vector<32x256xbf16>
    %cst_172 = arith.constant 0.000000e+00 : bf16
    %517 = vector.broadcast %cst_172 : bf16 to vector<32x1xbf16>
    %518 = vector.extract_strided_slice %516 {offsets = [0, 0], sizes = [32, 255], strides = [1, 1]} : vector<32x256xbf16> to vector<32x255xbf16>
    %519 = tpu.concatenate %517, %518 in 1 : vector<32x1xbf16>, vector<32x255xbf16> -> vector<32x256xbf16>
    %c1_i32_173 = arith.constant 1 : i32
    %520 = vector.broadcast %c1_i32_173 : i32 to vector<1x256xi32>
    %521 = arith.cmpi sge, %1, %520 : vector<1x256xi32>
    %c0_i32_174 = arith.constant 0 : i32
    %522 = arith.sitofp %c0_i32_174 : i32 to bf16
    %523 = vector.shape_cast %521 : vector<1x256xi1> to vector<1x256xi1>
    %524 = vector.broadcast %523 : vector<1x256xi1> to vector<32x256xi1>
    %525 = vector.broadcast %522 : bf16 to vector<32x256xbf16>
    %526 = arith.select %524, %519, %525 : vector<32x256xi1>, vector<32x256xbf16>
    %cst_175 = arith.constant 0.000000e+00 : bf16
    %527 = vector.broadcast %cst_175 : bf16 to vector<32x1xbf16>
    %528 = vector.extract_strided_slice %516 {offsets = [0, 1], sizes = [32, 255], strides = [1, 1]} : vector<32x256xbf16> to vector<32x255xbf16>
    %529 = tpu.concatenate %528, %527 in 1 : vector<32x255xbf16>, vector<32x1xbf16> -> vector<32x256xbf16>
    %c15_i32_176 = arith.constant 15 : i32
    %530 = vector.broadcast %c15_i32_176 : i32 to vector<1x256xi32>
    %531 = arith.cmpi slt, %1, %530 : vector<1x256xi32>
    %c0_i32_177 = arith.constant 0 : i32
    %532 = arith.sitofp %c0_i32_177 : i32 to bf16
    %533 = vector.shape_cast %531 : vector<1x256xi1> to vector<1x256xi1>
    %534 = vector.broadcast %533 : vector<1x256xi1> to vector<32x256xi1>
    %535 = vector.broadcast %532 : bf16 to vector<32x256xbf16>
    %536 = arith.select %534, %529, %535 : vector<32x256xi1>, vector<32x256xbf16>
    %cst_178 = arith.constant 0.000000e+00 : bf16
    %537 = vector.broadcast %cst_178 : bf16 to vector<32x1xbf16>
    %538 = vector.extract_strided_slice %513 {offsets = [0, 0], sizes = [32, 255], strides = [1, 1]} : vector<32x256xbf16> to vector<32x255xbf16>
    %539 = tpu.concatenate %537, %538 in 1 : vector<32x1xbf16>, vector<32x255xbf16> -> vector<32x256xbf16>
    %c1_i32_179 = arith.constant 1 : i32
    %540 = vector.broadcast %c1_i32_179 : i32 to vector<1x256xi32>
    %541 = arith.cmpi sge, %1, %540 : vector<1x256xi32>
    %c0_i32_180 = arith.constant 0 : i32
    %542 = arith.sitofp %c0_i32_180 : i32 to bf16
    %543 = vector.shape_cast %541 : vector<1x256xi1> to vector<1x256xi1>
    %544 = vector.broadcast %543 : vector<1x256xi1> to vector<32x256xi1>
    %545 = vector.broadcast %542 : bf16 to vector<32x256xbf16>
    %546 = arith.select %544, %539, %545 : vector<32x256xi1>, vector<32x256xbf16>
    %cst_181 = arith.constant 0.000000e+00 : bf16
    %547 = vector.broadcast %cst_181 : bf16 to vector<32x1xbf16>
    %548 = vector.extract_strided_slice %513 {offsets = [0, 1], sizes = [32, 255], strides = [1, 1]} : vector<32x256xbf16> to vector<32x255xbf16>
    %549 = tpu.concatenate %548, %547 in 1 : vector<32x255xbf16>, vector<32x1xbf16> -> vector<32x256xbf16>
    %c15_i32_182 = arith.constant 15 : i32
    %550 = vector.broadcast %c15_i32_182 : i32 to vector<1x256xi32>
    %551 = arith.cmpi slt, %1, %550 : vector<1x256xi32>
    %c0_i32_183 = arith.constant 0 : i32
    %552 = arith.sitofp %c0_i32_183 : i32 to bf16
    %553 = vector.shape_cast %551 : vector<1x256xi1> to vector<1x256xi1>
    %554 = vector.broadcast %553 : vector<1x256xi1> to vector<32x256xi1>
    %555 = vector.broadcast %552 : bf16 to vector<32x256xbf16>
    %556 = arith.select %554, %549, %555 : vector<32x256xi1>, vector<32x256xbf16>
    %cst_184 = arith.constant 0.000000e+00 : bf16
    %557 = vector.broadcast %cst_184 : bf16 to vector<32x16xbf16>
    %558 = vector.extract_strided_slice %513 {offsets = [0, 16], sizes = [32, 240], strides = [1, 1]} : vector<32x256xbf16> to vector<32x240xbf16>
    %559 = tpu.concatenate %558, %557 in 1 : vector<32x240xbf16>, vector<32x16xbf16> -> vector<32x256xbf16>
    %cst_185 = arith.constant 0.000000e+00 : bf16
    %560 = vector.broadcast %cst_185 : bf16 to vector<32x1xbf16>
    %561 = vector.extract_strided_slice %559 {offsets = [0, 0], sizes = [32, 255], strides = [1, 1]} : vector<32x256xbf16> to vector<32x255xbf16>
    %562 = tpu.concatenate %560, %561 in 1 : vector<32x1xbf16>, vector<32x255xbf16> -> vector<32x256xbf16>
    %c1_i32_186 = arith.constant 1 : i32
    %563 = vector.broadcast %c1_i32_186 : i32 to vector<1x256xi32>
    %564 = arith.cmpi sge, %1, %563 : vector<1x256xi32>
    %c0_i32_187 = arith.constant 0 : i32
    %565 = arith.sitofp %c0_i32_187 : i32 to bf16
    %566 = vector.shape_cast %564 : vector<1x256xi1> to vector<1x256xi1>
    %567 = vector.broadcast %566 : vector<1x256xi1> to vector<32x256xi1>
    %568 = vector.broadcast %565 : bf16 to vector<32x256xbf16>
    %569 = arith.select %567, %562, %568 : vector<32x256xi1>, vector<32x256xbf16>
    %cst_188 = arith.constant 0.000000e+00 : bf16
    %570 = vector.broadcast %cst_188 : bf16 to vector<32x1xbf16>
    %571 = vector.extract_strided_slice %559 {offsets = [0, 1], sizes = [32, 255], strides = [1, 1]} : vector<32x256xbf16> to vector<32x255xbf16>
    %572 = tpu.concatenate %571, %570 in 1 : vector<32x255xbf16>, vector<32x1xbf16> -> vector<32x256xbf16>
    %c15_i32_189 = arith.constant 15 : i32
    %573 = vector.broadcast %c15_i32_189 : i32 to vector<1x256xi32>
    %574 = arith.cmpi slt, %1, %573 : vector<1x256xi32>
    %c0_i32_190 = arith.constant 0 : i32
    %575 = arith.sitofp %c0_i32_190 : i32 to bf16
    %576 = vector.shape_cast %574 : vector<1x256xi1> to vector<1x256xi1>
    %577 = vector.broadcast %576 : vector<1x256xi1> to vector<32x256xi1>
    %578 = vector.broadcast %575 : bf16 to vector<32x256xbf16>
    %579 = arith.select %577, %572, %578 : vector<32x256xi1>, vector<32x256xbf16>
    %580 = tpu.concatenate %526, %516, %536, %546, %513, %556, %569, %559, %579 in 0 : vector<32x256xbf16>, vector<32x256xbf16>, vector<32x256xbf16>, vector<32x256xbf16>, vector<32x256xbf16>, vector<32x256xbf16>, vector<32x256xbf16>, vector<32x256xbf16>, vector<32x256xbf16> -> vector<288x256xbf16>
    %c5 = arith.constant 5 : index
    %c0_191 = arith.constant 0 : index
    %c0_192 = arith.constant 0 : index
    %581 = vector.load %arg3[%c5, %c0_191, %c0_192] : memref<6x32x288xbf16, #tpu.memory_space<vmem>>, vector<1x32x288xbf16>
    %582 = vector.shape_cast %581 : vector<1x32x288xbf16> to vector<32x288xbf16>
    %cst_193 = arith.constant dense<0.000000e+00> : vector<32x256xf32>
    %583 = tpu.matmul %582, %580, %cst_193 {dimension_numbers = #tpu.dot_dimension_numbers<[1], [0], [0], [1], [0, 0, 1, 1], [], []>} : vector<32x288xbf16>, vector<288x256xbf16>, vector<32x256xf32> -> vector<32x256xf32>
    %584 = vector.extract_strided_slice %0 {offsets = [6, 0, 0], sizes = [1, 32, 1], strides = [1, 1, 1]} : vector<8x32x2xf32> to vector<1x32x1xf32>
    %585 = vector.shape_cast %584 : vector<1x32x1xf32> to vector<32x1xf32>
    %586 = vector.broadcast %585 : vector<32x1xf32> to vector<32x256xf32>
    %587 = arith.mulf %583, %586 : vector<32x256xf32>
    %588 = vector.extract_strided_slice %0 {offsets = [6, 0, 1], sizes = [1, 32, 1], strides = [1, 1, 1]} : vector<8x32x2xf32> to vector<1x32x1xf32>
    %589 = vector.shape_cast %588 : vector<1x32x1xf32> to vector<32x1xf32>
    %590 = vector.broadcast %589 : vector<32x1xf32> to vector<32x256xf32>
    %591 = arith.addf %587, %590 : vector<32x256xf32>
    %cst_194 = arith.constant 0.000000e+00 : f32
    %592 = vector.broadcast %cst_194 : f32 to vector<32x256xf32>
    %593 = arith.cmpf oge, %591, %592 : vector<32x256xf32>
    %cst_195 = arith.constant 2.000000e-01 : f32
    %594 = vector.broadcast %cst_195 : f32 to vector<32x256xf32>
    %595 = arith.mulf %594, %591 : vector<32x256xf32>
    %596 = arith.select %593, %591, %595 : vector<32x256xi1>, vector<32x256xf32>
    %597 = arith.truncf %596 : vector<32x256xf32> to vector<32x256xbf16>
    %c0_196 = arith.constant 0 : index
    %c0_197 = arith.constant 0 : index
    %598 = vector.load %arg9[%c0_196, %c0_197] : memref<32x256xbf16, #tpu.memory_space<vmem>>, vector<32x256xbf16>
    tpu.vector_store %arg9[%c0_196, %c0_197], %597 {strides = array<i32>} : memref<32x256xbf16, #tpu.memory_space<vmem>>, vector<32x256xbf16>,
    %c0_198 = arith.constant 0 : index
    %c0_199 = arith.constant 0 : index
    %599 = vector.load %arg9[%c0_198, %c0_199] : memref<32x256xbf16, #tpu.memory_space<vmem>>, vector<32x256xbf16>
    %cst_200 = arith.constant 0.000000e+00 : bf16
    %600 = vector.broadcast %cst_200 : bf16 to vector<32x16xbf16>
    %601 = vector.extract_strided_slice %599 {offsets = [0, 0], sizes = [32, 240], strides = [1, 1]} : vector<32x256xbf16> to vector<32x240xbf16>
    %602 = tpu.concatenate %600, %601 in 1 : vector<32x16xbf16>, vector<32x240xbf16> -> vector<32x256xbf16>
    %cst_201 = arith.constant 0.000000e+00 : bf16
    %603 = vector.broadcast %cst_201 : bf16 to vector<32x1xbf16>
    %604 = vector.extract_strided_slice %602 {offsets = [0, 0], sizes = [32, 255], strides = [1, 1]} : vector<32x256xbf16> to vector<32x255xbf16>
    %605 = tpu.concatenate %603, %604 in 1 : vector<32x1xbf16>, vector<32x255xbf16> -> vector<32x256xbf16>
    %c1_i32_202 = arith.constant 1 : i32
    %606 = vector.broadcast %c1_i32_202 : i32 to vector<1x256xi32>
    %607 = arith.cmpi sge, %1, %606 : vector<1x256xi32>
    %c0_i32_203 = arith.constant 0 : i32
    %608 = arith.sitofp %c0_i32_203 : i32 to bf16
    %609 = vector.shape_cast %607 : vector<1x256xi1> to vector<1x256xi1>
    %610 = vector.broadcast %609 : vector<1x256xi1> to vector<32x256xi1>
    %611 = vector.broadcast %608 : bf16 to vector<32x256xbf16>
    %612 = arith.select %610, %605, %611 : vector<32x256xi1>, vector<32x256xbf16>
    %cst_204 = arith.constant 0.000000e+00 : bf16
    %613 = vector.broadcast %cst_204 : bf16 to vector<32x1xbf16>
    %614 = vector.extract_strided_slice %602 {offsets = [0, 1], sizes = [32, 255], strides = [1, 1]} : vector<32x256xbf16> to vector<32x255xbf16>
    %615 = tpu.concatenate %614, %613 in 1 : vector<32x255xbf16>, vector<32x1xbf16> -> vector<32x256xbf16>
    %c15_i32_205 = arith.constant 15 : i32
    %616 = vector.broadcast %c15_i32_205 : i32 to vector<1x256xi32>
    %617 = arith.cmpi slt, %1, %616 : vector<1x256xi32>
    %c0_i32_206 = arith.constant 0 : i32
    %618 = arith.sitofp %c0_i32_206 : i32 to bf16
    %619 = vector.shape_cast %617 : vector<1x256xi1> to vector<1x256xi1>
    %620 = vector.broadcast %619 : vector<1x256xi1> to vector<32x256xi1>
    %621 = vector.broadcast %618 : bf16 to vector<32x256xbf16>
    %622 = arith.select %620, %615, %621 : vector<32x256xi1>, vector<32x256xbf16>
    %cst_207 = arith.constant 0.000000e+00 : bf16
    %623 = vector.broadcast %cst_207 : bf16 to vector<32x1xbf16>
    %624 = vector.extract_strided_slice %599 {offsets = [0, 0], sizes = [32, 255], strides = [1, 1]} : vector<32x256xbf16> to vector<32x255xbf16>
    %625 = tpu.concatenate %623, %624 in 1 : vector<32x1xbf16>, vector<32x255xbf16> -> vector<32x256xbf16>
    %c1_i32_208 = arith.constant 1 : i32
    %626 = vector.broadcast %c1_i32_208 : i32 to vector<1x256xi32>
    %627 = arith.cmpi sge, %1, %626 : vector<1x256xi32>
    %c0_i32_209 = arith.constant 0 : i32
    %628 = arith.sitofp %c0_i32_209 : i32 to bf16
    %629 = vector.shape_cast %627 : vector<1x256xi1> to vector<1x256xi1>
    %630 = vector.broadcast %629 : vector<1x256xi1> to vector<32x256xi1>
    %631 = vector.broadcast %628 : bf16 to vector<32x256xbf16>
    %632 = arith.select %630, %625, %631 : vector<32x256xi1>, vector<32x256xbf16>
    %cst_210 = arith.constant 0.000000e+00 : bf16
    %633 = vector.broadcast %cst_210 : bf16 to vector<32x1xbf16>
    %634 = vector.extract_strided_slice %599 {offsets = [0, 1], sizes = [32, 255], strides = [1, 1]} : vector<32x256xbf16> to vector<32x255xbf16>
    %635 = tpu.concatenate %634, %633 in 1 : vector<32x255xbf16>, vector<32x1xbf16> -> vector<32x256xbf16>
    %c15_i32_211 = arith.constant 15 : i32
    %636 = vector.broadcast %c15_i32_211 : i32 to vector<1x256xi32>
    %637 = arith.cmpi slt, %1, %636 : vector<1x256xi32>
    %c0_i32_212 = arith.constant 0 : i32
    %638 = arith.sitofp %c0_i32_212 : i32 to bf16
    %639 = vector.shape_cast %637 : vector<1x256xi1> to vector<1x256xi1>
    %640 = vector.broadcast %639 : vector<1x256xi1> to vector<32x256xi1>
    %641 = vector.broadcast %638 : bf16 to vector<32x256xbf16>
    %642 = arith.select %640, %635, %641 : vector<32x256xi1>, vector<32x256xbf16>
    %cst_213 = arith.constant 0.000000e+00 : bf16
    %643 = vector.broadcast %cst_213 : bf16 to vector<32x16xbf16>
    %644 = vector.extract_strided_slice %599 {offsets = [0, 16], sizes = [32, 240], strides = [1, 1]} : vector<32x256xbf16> to vector<32x240xbf16>
    %645 = tpu.concatenate %644, %643 in 1 : vector<32x240xbf16>, vector<32x16xbf16> -> vector<32x256xbf16>
    %cst_214 = arith.constant 0.000000e+00 : bf16
    %646 = vector.broadcast %cst_214 : bf16 to vector<32x1xbf16>
    %647 = vector.extract_strided_slice %645 {offsets = [0, 0], sizes = [32, 255], strides = [1, 1]} : vector<32x256xbf16> to vector<32x255xbf16>
    %648 = tpu.concatenate %646, %647 in 1 : vector<32x1xbf16>, vector<32x255xbf16> -> vector<32x256xbf16>
    %c1_i32_215 = arith.constant 1 : i32
    %649 = vector.broadcast %c1_i32_215 : i32 to vector<1x256xi32>
    %650 = arith.cmpi sge, %1, %649 : vector<1x256xi32>
    %c0_i32_216 = arith.constant 0 : i32
    %651 = arith.sitofp %c0_i32_216 : i32 to bf16
    %652 = vector.shape_cast %650 : vector<1x256xi1> to vector<1x256xi1>
    %653 = vector.broadcast %652 : vector<1x256xi1> to vector<32x256xi1>
    %654 = vector.broadcast %651 : bf16 to vector<32x256xbf16>
    %655 = arith.select %653, %648, %654 : vector<32x256xi1>, vector<32x256xbf16>
    %cst_217 = arith.constant 0.000000e+00 : bf16
    %656 = vector.broadcast %cst_217 : bf16 to vector<32x1xbf16>
    %657 = vector.extract_strided_slice %645 {offsets = [0, 1], sizes = [32, 255], strides = [1, 1]} : vector<32x256xbf16> to vector<32x255xbf16>
    %658 = tpu.concatenate %657, %656 in 1 : vector<32x255xbf16>, vector<32x1xbf16> -> vector<32x256xbf16>
    %c15_i32_218 = arith.constant 15 : i32
    %659 = vector.broadcast %c15_i32_218 : i32 to vector<1x256xi32>
    %660 = arith.cmpi slt, %1, %659 : vector<1x256xi32>
    %c0_i32_219 = arith.constant 0 : i32
    %661 = arith.sitofp %c0_i32_219 : i32 to bf16
    %662 = vector.shape_cast %660 : vector<1x256xi1> to vector<1x256xi1>
    %663 = vector.broadcast %662 : vector<1x256xi1> to vector<32x256xi1>
    %664 = vector.broadcast %661 : bf16 to vector<32x256xbf16>
    %665 = arith.select %663, %658, %664 : vector<32x256xi1>, vector<32x256xbf16>
    %666 = tpu.concatenate %612, %602, %622, %632, %599, %642, %655, %645, %665 in 0 : vector<32x256xbf16>, vector<32x256xbf16>, vector<32x256xbf16>, vector<32x256xbf16>, vector<32x256xbf16>, vector<32x256xbf16>, vector<32x256xbf16>, vector<32x256xbf16>, vector<32x256xbf16> -> vector<288x256xbf16>
    %c0_220 = arith.constant 0 : index
    %c0_221 = arith.constant 0 : index
    %667 = vector.load %arg4[%c0_220, %c0_221] : memref<1x288xbf16, #tpu.memory_space<vmem>>, vector<1x288xbf16>
    %cst_222 = arith.constant dense<0.000000e+00> : vector<1x256xf32>
    %668 = tpu.matmul %667, %666, %cst_222 {dimension_numbers = #tpu.dot_dimension_numbers<[1], [0], [0], [1], [0, 0, 1, 1], [], []>} : vector<1x288xbf16>, vector<288x256xbf16>, vector<1x256xf32> -> vector<1x256xf32>
    %c0_223 = arith.constant 0 : index
    %c0_224 = arith.constant 0 : index
    %c0_225 = arith.constant 0 : index
    %669 = vector.load %arg7[%c0_223, %c0_224, %c0_225] : memref<1x1x256xf32, #tpu.memory_space<vmem>>, vector<1x1x256xf32>
    %670 = vector.shape_cast %669 : vector<1x1x256xf32> to vector<1x256xf32>
    %671 = arith.addf %668, %670 : vector<1x256xf32>
    %672 = vector.extract_strided_slice %0 {offsets = [7, 0, 1], sizes = [1, 1, 1], strides = [1, 1, 1]} : vector<8x32x2xf32> to vector<1x1x1xf32>
    %673 = vector.shape_cast %672 : vector<1x1x1xf32> to vector<1x1xf32>
    %674 = vector.broadcast %673 : vector<1x1xf32> to vector<1x256xf32>
    %675 = arith.addf %671, %674 : vector<1x256xf32>
    %cst_226 = arith.constant 0.000000e+00 : f32
    %676 = vector.broadcast %cst_226 : f32 to vector<1x256xf32>
    %677 = arith.maximumf %675, %676 : vector<1x256xf32>
    %678 = vector.shape_cast %677 : vector<1x256xf32> to vector<1x1x256xf32>
    %c0_227 = arith.constant 0 : index
    %c0_228 = arith.constant 0 : index
    %c0_229 = arith.constant 0 : index
    %679 = vector.load %arg8[%c0_227, %c0_228, %c0_229] : memref<1x1x256xf32, #tpu.memory_space<vmem>>, vector<1x1x256xf32>
    tpu.vector_store %arg8[%c0_227, %c0_228, %c0_229], %678 {strides = array<i32>} : memref<1x1x256xf32, #tpu.memory_space<vmem>>, vector<1x1x256xf32>,
    return
  }
  func.func @transform_0(%arg0: i32) -> (i32, i32, i32) {
    %c0_i32 = arith.constant 0 : i32
    %c0_i32_0 = arith.constant 0 : i32
    %c0_i32_1 = arith.constant 0 : i32
    return %arg0, %c0_i32, %c0_i32_0 : i32, i32, i32
  }
  func.func @transform_1(%arg0: i32) -> (i32, i32) {
    %c0_i32 = arith.constant 0 : i32
    %c0_i32_0 = arith.constant 0 : i32
    %c0_i32_1 = arith.constant 0 : i32
    return %c0_i32, %c0_i32_0 : i32, i32
  }
  func.func @transform_2(%arg0: i32) -> (i32, i32, i32) {
    %c0_i32 = arith.constant 0 : i32
    %c0_i32_0 = arith.constant 0 : i32
    %c0_i32_1 = arith.constant 0 : i32
    %c0_i32_2 = arith.constant 0 : i32
    return %c0_i32, %c0_i32_0, %c0_i32_1 : i32, i32, i32
  }
  func.func @transform_3(%arg0: i32) -> (i32, i32) {
    %c0_i32 = arith.constant 0 : i32
    %c0_i32_0 = arith.constant 0 : i32
    %c0_i32_1 = arith.constant 0 : i32
    return %c0_i32, %c0_i32_0 : i32, i32
  }
  func.func @transform_4(%arg0: i32) -> (i32, i32, i32) {
    %c0_i32 = arith.constant 0 : i32
    %c0_i32_0 = arith.constant 0 : i32
    %c0_i32_1 = arith.constant 0 : i32
    %c0_i32_2 = arith.constant 0 : i32
    return %c0_i32, %c0_i32_0, %c0_i32_1 : i32, i32, i32
  }
  func.func @transform_5(%arg0: i32) -> (i32, i32) {
    %c0_i32 = arith.constant 0 : i32
    %c0_i32_0 = arith.constant 0 : i32
    %c0_i32_1 = arith.constant 0 : i32
    return %c0_i32, %c0_i32_0 : i32, i32
  }
  func.func @transform_6(%arg0: i32) -> (i32, i32, i32) {
    %c0_i32 = arith.constant 0 : i32
    %c0_i32_0 = arith.constant 0 : i32
    %c0_i32_1 = arith.constant 0 : i32
    return %arg0, %c0_i32, %c0_i32_0 : i32, i32, i32
  }
  func.func @transform_7(%arg0: i32) -> (i32, i32, i32) {
    %c0_i32 = arith.constant 0 : i32
    %c0_i32_0 = arith.constant 0 : i32
    %c0_i32_1 = arith.constant 0 : i32
    return %arg0, %c0_i32, %c0_i32_0 : i32, i32, i32
  }
}

</mosaic_0001>

<llo_original>
// kernel: dense_net_forward.1
$region0: #{dense_net_forward.1}
  #allocation0 [shape = 'u32[]', space=smem, size = 0x4, offset = 0x4, fixed_abs, tag = 'smem constant byte address 0x4 - core index']
  #allocation1 [shape = 'u32[144,128]{1,0:T(1,128)}', space=vmem, size = 0x12000, scoped, tag = 'internal scratch']
  #allocation2 [shape = 'bf16[32,256]{1,0:T(16,128)(2,1)}', space=vmem, size = 0x4000, scoped, tag = 'scratch operand']
  %s0 = inlined_call_operand.vmem [shape: bf16[2,4,256], index: 0, kind: input, shape index: {}]
  %s1 = inlined_call_operand.vmem [shape: bf16[32,36], index: 1, kind: input, shape index: {}]
  %s2 = inlined_call_operand.vmem [shape: bf16[6,32,288], index: 2, kind: input, shape index: {}]
  %s3 = inlined_call_operand.vmem [shape: bf16[1,288], index: 3, kind: input, shape index: {}]
  %s4 = inlined_call_operand.vmem [shape: f32[8,32,2], index: 4, kind: input, shape index: {}]
  %s5 = inlined_call_operand.vmem [shape: s32[1,256], index: 5, kind: input, shape index: {}]
  %s6 = inlined_call_operand.vmem [shape: f32[2,1,256], index: 6, kind: input, shape index: {}]
  %s7 = inlined_call_operand.vmem [shape: f32[2,1,256], index: 7, kind: output, shape index: {}]
  %s8 = sld [smem:[#allocation0]]
  $region61: #{dense_net_forward.1} parent=0
    _
  %s10 = ssub.s32 1, %s8
  %s11 = scalar_select 0, %s10, %s8
  loop: start=0, step=1, limit=4
  $region2: #{dense_net_forward.1} parent=0 // loop_pre_header
    _
  $region3: #{dense_net_forward.1} parent=0 // loop_header
    %s13 = sphi 0, %s17
    %p14 = scmp.ge.s32.totalorder %s13, 4
    %s23 = sphi 0, %s25
    %s26 = sphi 0, %s23
    %s27 = sphi 0, %s26
    %s43 = sphi 0, %s27
    %s47 = sphi 0, %s47
    %s49 = sphi 0, %s47
    %s50 = sphi 0, %s49
    %s64 = sphi 0, %s50
    %s68 = sphi 0, %s68
    %s70 = sphi 0, %s68
    %s71 = sphi 0, %s70
    %s85 = sphi 0, %s71
    %s89 = sphi 0, %s89
    %s91 = sphi 0, %s89
    %s92 = sphi 0, %s91
    %s106 = sphi 0, %s92
    %s110 = sphi 0, %s110
    %s112 = sphi 0, %s110
    %s113 = sphi 0, %s112
    %s127 = sphi 0, %s113
    %s131 = sphi 0, %s131
    %s133 = sphi 0, %s131
    %s134 = sphi 0, %s133
    %s148 = sphi 0, %s134
    %s154 = sphi 0, %s156
    %s157 = sphi 0, %s154
    %s158 = sphi 0, %s157
    %s174 = sphi 0, %s158
    %s180 = sphi 0, %s182
    %s183 = sphi 0, %s180
    %s184 = sphi 0, %s183
    %s200 = sphi 0, %s184
  $region4: #{dense_net_forward.1} parent=0 // loop_header_branch
    %16 = sbr.rel (%p14) target = $region8
  $region5: #{dense_net_forward.1} parent=0 // loop_body
    %s18 = ssub.s32 %s13, 1
    %s19 = ssub.s32 %s13, 2
    %s20 = sadd.s32 %s13, 1
    %s21 = ssub.s32 %s13, %s20
    %p22 = scmp.eq.s32.totalorder %s21, 0
    %s24 = sadd.s32 %s23, 1
    %s25 = scalar_select %p22, %s23, %s24
    %p28 = pneg %p22
    %p29 = scmp.eq.s32.totalorder %s13, 1
    %p30 = por %p28, %p29
    %p31 = scmp.ne.s32.totalorder %s23, %s26
    %p32 = scmp.eq.s32.totalorder %s13, 0
    %p33 = por %p31, %p32
    %p34 = scmp.ne.s32.totalorder %s23, %s26
    %p35 = scmp.eq.s32.totalorder %s18, 1
    %p36 = por %p34, %p35
    %p37 = scmp.ne.s32.totalorder %s26, %s27
    %p38 = scmp.eq.s32.totalorder %s18, 0
    %p39 = por %p37, %p38
    %p40 = scmp.ne.s32.totalorder %s26, %s27
    %p41 = scmp.eq.s32.totalorder %s19, 1
    %p42 = por %p40, %p41
    %p44 = scmp.ne.s32.totalorder %s27, %s43
    %p45 = scmp.eq.s32.totalorder %s19, 0
    %p46 = por %p44, %p45
    %s48 = sadd.s32 %s47, 1
    %p51 = scmp.eq.s32.totalorder %s13, 1
    %p52 = scmp.ne.s32.totalorder %s47, %s49
    %p53 = scmp.eq.s32.totalorder %s13, 0
    %p54 = por %p52, %p53
    %p55 = scmp.ne.s32.totalorder %s47, %s49
    %p56 = scmp.eq.s32.totalorder %s18, 1
    %p57 = por %p55, %p56
    %p58 = scmp.ne.s32.totalorder %s49, %s50
    %p59 = scmp.eq.s32.totalorder %s18, 0
    %p60 = por %p58, %p59
    %p61 = scmp.ne.s32.totalorder %s49, %s50
    %p62 = scmp.eq.s32.totalorder %s19, 1
    %p63 = por %p61, %p62
    %p65 = scmp.ne.s32.totalorder %s50, %s64
    %p66 = scmp.eq.s32.totalorder %s19, 0
    %p67 = por %p65, %p66
    %s69 = sadd.s32 %s68, 1
    %p72 = scmp.eq.s32.totalorder %s13, 1
    %p73 = scmp.ne.s32.totalorder %s68, %s70
    %p74 = scmp.eq.s32.totalorder %s13, 0
    %p75 = por %p73, %p74
    %p76 = scmp.ne.s32.totalorder %s68, %s70
    %p77 = scmp.eq.s32.totalorder %s18, 1
    %p78 = por %p76, %p77
    %p79 = scmp.ne.s32.totalorder %s70, %s71
    %p80 = scmp.eq.s32.totalorder %s18, 0
    %p81 = por %p79, %p80
    %p82 = scmp.ne.s32.totalorder %s70, %s71
    %p83 = scmp.eq.s32.totalorder %s19, 1
    %p84 = por %p82, %p83
    %p86 = scmp.ne.s32.totalorder %s71, %s85
    %p87 = scmp.eq.s32.totalorder %s19, 0
    %p88 = por %p86, %p87
    %s90 = sadd.s32 %s89, 1
    %p93 = scmp.eq.s32.totalorder %s13, 1
    %p94 = scmp.ne.s32.totalorder %s89, %s91
    %p95 = scmp.eq.s32.totalorder %s13, 0
    %p96 = por %p94, %p95
    %p97 = scmp.ne.s32.totalorder %s89, %s91
    %p98 = scmp.eq.s32.totalorder %s18, 1
    %p99 = por %p97, %p98
    %p100 = scmp.ne.s32.totalorder %s91, %s92
    %p101 = scmp.eq.s32.totalorder %s18, 0
    %p102 = por %p100, %p101
    %p103 = scmp.ne.s32.totalorder %s91, %s92
    %p104 = scmp.eq.s32.totalorder %s19, 1
    %p105 = por %p103, %p104
    %p107 = scmp.ne.s32.totalorder %s92, %s106
    %p108 = scmp.eq.s32.totalorder %s19, 0
    %p109 = por %p107, %p108
    %s111 = sadd.s32 %s110, 1
    %p114 = scmp.eq.s32.totalorder %s13, 1
    %p115 = scmp.ne.s32.totalorder %s110, %s112
    %p116 = scmp.eq.s32.totalorder %s13, 0
    %p117 = por %p115, %p116
    %p118 = scmp.ne.s32.totalorder %s110, %s112
    %p119 = scmp.eq.s32.totalorder %s18, 1
    %p120 = por %p118, %p119
    %p121 = scmp.ne.s32.totalorder %s112, %s113
    %p122 = scmp.eq.s32.totalorder %s18, 0
    %p123 = por %p121, %p122
    %p124 = scmp.ne.s32.totalorder %s112, %s113
    %p125 = scmp.eq.s32.totalorder %s19, 1
    %p126 = por %p124, %p125
    %p128 = scmp.ne.s32.totalorder %s113, %s127
    %p129 = scmp.eq.s32.totalorder %s19, 0
    %p130 = por %p128, %p129
    %s132 = sadd.s32 %s131, 1
    %p135 = scmp.eq.s32.totalorder %s13, 1
    %p136 = scmp.ne.s32.totalorder %s131, %s133
    %p137 = scmp.eq.s32.totalorder %s13, 0
    %p138 = por %p136, %p137
    %p139 = scmp.ne.s32.totalorder %s131, %s133
    %p140 = scmp.eq.s32.totalorder %s18, 1
    %p141 = por %p139, %p140
    %p142 = scmp.ne.s32.totalorder %s133, %s134
    %p143 = scmp.eq.s32.totalorder %s18, 0
    %p144 = por %p142, %p143
    %p145 = scmp.ne.s32.totalorder %s133, %s134
    %p146 = scmp.eq.s32.totalorder %s19, 1
    %p147 = por %p145, %p146
    %p149 = scmp.ne.s32.totalorder %s134, %s148
    %p150 = scmp.eq.s32.totalorder %s19, 0
    %p151 = por %p149, %p150
    %s152 = ssub.s32 %s13, %s20
    %p153 = scmp.eq.s32.totalorder %s152, 0
    %s155 = sadd.s32 %s154, 1
    %s156 = scalar_select %p153, %s154, %s155
    %p159 = pneg %p153
    %p160 = scmp.eq.s32.totalorder %s13, 1
    %p161 = por %p159, %p160
    %p162 = scmp.ne.s32.totalorder %s154, %s157
    %p163 = scmp.eq.s32.totalorder %s13, 0
    %p164 = por %p162, %p163
    %p165 = scmp.ne.s32.totalorder %s154, %s157
    %p166 = scmp.eq.s32.totalorder %s18, 1
    %p167 = por %p165, %p166
    %p168 = scmp.ne.s32.totalorder %s157, %s158
    %p169 = scmp.eq.s32.totalorder %s18, 0
    %p170 = por %p168, %p169
    %p171 = scmp.ne.s32.totalorder %s157, %s158
    %p172 = scmp.eq.s32.totalorder %s19, 1
    %p173 = por %p171, %p172
    %p175 = scmp.ne.s32.totalorder %s158, %s174
    %p176 = scmp.eq.s32.totalorder %s19, 0
    %p177 = por %p175, %p176
    %s178 = ssub.s32 %s13, %s20
    %p179 = scmp.eq.s32.totalorder %s178, 0
    %s181 = sadd.s32 %s180, 1
    %s182 = scalar_select %p179, %s180, %s181
    %p185 = pneg %p179
    %p186 = scmp.eq.s32.totalorder %s13, 1
    %p187 = por %p185, %p186
    %p188 = scmp.ne.s32.totalorder %s180, %s183
    %p189 = scmp.eq.s32.totalorder %s13, 0
    %p190 = por %p188, %p189
    %p191 = scmp.ne.s32.totalorder %s180, %s183
    %p192 = scmp.eq.s32.totalorder %s18, 1
    %p193 = por %p191, %p192
    %p194 = scmp.ne.s32.totalorder %s183, %s184
    %p195 = scmp.eq.s32.totalorder %s18, 0
    %p196 = por %p194, %p195
    %p197 = scmp.ne.s32.totalorder %s183, %s184
    %p198 = scmp.eq.s32.totalorder %s19, 1
    %p199 = por %p197, %p198
    %p201 = scmp.ne.s32.totalorder %s184, %s200
    %p202 = scmp.eq.s32.totalorder %s19, 0
    %p203 = por %p201, %p202
    %p204 = scmp.le.s32.totalorder 1, %s13
    %p205 = scmp.lt.s32.totalorder %s13, 3
    %p206 = pnand %p204, %p205
    %p207 = pneg %p206
    // Predicated region
    $region9: #{dense_net_forward.1} parent=5 // pred_check
      _
    $region10: #{dense_net_forward.1} parent=5 // pred_check_branch
      %209 = sbr.rel (%p206) target = $region12
    $region11: #{dense_net_forward.1} parent=5 // pred_region
      %s210 = ssub.s32 %s13, 1
      // Predicated region
      $region13: #{dense_net_forward.1} parent=11 // pred_check
        %p211 = pneg %p60
      $region14: #{dense_net_forward.1} parent=11 // pred_check_branch
        %213 = sbr.rel (%p211) target = $region16
      $region15: #{dense_net_forward.1} parent=11 // pred_region
        _
      $region16: #{dense_net_forward.1} parent=11 // pred_fallthru
        _
      // Predicated region
      $region17: #{dense_net_forward.1} parent=11 // pred_check
        %p214 = pneg %p81
      $region18: #{dense_net_forward.1} parent=11 // pred_check_branch
        %216 = sbr.rel (%p214) target = $region20
      $region19: #{dense_net_forward.1} parent=11 // pred_region
        _
      $region20: #{dense_net_forward.1} parent=11 // pred_fallthru
        _
      // Predicated region
      $region21: #{dense_net_forward.1} parent=11 // pred_check
        %p217 = pneg %p102
      $region22: #{dense_net_forward.1} parent=11 // pred_check_branch
        %219 = sbr.rel (%p217) target = $region24
      $region23: #{dense_net_forward.1} parent=11 // pred_region
        _
      $region24: #{dense_net_forward.1} parent=11 // pred_fallthru
        _
      // Predicated region
      $region25: #{dense_net_forward.1} parent=11 // pred_check
        %p220 = pneg %p123
      $region26: #{dense_net_forward.1} parent=11 // pred_check_branch
        %222 = sbr.rel (%p220) target = $region28
      $region27: #{dense_net_forward.1} parent=11 // pred_region
        _
      $region28: #{dense_net_forward.1} parent=11 // pred_fallthru
        _
      // Predicated region
      $region29: #{dense_net_forward.1} parent=11 // pred_check
        %p223 = pneg %p144
      $region30: #{dense_net_forward.1} parent=11 // pred_check_branch
        %225 = sbr.rel (%p223) target = $region32
      $region31: #{dense_net_forward.1} parent=11 // pred_region
        _
      $region32: #{dense_net_forward.1} parent=11 // pred_fallthru
        _
    $region12: #{dense_net_forward.1} parent=5 // pred_fallthru
      _
    %p226 = scmp.lt.s32.totalorder %s13, 2
    // Predicated region
    $region33: #{dense_net_forward.1} parent=5 // pred_check
      %p227 = pneg %p226
    $region34: #{dense_net_forward.1} parent=5 // pred_check_branch
      %229 = sbr.rel (%p227) target = $region36
    $region35: #{dense_net_forward.1} parent=5 // pred_region
      // Predicated region
      $region37: #{dense_net_forward.1} parent=35 // pred_check
        %p230 = pneg %p33
      $region38: #{dense_net_forward.1} parent=35 // pred_check_branch
        %232 = sbr.rel (%p230) target = $region40
      $region39: #{dense_net_forward.1} parent=35 // pred_region
        %p233 = scmp.lt.s32.totalorder %s13, 1
        %s234 = scalar_select %p233, %s13, 1
        %s235 = smul.addr %s234, 2
        %s236 = smul.addr %s235, 2
        %s237 = scalar_lea.vmem %s0, %s236
      $region40: #{dense_net_forward.1} parent=35 // pred_fallthru
        _
      // Predicated region
      $region41: #{dense_net_forward.1} parent=35 // pred_check
        %p238 = pneg %p164
      $region42: #{dense_net_forward.1} parent=35 // pred_check_branch
        %240 = sbr.rel (%p238) target = $region44
      $region43: #{dense_net_forward.1} parent=35 // pred_region
        %p241 = scmp.lt.s32.totalorder %s13, 1
        %s242 = scalar_select %p241, %s13, 1
        %s243 = smul.addr %s242, 2
        %s244 = scalar_lea.vmem %s6, %s243
      $region44: #{dense_net_forward.1} parent=35 // pred_fallthru
        _
    $region36: #{dense_net_forward.1} parent=5 // pred_fallthru
      _
    %p245 = scmp.le.s32.totalorder 1, %s13
    %p246 = scmp.lt.s32.totalorder %s13, 3
    %p247 = pnand %p245, %p246
    %p248 = pneg %p247
    // Predicated region
    $region45: #{dense_net_forward.1} parent=5 // pred_check
      _
    $region46: #{dense_net_forward.1} parent=5 // pred_check_branch
      %250 = sbr.rel (%p247) target = $region48
    $region47: #{dense_net_forward.1} parent=5 // pred_region
      %s251 = ssub.s32 %s13, 1
      %p252 = scmp.lt.s32.totalorder %s18, 1
      %s253 = scalar_select %p252, %s18, 1
      %s254 = smul.addr %s253, 2
      %s255 = smul.addr %s254, 2
      %s256 = scalar_lea.vmem %s0, %s255
      %p257 = pneg %p39
      %p258 = pneg %p36
      %p259 = pneg %p60
      %p260 = pneg %p57
      %p261 = pneg %p81
      %p262 = pneg %p78
      %p263 = pneg %p102
      %p264 = pneg %p99
      %p265 = pneg %p123
      %p266 = pneg %p120
      %p267 = pneg %p144
      %p268 = pneg %p141
      %p269 = scmp.lt.s32.totalorder %s18, 1
      %s270 = scalar_select %p269, %s18, 1
      %s271 = smul.addr %s270, 2
      %s272 = scalar_lea.vmem %s6, %s271
      %p273 = pneg %p170
      %p274 = pneg %p167
      %p275 = pneg %p196
      %p276 = pneg %p193
      %p277 = scmp.lt.s32.totalorder %s18, 1
      %s278 = scalar_select %p277, %s18, 1
      %s279 = smul.addr %s278, 2
      %s280 = scalar_lea.vmem %s7, %s279
      %p281 = scmp.lt.s32.totalorder %s18, 1
      %s282 = scalar_select %p281, %s18, 1
      %s283 = smul.addr %s282, 2
      %s284 = smul.addr %s283, 2
      %s285 = scalar_lea.vmem %s0, %s284
      %p286 = scmp.lt.s32.totalorder %s18, 1
      %s287 = scalar_select %p286, %s18, 1
      %s288 = smul.addr %s287, 2
      %s289 = scalar_lea.vmem %s6, %s288
      %p290 = scmp.lt.s32.totalorder %s18, 1
      %s291 = scalar_select %p290, %s18, 1
      %s292 = smul.addr %s291, 2
      %s293 = scalar_lea.vmem %s7, %s292
      %v297 = vld [vmem:[%s4] sm:$0xff]
      %v298 = vld [vmem:[%s4 + $0x8] sm:$0xff]
      %v299 = vld [vmem:[%s4 + $0x10] sm:$0xff]
      %v300 = vld [vmem:[%s4 + $0x18] sm:$0xff]
      %v301 = vld [vmem:[%s4 + $0x20] sm:$0xff]
      %v302 = vld [vmem:[%s4 + $0x28] sm:$0xff]
      %v303 = vld [vmem:[%s4 + $0x30] sm:$0xff]
      %v304 = vld [vmem:[%s4 + $0x38] sm:$0xff]
      %v305 = vld [vmem:[%s4 + $0x40] sm:$0xff]
      %v306 = vld [vmem:[%s4 + $0x48] sm:$0xff]
      %v307 = vld [vmem:[%s4 + $0x50] sm:$0xff]
      %v308 = vld [vmem:[%s4 + $0x58] sm:$0xff]
      %v309 = vld [vmem:[%s4 + $0x60] sm:$0xff]
      %v310 = vld [vmem:[%s4 + $0x68] sm:$0xff]
      %v311 = vld [vmem:[%s4 + $0x70] sm:$0xff]
      %v312 = vld [vmem:[%s4 + $0x78] sm:$0xff]
      %v313 = vld [vmem:[%s4 + $0x80] sm:$0xff]
      %v314 = vld [vmem:[%s4 + $0x88] sm:$0xff]
      %v315 = vld [vmem:[%s4 + $0x90] sm:$0xff]
      %v316 = vld [vmem:[%s4 + $0x98] sm:$0xff]
      %v317 = vld [vmem:[%s4 + $0xa0] sm:$0xff]
      %v318 = vld [vmem:[%s4 + $0xa8] sm:$0xff]
      %v319 = vld [vmem:[%s4 + $0xb0] sm:$0xff]
      %v320 = vld [vmem:[%s4 + $0xb8] sm:$0xff]
      %v321 = vld [vmem:[%s4 + $0xc0] sm:$0xff]
      %v322 = vld [vmem:[%s4 + $0xc8] sm:$0xff]
      %v323 = vld [vmem:[%s4 + $0xd0] sm:$0xff]
      %v324 = vld [vmem:[%s4 + $0xd8] sm:$0xff]
      %v325 = vld [vmem:[%s4 + $0xe0] sm:$0xff]
      %v326 = vld [vmem:[%s5] sm:$0x3]
      %v327 = vld [vmem:[%s285] sm:$0xf]
      %v330 = vunpack.c.l.s4 1983009808
      %v331 = vunpack.c.0.s8 %v330
      %v332 = vlaneseq
      %v333 = vshrl.u32 %v332, 7
      %v334 = vsub.s32 %v331, %v333
      %v335 = vrot.slane %v327, %v334
      %v336 = vcombine.high %v335, %v335
      %337 = vrot.lane.b32.xlu0 %v335, 16
      %v338 = vpop.permute.xlu0 %337
      %339 = vrot.lane.b32.xlu0 %v336, 16
      %v340 = vpop.permute.xlu0 %339
      %vm341 = vcmask 130048
      %v342 = vsel %vm341, %v338, %v340
      %vm343 = vcmask 130048
      %v346 = vsel %vm343, 0, %v338
      %348 = vrot.lane.b32.xlu0 %v346, 1
      %v349 = vpop.permute.xlu0 %348
      %350 = vrot.lane.b32.xlu0 %v342, 1
      %v351 = vpop.permute.xlu0 %350
      %vm352 = vcmask 7168
      %v353 = vsel %vm352, %v349, %v351
      %vm355 = vcmask 7168
      %v357 = vsel %vm355, 0, %v349
      %vm359 = vcmp.ge.s32.totalorder %v326, 1
      %v360 = vsel %vm359, 1, 0
      %v361 = vlaneseq
      %v362 = vshrl.u32 %v361, 7
      %v363 = vsub.s32 0, %v362
      %v364 = vrot.slane %v360, %v363
      %v365 = vlaneseq
      %v366 = vshrl.u32 %v365, 7
      %v367 = vsub.s32 1, %v366
      %v368 = vrot.slane %v360, %v367
      %vm369 = vcmp.eq.s32.totalorder %v364, 1
      %vm370 = vcmp.eq.s32.totalorder %v368, 1
      %vm371 = vmpackc.low %vm370, %vm369
      %v372 = vsel %vm371, 65537, 0
      %v373 = vlaneseq
      %v374 = vshrl.u32 %v373, 7
      %v375 = vsub.s32 0, %v374
      %v376 = vrot.slane %v372, %v375
      %v377 = vlaneseq
      %v378 = vshrl.u32 %v377, 7
      %v379 = vsub.s32 4, %v378
      %v380 = vrot.slane %v372, %v379
      %vm381 = vcmp.ne.s16.totalorder %v376, 0
      %vm382 = vcmp.ne.s16.totalorder %v380, 0
      %v383 = vsel %vm381, %v357, 0
      %v384 = vsel %vm382, %v353, 0
      %385 = vrot.lane.b32.xlu0 %v346, 127
      %v386 = vpop.permute.xlu0 %385
      %387 = vrot.lane.b32.xlu0 %v342, 127
      %v388 = vpop.permute.xlu0 %387
      %vm389 = vcmask 1039360
      %v390 = vsel %vm389, %v386, %v388
      %vm392 = vcmask 1039360
      %v394 = vsel %vm392, %v388, 0
      %vm396 = vcmp.lt.s32.totalorder %v326, 15
      %v397 = vsel %vm396, 1, 0
      %v398 = vlaneseq
      %v399 = vshrl.u32 %v398, 7
      %v400 = vsub.s32 0, %v399
      %v401 = vrot.slane %v397, %v400
      %v402 = vlaneseq
      %v403 = vshrl.u32 %v402, 7
      %v404 = vsub.s32 1, %v403
      %v405 = vrot.slane %v397, %v404
      %vm406 = vcmp.eq.s32.totalorder %v401, 1
      %vm407 = vcmp.eq.s32.totalorder %v405, 1
      %vm408 = vmpackc.low %vm407, %vm406
      %v409 = vsel %vm408, 65537, 0
      %v410 = vlaneseq
      %v411 = vshrl.u32 %v410, 7
      %v412 = vsub.s32 0, %v411
      %v413 = vrot.slane %v409, %v412
      %v414 = vlaneseq
      %v415 = vshrl.u32 %v414, 7
      %v416 = vsub.s32 4, %v415
      %v417 = vrot.slane %v409, %v416
      %vm418 = vcmp.ne.s16.totalorder %v413, 0
      %vm419 = vcmp.ne.s16.totalorder %v417, 0
      %v420 = vsel %vm418, %v390, 0
      %v421 = vsel %vm419, %v394, 0
      %422 = vrot.lane.b32.xlu0 %v335, 1
      %v423 = vpop.permute.xlu0 %422
      %424 = vrot.lane.b32.xlu0 %v336, 1
      %v425 = vpop.permute.xlu0 %424
      %v426 = vsel %vm352, %v423, %v425
      %v429 = vsel %vm355, 0, %v423
      %v431 = vsel %vm381, %v429, 0
      %v432 = vsel %vm382, %v426, 0
      %433 = vrot.lane.b32.xlu0 %v335, 127
      %v434 = vpop.permute.xlu0 %433
      %435 = vrot.lane.b32.xlu0 %v336, 127
      %v436 = vpop.permute.xlu0 %435
      %v437 = vsel %vm389, %v434, %v436
      %v440 = vsel %vm392, %v436, 0
      %v442 = vsel %vm418, %v437, 0
      %v443 = vsel %vm419, %v440, 0
      %444 = vrot.lane.b32.xlu0 %v335, 112
      %v445 = vpop.permute.xlu0 %444
      %446 = vrot.lane.b32.xlu0 %v336, 112
      %v447 = vpop.permute.xlu0 %446
      %vm448 = vcmask 916480
      %v449 = vsel %vm448, %v445, %v447
      %vm450 = vcmask 916480
      %v452 = vsel %vm450, %v447, 0
      %454 = vrot.lane.b32.xlu0 %v449, 1
      %v455 = vpop.permute.xlu0 %454
      %456 = vrot.lane.b32.xlu0 %v452, 1
      %v457 = vpop.permute.xlu0 %456
      %v458 = vsel %vm352, %v455, %v457
      %v461 = vsel %vm355, 0, %v455
      %v463 = vsel %vm381, %v461, 0
      %v464 = vsel %vm382, %v458, 0
      %465 = vrot.lane.b32.xlu0 %v449, 127
      %v466 = vpop.permute.xlu0 %465
      %467 = vrot.lane.b32.xlu0 %v452, 127
      %v468 = vpop.permute.xlu0 %467
      %v469 = vsel %vm389, %v466, %v468
      %v472 = vsel %vm392, %v468, 0
      %v474 = vsel %vm418, %v469, 0
      %v475 = vsel %vm419, %v472, 0
      %v476 = vrot.slane %v346, 6
      %v477 = vrot.slane %v342, 6
      %v480 = vrot.slane %v420, 4
      %v481 = vrot.slane %v421, 4
      %v484 = vrot.slane %v431, 2
      %v485 = vrot.slane %v432, 2
      %v488 = vrot.slane %v442, 6
      %v489 = vrot.slane %v443, 6
      %v492 = vrot.slane %v463, 4
      %v493 = vrot.slane %v464, 4
      %v494 = vrot.slane %v449, 2
      %v495 = vrot.slane %v452, 2
      %vm496 = vcmask 1041408
      %v499 = vsel %vm496, %v383, %v476
      %v502 = vsel %vm496, %v384, %v477
      %vm503 = vcmask 1043456
      %v505 = vsel %vm503, %v499, %v480
      %v507 = vsel %vm503, %v502, %v481
      %vm508 = vcmask 1045504
      %v510 = vsel %vm508, %v505, %v484
      %v513 = vsel %vm508, %v507, %v485
      %v517 = vsel %vm496, %v335, %v488
      %v520 = vsel %vm496, %v336, %v489
      %v522 = vsel %vm503, %v517, %v492
      %v524 = vsel %vm503, %v520, %v493
      %v526 = vsel %vm508, %v522, %v494
      %v529 = vsel %vm508, %v524, %v495
      %v531 = vld [vmem:[%s1] sm:$0xf]
      %v532 = vld [vmem:[%s1 + $0x4] sm:$0xf]
      %v533 = vld [vmem:[%s1 + $0x8] sm:$0xf]
      %v534 = vld [vmem:[%s1 + $0xc] sm:$0xf]
      %v539 = vunpack.c.l.b16 %v531
      %v540 = vunpack.c.l.b16 %v532
      %v541 = vunpack.c.l.b16 %v533
      %v542 = vunpack.c.l.b16 %v534
      %v543 = vpack.c.b16 %v540, %v539
      %v544 = vpack.c.b16 %v542, %v541
      %vm545 = vcmask 293888
      %v547 = vsel %vm545, %v543, 0
      %v550 = vsel %vm545, %v544, 0
      %v553 = vsel %vm496, %v474, 0
      %v556 = vsel %vm496, %v475, 0
      %558 = vmatprep.subr.bf16.mxu0 %v513
      %559 = vmatpush1.bf16.msra.mxu0 %v510
      %560 = vmatprep.subr.bf16.mxu0 %v529
      %561 = vmatpush1.bf16.msra.mxu0 %v526
      %562 = vmatprep.subr.bf16.mxu0 %v556
      %563 = vmatpush1.bf16.msra.mxu0 %v553
      %564 = vmatprep.subr.bf16.mxu0 0
      %565 = vmatpush1.bf16.msra.mxu0 0
      %566 = vmatprep.subr.bf16.mxu0 0
      %567 = vmatpush1.bf16.msra.mxu0 0
      %568 = vmatprep.subr.bf16.mxu0 0
      %569 = vmatpush1.bf16.msra.mxu0 0
      %570 = vmatprep.subr.bf16.mxu0 0
      %571 = vmatpush1.bf16.msra.mxu0 0
      %572 = vmatprep.subr.bf16.mxu0 0
      %573 = vmatpush1.bf16.msra.mxu0 0
      %574 = vmatprep.subr.bf16.mxu0 0
      %575 = vmatpush1.bf16.msra.mxu0 0
      %576 = vmatprep.subr.bf16.mxu0 0
      %577 = vmatpush1.bf16.msra.mxu0 0
      %578 = vmatprep.subr.bf16.mxu0 0
      %579 = vmatpush1.bf16.msra.mxu0 0
      %580 = vmatprep.subr.bf16.mxu0 0
      %581 = vmatpush1.bf16.msra.mxu0 0
      %582 = vmatprep.subr.bf16.mxu0 0
      %583 = vmatpush1.bf16.msra.mxu0 0
      %584 = vmatprep.subr.bf16.mxu0 0
      %585 = vmatpush1.bf16.msra.mxu0 0
      %586 = vmatprep.subr.bf16.mxu0 0
      %587 = vmatpush1.bf16.msra.mxu0 0
      %588 = vmatprep.subr.bf16.mxu0 0
      %589 = vmatpush1.bf16.msra.mxu0 0
      %590 = vmatprep.mubr.bf16.mxu0 0
      %591 = vmatmul.mubr.bf16.gmra.mrb[0].mxu0 %v547
      %v592 = vpop.f32.mrb[0].mxu0
      %v593 = vadd.f32 0.0, %v592
      %v594 = vpop.f32.mrb[0].mxu0
      %v595 = vadd.f32 0.0, %v594
      %v596 = vpop.f32.mrb[0].mxu0
      %v597 = vadd.f32 0.0, %v596
      %v598 = vpop.f32.mrb[0].mxu0
      %v599 = vadd.f32 0.0, %v598
      %600 = vmatprep.mubr.bf16.mxu0 0
      %601 = vmatmul.mubr.bf16.gmra.mrb[0].mxu0 %v550
      %v602 = vpop.f32.mrb[0].mxu0
      %v603 = vadd.f32 0.0, %v602
      %v604 = vpop.f32.mrb[0].mxu0
      %v605 = vadd.f32 0.0, %v604
      %v606 = vpop.f32.mrb[0].mxu0
      %v607 = vadd.f32 0.0, %v606
      %v608 = vpop.f32.mrb[0].mxu0
      %v609 = vadd.f32 0.0, %v608
      %610 = vdwg.mxu0
      %612 = vset.pattern.permute.xlu0 0
      %613 = vperm.xlu0 %612, %v297
      %v614 = vpop.permute.xlu0 %613
      %617 = vset.pattern.permute.xlu0 0
      %618 = vperm.xlu0 %617, %v298
      %v619 = vpop.permute.xlu0 %618
      %622 = vset.pattern.permute.xlu0 0
      %623 = vperm.xlu0 %622, %v299
      %v624 = vpop.permute.xlu0 %623
      %627 = vset.pattern.permute.xlu0 0
      %628 = vperm.xlu0 %627, %v300
      %v629 = vpop.permute.xlu0 %628
      %v631 = vmul.f32 %v593, %v614
      %v632 = vmul.f32 %v595, %v614
      %v633 = vmul.f32 %v597, %v619
      %v634 = vmul.f32 %v599, %v619
      %v635 = vmul.f32 %v603, %v624
      %v636 = vmul.f32 %v605, %v624
      %v637 = vmul.f32 %v607, %v629
      %v638 = vmul.f32 %v609, %v629
      %639 = vset.pattern.permute.xlu0 1
      %640 = vperm.xlu0 %639, %v297
      %v641 = vpop.permute.xlu0 %640
      %643 = vset.pattern.permute.xlu0 1
      %644 = vperm.xlu0 %643, %v298
      %v645 = vpop.permute.xlu0 %644
      %647 = vset.pattern.permute.xlu0 1
      %648 = vperm.xlu0 %647, %v299
      %v649 = vpop.permute.xlu0 %648
      %651 = vset.pattern.permute.xlu0 1
      %652 = vperm.xlu0 %651, %v300
      %v653 = vpop.permute.xlu0 %652
      %v655 = vadd.f32 %v631, %v641
      %v656 = vadd.f32 %v632, %v641
      %v657 = vadd.f32 %v633, %v645
      %v658 = vadd.f32 %v634, %v645
      %v659 = vadd.f32 %v635, %v649
      %v660 = vadd.f32 %v636, %v649
      %v661 = vadd.f32 %v637, %v653
      %v662 = vadd.f32 %v638, %v653
      %v663 = vpack.c.bf16 %v657, %v655
      %v664 = vpack.c.bf16 %v658, %v656
      %v665 = vpack.c.bf16 %v661, %v659
      %v666 = vpack.c.bf16 %v662, %v660
      %667 = vst [vmem:[#allocation2] sm:$0xff] %v663
      %668 = vst [vmem:[#allocation2 + $0x8] sm:$0xff] %v664
      %669 = vst [vmem:[#allocation2 + $0x10] sm:$0xff] %v665
      %670 = vst [vmem:[#allocation2 + $0x18] sm:$0xff] %v666
      %v671 = vld [vmem:[#allocation2] sm:$0xff]
      %v672 = vld [vmem:[#allocation2 + $0x8] sm:$0xff]
      %v673 = vld [vmem:[#allocation2 + $0x10] sm:$0xff]
      %v674 = vld [vmem:[#allocation2 + $0x18] sm:$0xff]
      %679 = vrot.lane.b32.xlu0 %v671, 16
      %v680 = vpop.permute.xlu0 %679
      %681 = vrot.lane.b32.xlu0 %v672, 16
      %v682 = vpop.permute.xlu0 %681
      %683 = vrot.lane.b32.xlu0 %v673, 16
      %v684 = vpop.permute.xlu0 %683
      %685 = vrot.lane.b32.xlu0 %v674, 16
      %v686 = vpop.permute.xlu0 %685
      %v687 = vsel %vm341, %v680, %v682
      %v688 = vsel %vm341, %v684, %v686
      %v692 = vsel %vm343, 0, %v680
      %v695 = vsel %vm343, 0, %v684
      %699 = vrot.lane.b32.xlu0 %v692, 1
      %v700 = vpop.permute.xlu0 %699
      %701 = vrot.lane.b32.xlu0 %v687, 1
      %v702 = vpop.permute.xlu0 %701
      %703 = vrot.lane.b32.xlu0 %v695, 1
      %v704 = vpop.permute.xlu0 %703
      %705 = vrot.lane.b32.xlu0 %v688, 1
      %v706 = vpop.permute.xlu0 %705
      %v707 = vsel %vm352, %v700, %v702
      %v708 = vsel %vm352, %v704, %v706
      %v712 = vsel %vm355, 0, %v700
      %v715 = vsel %vm355, 0, %v704
      %v717 = vsel %vm381, %v712, 0
      %v718 = vsel %vm382, %v707, 0
      %v719 = vsel %vm381, %v715, 0
      %v720 = vsel %vm382, %v708, 0
      %721 = vrot.lane.b32.xlu0 %v692, 127
      %v722 = vpop.permute.xlu0 %721
      %723 = vrot.lane.b32.xlu0 %v687, 127
      %v724 = vpop.permute.xlu0 %723
      %725 = vrot.lane.b32.xlu0 %v695, 127
      %v726 = vpop.permute.xlu0 %725
      %727 = vrot.lane.b32.xlu0 %v688, 127
      %v728 = vpop.permute.xlu0 %727
      %v729 = vsel %vm389, %v722, %v724
      %v730 = vsel %vm389, %v726, %v728
      %v734 = vsel %vm392, %v724, 0
      %v737 = vsel %vm392, %v728, 0
      %v739 = vsel %vm418, %v729, 0
      %v740 = vsel %vm419, %v734, 0
      %v741 = vsel %vm418, %v730, 0
      %v742 = vsel %vm419, %v737, 0
      %743 = vrot.lane.b32.xlu0 %v671, 1
      %v744 = vpop.permute.xlu0 %743
      %745 = vrot.lane.b32.xlu0 %v672, 1
      %v746 = vpop.permute.xlu0 %745
      %747 = vrot.lane.b32.xlu0 %v673, 1
      %v748 = vpop.permute.xlu0 %747
      %749 = vrot.lane.b32.xlu0 %v674, 1
      %v750 = vpop.permute.xlu0 %749
      %v751 = vsel %vm352, %v744, %v746
      %v752 = vsel %vm352, %v748, %v750
      %v756 = vsel %vm355, 0, %v744
      %v759 = vsel %vm355, 0, %v748
      %v761 = vsel %vm381, %v756, 0
      %v762 = vsel %vm382, %v751, 0
      %v763 = vsel %vm381, %v759, 0
      %v764 = vsel %vm382, %v752, 0
      %765 = vrot.lane.b32.xlu0 %v671, 127
      %v766 = vpop.permute.xlu0 %765
      %767 = vrot.lane.b32.xlu0 %v672, 127
      %v768 = vpop.permute.xlu0 %767
      %769 = vrot.lane.b32.xlu0 %v673, 127
      %v770 = vpop.permute.xlu0 %769
      %771 = vrot.lane.b32.xlu0 %v674, 127
      %v772 = vpop.permute.xlu0 %771
      %v773 = vsel %vm389, %v766, %v768
      %v774 = vsel %vm389, %v770, %v772
      %v778 = vsel %vm392, %v768, 0
      %v781 = vsel %vm392, %v772, 0
      %v783 = vsel %vm418, %v773, 0
      %v784 = vsel %vm419, %v778, 0
      %v785 = vsel %vm418, %v774, 0
      %v786 = vsel %vm419, %v781, 0
      %787 = vrot.lane.b32.xlu0 %v671, 112
      %v788 = vpop.permute.xlu0 %787
      %789 = vrot.lane.b32.xlu0 %v672, 112
      %v790 = vpop.permute.xlu0 %789
      %791 = vrot.lane.b32.xlu0 %v673, 112
      %v792 = vpop.permute.xlu0 %791
      %793 = vrot.lane.b32.xlu0 %v674, 112
      %v794 = vpop.permute.xlu0 %793
      %v795 = vsel %vm448, %v788, %v790
      %v796 = vsel %vm448, %v792, %v794
      %v800 = vsel %vm450, %v790, 0
      %v803 = vsel %vm450, %v794, 0
      %807 = vrot.lane.b32.xlu0 %v795, 1
      %v808 = vpop.permute.xlu0 %807
      %809 = vrot.lane.b32.xlu0 %v800, 1
      %v810 = vpop.permute.xlu0 %809
      %811 = vrot.lane.b32.xlu0 %v796, 1
      %v812 = vpop.permute.xlu0 %811
      %813 = vrot.lane.b32.xlu0 %v803, 1
      %v814 = vpop.permute.xlu0 %813
      %v815 = vsel %vm352, %v808, %v810
      %v816 = vsel %vm352, %v812, %v814
      %v820 = vsel %vm355, 0, %v808
      %v823 = vsel %vm355, 0, %v812
      %v825 = vsel %vm381, %v820, 0
      %v826 = vsel %vm382, %v815, 0
      %v827 = vsel %vm381, %v823, 0
      %v828 = vsel %vm382, %v816, 0
      %829 = vrot.lane.b32.xlu0 %v795, 127
      %v830 = vpop.permute.xlu0 %829
      %831 = vrot.lane.b32.xlu0 %v800, 127
      %v832 = vpop.permute.xlu0 %831
      %833 = vrot.lane.b32.xlu0 %v796, 127
      %v834 = vpop.permute.xlu0 %833
      %835 = vrot.lane.b32.xlu0 %v803, 127
      %v836 = vpop.permute.xlu0 %835
      %v837 = vsel %vm389, %v830, %v832
      %v838 = vsel %vm389, %v834, %v836
      %v842 = vsel %vm392, %v832, 0
      %v845 = vsel %vm392, %v836, 0
      %v847 = vsel %vm418, %v837, 0
      %v848 = vsel %vm419, %v842, 0
      %v849 = vsel %vm418, %v838, 0
      %v850 = vsel %vm419, %v845, 0
      %v851 = vld [vmem:[%s2] sm:$0xff]
      %v852 = vld [vmem:[%s2 + $0x8] sm:$0xf]
      %v853 = vld [vmem:[%s2 + $0xc] sm:$0xff]
      %v854 = vld [vmem:[%s2 + $0x14] sm:$0xf]
      %v855 = vld [vmem:[%s2 + $0x18] sm:$0xff]
      %v856 = vld [vmem:[%s2 + $0x20] sm:$0xf]
      %v857 = vld [vmem:[%s2 + $0x24] sm:$0xff]
      %v858 = vld [vmem:[%s2 + $0x2c] sm:$0xf]
      %v867 = vunpack.c.l.b16 %v851
      %v868 = vunpack.c.h.b16 %v851
      %v869 = vunpack.c.l.b16 %v852
      %v870 = vunpack.c.l.b16 %v853
      %v871 = vunpack.c.h.b16 %v853
      %v872 = vunpack.c.l.b16 %v854
      %v873 = vunpack.c.l.b16 %v855
      %v874 = vunpack.c.h.b16 %v855
      %v875 = vunpack.c.l.b16 %v856
      %v876 = vunpack.c.l.b16 %v857
      %v877 = vunpack.c.h.b16 %v857
      %v878 = vunpack.c.l.b16 %v858
      %v879 = vpack.c.b16 %v870, %v867
      %v880 = vpack.c.b16 %v871, %v868
      %v881 = vpack.c.b16 %v872, %v869
      %v882 = vpack.c.b16 %v876, %v873
      %v883 = vpack.c.b16 %v877, %v874
      %v884 = vpack.c.b16 %v878, %v875
      %vm889 = vcmask 261120
      %v891 = vsel %vm889, %v881, 0
      %v894 = vsel %vm889, %v884, 0
      %896 = vmatprep.subr.bf16.mxu0 %v718
      %897 = vmatpush1.bf16.msra.mxu0 %v717
      %898 = vmatprep.subr.bf16.mxu0 %v720
      %899 = vmatpush1.bf16.msra.mxu0 %v719
      %900 = vmatprep.subr.bf16.mxu0 %v687
      %901 = vmatpush1.bf16.msra.mxu0 %v692
      %902 = vmatprep.subr.bf16.mxu0 %v688
      %903 = vmatpush1.bf16.msra.mxu0 %v695
      %904 = vmatprep.subr.bf16.mxu0 %v740
      %905 = vmatpush1.bf16.msra.mxu0 %v739
      %906 = vmatprep.subr.bf16.mxu0 %v742
      %907 = vmatpush1.bf16.msra.mxu0 %v741
      %908 = vmatprep.subr.bf16.mxu0 %v762
      %909 = vmatpush1.bf16.msra.mxu0 %v761
      %910 = vmatprep.subr.bf16.mxu0 %v764
      %911 = vmatpush1.bf16.msra.mxu0 %v763
      %912 = vmatprep.subr.bf16.mxu0 %v672
      %913 = vmatpush1.bf16.msra.mxu0 %v671
      %914 = vmatprep.subr.bf16.mxu0 %v674
      %915 = vmatpush1.bf16.msra.mxu0 %v673
      %916 = vmatprep.subr.bf16.mxu0 %v784
      %917 = vmatpush1.bf16.msra.mxu0 %v783
      %918 = vmatprep.subr.bf16.mxu0 %v786
      %919 = vmatpush1.bf16.msra.mxu0 %v785
      %920 = vmatprep.subr.bf16.mxu0 %v826
      %921 = vmatpush1.bf16.msra.mxu0 %v825
      %922 = vmatprep.subr.bf16.mxu0 %v828
      %923 = vmatpush1.bf16.msra.mxu0 %v827
      %924 = vmatprep.subr.bf16.mxu0 %v800
      %925 = vmatpush1.bf16.msra.mxu0 %v795
      %926 = vmatprep.subr.bf16.mxu0 %v803
      %927 = vmatpush1.bf16.msra.mxu0 %v796
      %928 = vmatprep.mubr.bf16.mxu0 %v880
      %929 = vmatmul.mubr.bf16.gmra.mrb[0].mxu0 %v879
      %v930 = vpop.f32.mrb[0].mxu0
      %v931 = vadd.f32 0.0, %v930
      %v932 = vpop.f32.mrb[0].mxu0
      %v933 = vadd.f32 0.0, %v932
      %v934 = vpop.f32.mrb[0].mxu0
      %v935 = vadd.f32 0.0, %v934
      %v936 = vpop.f32.mrb[0].mxu0
      %v937 = vadd.f32 0.0, %v936
      %938 = vmatprep.mubr.bf16.mxu0 %v883
      %939 = vmatmul.mubr.bf16.gmra.mrb[0].mxu0 %v882
      %v940 = vpop.f32.mrb[0].mxu0
      %v941 = vadd.f32 0.0, %v940
      %v942 = vpop.f32.mrb[0].mxu0
      %v943 = vadd.f32 0.0, %v942
      %v944 = vpop.f32.mrb[0].mxu0
      %v945 = vadd.f32 0.0, %v944
      %v946 = vpop.f32.mrb[0].mxu0
      %v947 = vadd.f32 0.0, %v946
      %948 = vdwg.mxu0
      %949 = vmatprep.subr.bf16.mxu0 %v848
      %950 = vmatpush1.bf16.msra.mxu0 %v847
      %951 = vmatprep.subr.bf16.mxu0 %v850
      %952 = vmatpush1.bf16.msra.mxu0 %v849
      %953 = vmatprep.subr.bf16.mxu0 0
      %954 = vmatpush1.bf16.msra.mxu0 0
      %955 = vmatprep.subr.bf16.mxu0 0
      %956 = vmatpush1.bf16.msra.mxu0 0
      %957 = vmatprep.subr.bf16.mxu0 0
      %958 = vmatpush1.bf16.msra.mxu0 0
      %959 = vmatprep.subr.bf16.mxu0 0
      %960 = vmatpush1.bf16.msra.mxu0 0
      %961 = vmatprep.subr.bf16.mxu0 0
      %962 = vmatpush1.bf16.msra.mxu0 0
      %963 = vmatprep.subr.bf16.mxu0 0
      %964 = vmatpush1.bf16.msra.mxu0 0
      %965 = vmatprep.subr.bf16.mxu0 0
      %966 = vmatpush1.bf16.msra.mxu0 0
      %967 = vmatprep.subr.bf16.mxu0 0
      %968 = vmatpush1.bf16.msra.mxu0 0
      %969 = vmatprep.subr.bf16.mxu0 0
      %970 = vmatpush1.bf16.msra.mxu0 0
      %971 = vmatprep.subr.bf16.mxu0 0
      %972 = vmatpush1.bf16.msra.mxu0 0
      %973 = vmatprep.subr.bf16.mxu0 0
      %974 = vmatpush1.bf16.msra.mxu0 0
      %975 = vmatprep.subr.bf16.mxu0 0
      %976 = vmatpush1.bf16.msra.mxu0 0
      %977 = vmatprep.subr.bf16.mxu0 0
      %978 = vmatpush1.bf16.msra.mxu0 0
      %979 = vmatprep.subr.bf16.mxu0 0
      %980 = vmatpush1.bf16.msra.mxu0 0
      %981 = vmatprep.mubr.bf16.mxu0 0
      %982 = vmatmul.mubr.bf16.gmra.mrb[0].mxu0 %v891
      %v983 = vpop.f32.mrb[0].mxu0
      %v984 = vadd.f32 %v931, %v983
      %v985 = vpop.f32.mrb[0].mxu0
      %v986 = vadd.f32 %v933, %v985
      %v987 = vpop.f32.mrb[0].mxu0
      %v988 = vadd.f32 %v935, %v987
      %v989 = vpop.f32.mrb[0].mxu0
      %v990 = vadd.f32 %v937, %v989
      %991 = vmatprep.mubr.bf16.mxu0 0
      %992 = vmatmul.mubr.bf16.gmra.mrb[0].mxu0 %v894
      %v993 = vpop.f32.mrb[0].mxu0
      %v994 = vadd.f32 %v941, %v993
      %v995 = vpop.f32.mrb[0].mxu0
      %v996 = vadd.f32 %v943, %v995
      %v997 = vpop.f32.mrb[0].mxu0
      %v998 = vadd.f32 %v945, %v997
      %v999 = vpop.f32.mrb[0].mxu0
      %v1000 = vadd.f32 %v947, %v999
      %1001 = vdwg.mxu0
      %1003 = vset.pattern.permute.xlu0 0
      %1004 = vperm.xlu0 %1003, %v301
      %v1005 = vpop.permute.xlu0 %1004
      %1008 = vset.pattern.permute.xlu0 0
      %1009 = vperm.xlu0 %1008, %v302
      %v1010 = vpop.permute.xlu0 %1009
      %1013 = vset.pattern.permute.xlu0 0
      %1014 = vperm.xlu0 %1013, %v303
      %v1015 = vpop.permute.xlu0 %1014
      %1018 = vset.pattern.permute.xlu0 0
      %1019 = vperm.xlu0 %1018, %v304
      %v1020 = vpop.permute.xlu0 %1019
      %v1022 = vmul.f32 %v984, %v1005
      %v1023 = vmul.f32 %v986, %v1005
      %v1024 = vmul.f32 %v988, %v1010
      %v1025 = vmul.f32 %v990, %v1010
      %v1026 = vmul.f32 %v994, %v1015
      %v1027 = vmul.f32 %v996, %v1015
      %v1028 = vmul.f32 %v998, %v1020
      %v1029 = vmul.f32 %v1000, %v1020
      %1030 = vset.pattern.permute.xlu0 1
      %1031 = vperm.xlu0 %1030, %v301
      %v1032 = vpop.permute.xlu0 %1031
      %1034 = vset.pattern.permute.xlu0 1
      %1035 = vperm.xlu0 %1034, %v302
      %v1036 = vpop.permute.xlu0 %1035
      %1038 = vset.pattern.permute.xlu0 1
      %1039 = vperm.xlu0 %1038, %v303
      %v1040 = vpop.permute.xlu0 %1039
      %1042 = vset.pattern.permute.xlu0 1
      %1043 = vperm.xlu0 %1042, %v304
      %v1044 = vpop.permute.xlu0 %1043
      %v1046 = vadd.f32 %v1022, %v1032
      %v1047 = vadd.f32 %v1023, %v1032
      %v1048 = vadd.f32 %v1024, %v1036
      %v1049 = vadd.f32 %v1025, %v1036
      %v1050 = vadd.f32 %v1026, %v1040
      %v1051 = vadd.f32 %v1027, %v1040
      %v1052 = vadd.f32 %v1028, %v1044
      %v1053 = vadd.f32 %v1029, %v1044
      %vm1054 = vcmp.ge.f32.partialorder %v1046, 0.0
      %vm1055 = vcmp.ge.f32.partialorder %v1047, 0.0
      %vm1056 = vcmp.ge.f32.partialorder %v1048, 0.0
      %vm1057 = vcmp.ge.f32.partialorder %v1049, 0.0
      %vm1058 = vcmp.ge.f32.partialorder %v1050, 0.0
      %vm1059 = vcmp.ge.f32.partialorder %v1051, 0.0
      %vm1060 = vcmp.ge.f32.partialorder %v1052, 0.0
      %vm1061 = vcmp.ge.f32.partialorder %v1053, 0.0
      %v1062 = vmul.f32 %v1046, 0.2
      %v1063 = vmul.f32 %v1047, 0.2
      %v1064 = vmul.f32 %v1048, 0.2
      %v1065 = vmul.f32 %v1049, 0.2
      %v1066 = vmul.f32 %v1050, 0.2
      %v1067 = vmul.f32 %v1051, 0.2
      %v1068 = vmul.f32 %v1052, 0.2
      %v1069 = vmul.f32 %v1053, 0.2
      %v1070 = vsel %vm1054, %v1046, %v1062
      %v1071 = vsel %vm1055, %v1047, %v1063
      %v1072 = vsel %vm1056, %v1048, %v1064
      %v1073 = vsel %vm1057, %v1049, %v1065
      %v1074 = vsel %vm1058, %v1050, %v1066
      %v1075 = vsel %vm1059, %v1051, %v1067
      %v1076 = vsel %vm1060, %v1052, %v1068
      %v1077 = vsel %vm1061, %v1053, %v1069
      %v1078 = vpack.c.bf16 %v1072, %v1070
      %v1079 = vpack.c.bf16 %v1073, %v1071
      %v1080 = vpack.c.bf16 %v1076, %v1074
      %v1081 = vpack.c.bf16 %v1077, %v1075
      %1082 = vst [vmem:[#allocation2] sm:$0xff] %v1078
      %1083 = vst [vmem:[#allocation2 + $0x8] sm:$0xff] %v1079
      %1084 = vst [vmem:[#allocation2 + $0x10] sm:$0xff] %v1080
      %1085 = vst [vmem:[#allocation2 + $0x18] sm:$0xff] %v1081
      %v1086 = vld [vmem:[#allocation2] sm:$0xff]
      %v1087 = vld [vmem:[#allocation2 + $0x8] sm:$0xff]
      %v1088 = vld [vmem:[#allocation2 + $0x10] sm:$0xff]
      %v1089 = vld [vmem:[#allocation2 + $0x18] sm:$0xff]
      %1094 = vrot.lane.b32.xlu0 %v1086, 32
      %v1095 = vpop.permute.xlu0 %1094
      %1096 = vrot.lane.b32.xlu0 %v1087, 32
      %v1097 = vpop.permute.xlu0 %1096
      %1098 = vrot.lane.b32.xlu0 %v1088, 32
      %v1099 = vpop.permute.xlu0 %1098
      %1100 = vrot.lane.b32.xlu0 %v1089, 32
      %v1101 = vpop.permute.xlu0 %1100
      %vm1102 = vcmask 261120
      %v1103 = vsel %vm1102, %v1095, %v1097
      %v1104 = vsel %vm1102, %v1099, %v1101
      %v1108 = vsel %vm889, 0, %v1095
      %v1111 = vsel %vm889, 0, %v1099
      %1115 = vrot.lane.b32.xlu0 %v1108, 2
      %v1116 = vpop.permute.xlu0 %1115
      %1117 = vrot.lane.b32.xlu0 %v1103, 2
      %v1118 = vpop.permute.xlu0 %1117
      %1119 = vrot.lane.b32.xlu0 %v1111, 2
      %v1120 = vpop.permute.xlu0 %1119
      %1121 = vrot.lane.b32.xlu0 %v1104, 2
      %v1122 = vpop.permute.xlu0 %1121
      %vm1123 = vcmask 15360
      %v1124 = vsel %vm1123, %v1116, %v1118
      %v1125 = vsel %vm1123, %v1120, %v1122
      %vm1128 = vcmask 15360
      %v1130 = vsel %vm1128, 0, %v1116
      %v1133 = vsel %vm1128, 0, %v1120
      %vm1135 = vcmp.ge.s32.totalorder %v326, 2
      %v1136 = vsel %vm1135, 1, 0
      %v1137 = vlaneseq
      %v1138 = vshrl.u32 %v1137, 7
      %v1139 = vsub.s32 0, %v1138
      %v1140 = vrot.slane %v1136, %v1139
      %v1141 = vlaneseq
      %v1142 = vshrl.u32 %v1141, 7
      %v1143 = vsub.s32 1, %v1142
      %v1144 = vrot.slane %v1136, %v1143
      %vm1145 = vcmp.eq.s32.totalorder %v1140, 1
      %vm1146 = vcmp.eq.s32.totalorder %v1144, 1
      %vm1147 = vmpackc.low %vm1146, %vm1145
      %v1148 = vsel %vm1147, 65537, 0
      %v1149 = vlaneseq
      %v1150 = vshrl.u32 %v1149, 7
      %v1151 = vsub.s32 0, %v1150
      %v1152 = vrot.slane %v1148, %v1151
      %v1153 = vlaneseq
      %v1154 = vshrl.u32 %v1153, 7
      %v1155 = vsub.s32 4, %v1154
      %v1156 = vrot.slane %v1148, %v1155
      %vm1157 = vcmp.ne.s16.totalorder %v1152, 0
      %vm1158 = vcmp.ne.s16.totalorder %v1156, 0
      %v1159 = vsel %vm1157, %v1130, 0
      %v1160 = vsel %vm1158, %v1124, 0
      %v1161 = vsel %vm1157, %v1133, 0
      %v1162 = vsel %vm1158, %v1125, 0
      %1163 = vrot.lane.b32.xlu0 %v1108, 126
      %v1164 = vpop.permute.xlu0 %1163
      %1165 = vrot.lane.b32.xlu0 %v1103, 126
      %v1166 = vpop.permute.xlu0 %1165
      %1167 = vrot.lane.b32.xlu0 %v1111, 126
      %v1168 = vpop.permute.xlu0 %1167
      %1169 = vrot.lane.b32.xlu0 %v1104, 126
      %v1170 = vpop.permute.xlu0 %1169
      %vm1171 = vcmask 1031168
      %v1172 = vsel %vm1171, %v1164, %v1166
      %v1173 = vsel %vm1171, %v1168, %v1170
      %vm1176 = vcmask 1031168
      %v1178 = vsel %vm1176, %v1166, 0
      %v1181 = vsel %vm1176, %v1170, 0
      %vm1183 = vcmp.lt.s32.totalorder %v326, 14
      %v1184 = vsel %vm1183, 1, 0
      %v1185 = vlaneseq
      %v1186 = vshrl.u32 %v1185, 7
      %v1187 = vsub.s32 0, %v1186
      %v1188 = vrot.slane %v1184, %v1187
      %v1189 = vlaneseq
      %v1190 = vshrl.u32 %v1189, 7
      %v1191 = vsub.s32 1, %v1190
      %v1192 = vrot.slane %v1184, %v1191
      %vm1193 = vcmp.eq.s32.totalorder %v1188, 1
      %vm1194 = vcmp.eq.s32.totalorder %v1192, 1
      %vm1195 = vmpackc.low %vm1194, %vm1193
      %v1196 = vsel %vm1195, 65537, 0
      %v1197 = vlaneseq
      %v1198 = vshrl.u32 %v1197, 7
      %v1199 = vsub.s32 0, %v1198
      %v1200 = vrot.slane %v1196, %v1199
      %v1201 = vlaneseq
      %v1202 = vshrl.u32 %v1201, 7
      %v1203 = vsub.s32 4, %v1202
      %v1204 = vrot.slane %v1196, %v1203
      %vm1205 = vcmp.ne.s16.totalorder %v1200, 0
      %vm1206 = vcmp.ne.s16.totalorder %v1204, 0
      %v1207 = vsel %vm1205, %v1172, 0
      %v1208 = vsel %vm1206, %v1178, 0
      %v1209 = vsel %vm1205, %v1173, 0
      %v1210 = vsel %vm1206, %v1181, 0
      %1211 = vrot.lane.b32.xlu0 %v1086, 2
      %v1212 = vpop.permute.xlu0 %1211
      %1213 = vrot.lane.b32.xlu0 %v1087, 2
      %v1214 = vpop.permute.xlu0 %1213
      %1215 = vrot.lane.b32.xlu0 %v1088, 2
      %v1216 = vpop.permute.xlu0 %1215
      %1217 = vrot.lane.b32.xlu0 %v1089, 2
      %v1218 = vpop.permute.xlu0 %1217
      %v1219 = vsel %vm1123, %v1212, %v1214
      %v1220 = vsel %vm1123, %v1216, %v1218
      %v1224 = vsel %vm1128, 0, %v1212
      %v1227 = vsel %vm1128, 0, %v1216
      %v1229 = vsel %vm1157, %v1224, 0
      %v1230 = vsel %vm1158, %v1219, 0
      %v1231 = vsel %vm1157, %v1227, 0
      %v1232 = vsel %vm1158, %v1220, 0
      %1233 = vrot.lane.b32.xlu0 %v1086, 126
      %v1234 = vpop.permute.xlu0 %1233
      %1235 = vrot.lane.b32.xlu0 %v1087, 126
      %v1236 = vpop.permute.xlu0 %1235
      %1237 = vrot.lane.b32.xlu0 %v1088, 126
      %v1238 = vpop.permute.xlu0 %1237
      %1239 = vrot.lane.b32.xlu0 %v1089, 126
      %v1240 = vpop.permute.xlu0 %1239
      %v1241 = vsel %vm1171, %v1234, %v1236
      %v1242 = vsel %vm1171, %v1238, %v1240
      %v1246 = vsel %vm1176, %v1236, 0
      %v1249 = vsel %vm1176, %v1240, 0
      %v1251 = vsel %vm1205, %v1241, 0
      %v1252 = vsel %vm1206, %v1246, 0
      %v1253 = vsel %vm1205, %v1242, 0
      %v1254 = vsel %vm1206, %v1249, 0
      %1255 = vrot.lane.b32.xlu0 %v1086, 96
      %v1256 = vpop.permute.xlu0 %1255
      %1257 = vrot.lane.b32.xlu0 %v1087, 96
      %v1258 = vpop.permute.xlu0 %1257
      %1259 = vrot.lane.b32.xlu0 %v1088, 96
      %v1260 = vpop.permute.xlu0 %1259
      %1261 = vrot.lane.b32.xlu0 %v1089, 96
      %v1262 = vpop.permute.xlu0 %1261
      %vm1263 = vcmask 785408
      %v1264 = vsel %vm1263, %v1256, %v1258
      %v1265 = vsel %vm1263, %v1260, %v1262
      %vm1268 = vcmask 785408
      %v1270 = vsel %vm1268, %v1258, 0
      %v1273 = vsel %vm1268, %v1262, 0
      %1277 = vrot.lane.b32.xlu0 %v1264, 2
      %v1278 = vpop.permute.xlu0 %1277
      %1279 = vrot.lane.b32.xlu0 %v1270, 2
      %v1280 = vpop.permute.xlu0 %1279
      %1281 = vrot.lane.b32.xlu0 %v1265, 2
      %v1282 = vpop.permute.xlu0 %1281
      %1283 = vrot.lane.b32.xlu0 %v1273, 2
      %v1284 = vpop.permute.xlu0 %1283
      %v1285 = vsel %vm1123, %v1278, %v1280
      %v1286 = vsel %vm1123, %v1282, %v1284
      %v1290 = vsel %vm1128, 0, %v1278
      %v1293 = vsel %vm1128, 0, %v1282
      %v1295 = vsel %vm1157, %v1290, 0
      %v1296 = vsel %vm1158, %v1285, 0
      %v1297 = vsel %vm1157, %v1293, 0
      %v1298 = vsel %vm1158, %v1286, 0
      %1299 = vrot.lane.b32.xlu0 %v1264, 126
      %v1300 = vpop.permute.xlu0 %1299
      %1301 = vrot.lane.b32.xlu0 %v1270, 126
      %v1302 = vpop.permute.xlu0 %1301
      %1303 = vrot.lane.b32.xlu0 %v1265, 126
      %v1304 = vpop.permute.xlu0 %1303
      %1305 = vrot.lane.b32.xlu0 %v1273, 126
      %v1306 = vpop.permute.xlu0 %1305
      %v1307 = vsel %vm1171, %v1300, %v1302
      %v1308 = vsel %vm1171, %v1304, %v1306
      %v1312 = vsel %vm1176, %v1302, 0
      %v1315 = vsel %vm1176, %v1306, 0
      %v1317 = vsel %vm1205, %v1307, 0
      %v1318 = vsel %vm1206, %v1312, 0
      %v1319 = vsel %vm1205, %v1308, 0
      %v1320 = vsel %vm1206, %v1315, 0
      %s1321 = scalar_lea.vmem %s2, 48
      %v1322 = vld [vmem:[%s1321] sm:$0xff]
      %v1323 = vld [vmem:[%s1321 + $0x8] sm:$0xf]
      %v1324 = vld [vmem:[%s1321 + $0xc] sm:$0xff]
      %v1325 = vld [vmem:[%s1321 + $0x14] sm:$0xf]
      %v1326 = vld [vmem:[%s1321 + $0x18] sm:$0xff]
      %v1327 = vld [vmem:[%s1321 + $0x20] sm:$0xf]
      %v1328 = vld [vmem:[%s1321 + $0x24] sm:$0xff]
      %v1329 = vld [vmem:[%s1321 + $0x2c] sm:$0xf]
      %v1338 = vunpack.c.l.b16 %v1322
      %v1339 = vunpack.c.h.b16 %v1322
      %v1340 = vunpack.c.l.b16 %v1323
      %v1341 = vunpack.c.l.b16 %v1324
      %v1342 = vunpack.c.h.b16 %v1324
      %v1343 = vunpack.c.l.b16 %v1325
      %v1344 = vunpack.c.l.b16 %v1326
      %v1345 = vunpack.c.h.b16 %v1326
      %v1346 = vunpack.c.l.b16 %v1327
      %v1347 = vunpack.c.l.b16 %v1328
      %v1348 = vunpack.c.h.b16 %v1328
      %v1349 = vunpack.c.l.b16 %v1329
      %v1350 = vpack.c.b16 %v1341, %v1338
      %v1351 = vpack.c.b16 %v1342, %v1339
      %v1352 = vpack.c.b16 %v1343, %v1340
      %v1353 = vpack.c.b16 %v1347, %v1344
      %v1354 = vpack.c.b16 %v1348, %v1345
      %v1355 = vpack.c.b16 %v1349, %v1346
      %v1361 = vsel %vm889, %v1352, 0
      %v1364 = vsel %vm889, %v1355, 0
      %1366 = vmatprep.subr.bf16.mxu0 %v1160
      %1367 = vmatpush1.bf16.msra.mxu0 %v1159
      %1368 = vmatprep.subr.bf16.mxu0 %v1162
      %1369 = vmatpush1.bf16.msra.mxu0 %v1161
      %1370 = vmatprep.subr.bf16.mxu0 %v1103
      %1371 = vmatpush1.bf16.msra.mxu0 %v1108
      %1372 = vmatprep.subr.bf16.mxu0 %v1104
      %1373 = vmatpush1.bf16.msra.mxu0 %v1111
      %1374 = vmatprep.subr.bf16.mxu0 %v1208
      %1375 = vmatpush1.bf16.msra.mxu0 %v1207
      %1376 = vmatprep.subr.bf16.mxu0 %v1210
      %1377 = vmatpush1.bf16.msra.mxu0 %v1209
      %1378 = vmatprep.subr.bf16.mxu0 %v1230
      %1379 = vmatpush1.bf16.msra.mxu0 %v1229
      %1380 = vmatprep.subr.bf16.mxu0 %v1232
      %1381 = vmatpush1.bf16.msra.mxu0 %v1231
      %1382 = vmatprep.subr.bf16.mxu0 %v1087
      %1383 = vmatpush1.bf16.msra.mxu0 %v1086
      %1384 = vmatprep.subr.bf16.mxu0 %v1089
      %1385 = vmatpush1.bf16.msra.mxu0 %v1088
      %1386 = vmatprep.subr.bf16.mxu0 %v1252
      %1387 = vmatpush1.bf16.msra.mxu0 %v1251
      %1388 = vmatprep.subr.bf16.mxu0 %v1254
      %1389 = vmatpush1.bf16.msra.mxu0 %v1253
      %1390 = vmatprep.subr.bf16.mxu0 %v1296
      %1391 = vmatpush1.bf16.msra.mxu0 %v1295
      %1392 = vmatprep.subr.bf16.mxu0 %v1298
      %1393 = vmatpush1.bf16.msra.mxu0 %v1297
      %1394 = vmatprep.subr.bf16.mxu0 %v1270
      %1395 = vmatpush1.bf16.msra.mxu0 %v1264
      %1396 = vmatprep.subr.bf16.mxu0 %v1273
      %1397 = vmatpush1.bf16.msra.mxu0 %v1265
      %1398 = vmatprep.mubr.bf16.mxu0 %v1351
      %1399 = vmatmul.mubr.bf16.gmra.mrb[0].mxu0 %v1350
      %v1400 = vpop.f32.mrb[0].mxu0
      %v1401 = vadd.f32 0.0, %v1400
      %v1402 = vpop.f32.mrb[0].mxu0
      %v1403 = vadd.f32 0.0, %v1402
      %v1404 = vpop.f32.mrb[0].mxu0
      %v1405 = vadd.f32 0.0, %v1404
      %v1406 = vpop.f32.mrb[0].mxu0
      %v1407 = vadd.f32 0.0, %v1406
      %1408 = vmatprep.mubr.bf16.mxu0 %v1354
      %1409 = vmatmul.mubr.bf16.gmra.mrb[0].mxu0 %v1353
      %v1410 = vpop.f32.mrb[0].mxu0
      %v1411 = vadd.f32 0.0, %v1410
      %v1412 = vpop.f32.mrb[0].mxu0
      %v1413 = vadd.f32 0.0, %v1412
      %v1414 = vpop.f32.mrb[0].mxu0
      %v1415 = vadd.f32 0.0, %v1414
      %v1416 = vpop.f32.mrb[0].mxu0
      %v1417 = vadd.f32 0.0, %v1416
      %1418 = vdwg.mxu0
      %1419 = vmatprep.subr.bf16.mxu0 %v1318
      %1420 = vmatpush1.bf16.msra.mxu0 %v1317
      %1421 = vmatprep.subr.bf16.mxu0 %v1320
      %1422 = vmatpush1.bf16.msra.mxu0 %v1319
      %1423 = vmatprep.subr.bf16.mxu0 0
      %1424 = vmatpush1.bf16.msra.mxu0 0
      %1425 = vmatprep.subr.bf16.mxu0 0
      %1426 = vmatpush1.bf16.msra.mxu0 0
      %1427 = vmatprep.subr.bf16.mxu0 0
      %1428 = vmatpush1.bf16.msra.mxu0 0
      %1429 = vmatprep.subr.bf16.mxu0 0
      %1430 = vmatpush1.bf16.msra.mxu0 0
      %1431 = vmatprep.subr.bf16.mxu0 0
      %1432 = vmatpush1.bf16.msra.mxu0 0
      %1433 = vmatprep.subr.bf16.mxu0 0
      %1434 = vmatpush1.bf16.msra.mxu0 0
      %1435 = vmatprep.subr.bf16.mxu0 0
      %1436 = vmatpush1.bf16.msra.mxu0 0
      %1437 = vmatprep.subr.bf16.mxu0 0
      %1438 = vmatpush1.bf16.msra.mxu0 0
      %1439 = vmatprep.subr.bf16.mxu0 0
      %1440 = vmatpush1.bf16.msra.mxu0 0
      %1441 = vmatprep.subr.bf16.mxu0 0
      %1442 = vmatpush1.bf16.msra.mxu0 0
      %1443 = vmatprep.subr.bf16.mxu0 0
      %1444 = vmatpush1.bf16.msra.mxu0 0
      %1445 = vmatprep.subr.bf16.mxu0 0
      %1446 = vmatpush1.bf16.msra.mxu0 0
      %1447 = vmatprep.subr.bf16.mxu0 0
      %1448 = vmatpush1.bf16.msra.mxu0 0
      %1449 = vmatprep.subr.bf16.mxu0 0
      %1450 = vmatpush1.bf16.msra.mxu0 0
      %1451 = vmatprep.mubr.bf16.mxu0 0
      %1452 = vmatmul.mubr.bf16.gmra.mrb[0].mxu0 %v1361
      %v1453 = vpop.f32.mrb[0].mxu0
      %v1454 = vadd.f32 %v1401, %v1453
      %v1455 = vpop.f32.mrb[0].mxu0
      %v1456 = vadd.f32 %v1403, %v1455
      %v1457 = vpop.f32.mrb[0].mxu0
      %v1458 = vadd.f32 %v1405, %v1457
      %v1459 = vpop.f32.mrb[0].mxu0
      %v1460 = vadd.f32 %v1407, %v1459
      %1461 = vmatprep.mubr.bf16.mxu0 0
      %1462 = vmatmul.mubr.bf16.gmra.mrb[0].mxu0 %v1364
      %v1463 = vpop.f32.mrb[0].mxu0
      %v1464 = vadd.f32 %v1411, %v1463
      %v1465 = vpop.f32.mrb[0].mxu0
      %v1466 = vadd.f32 %v1413, %v1465
      %v1467 = vpop.f32.mrb[0].mxu0
      %v1468 = vadd.f32 %v1415, %v1467
      %v1469 = vpop.f32.mrb[0].mxu0
      %v1470 = vadd.f32 %v1417, %v1469
      %1471 = vdwg.mxu0
      %1473 = vset.pattern.permute.xlu0 0
      %1474 = vperm.xlu0 %1473, %v305
      %v1475 = vpop.permute.xlu0 %1474
      %1478 = vset.pattern.permute.xlu0 0
      %1479 = vperm.xlu0 %1478, %v306
      %v1480 = vpop.permute.xlu0 %1479
      %1483 = vset.pattern.permute.xlu0 0
      %1484 = vperm.xlu0 %1483, %v307
      %v1485 = vpop.permute.xlu0 %1484
      %1488 = vset.pattern.permute.xlu0 0
      %1489 = vperm.xlu0 %1488, %v308
      %v1490 = vpop.permute.xlu0 %1489
      %v1492 = vmul.f32 %v1454, %v1475
      %v1493 = vmul.f32 %v1456, %v1475
      %v1494 = vmul.f32 %v1458, %v1480
      %v1495 = vmul.f32 %v1460, %v1480
      %v1496 = vmul.f32 %v1464, %v1485
      %v1497 = vmul.f32 %v1466, %v1485
      %v1498 = vmul.f32 %v1468, %v1490
      %v1499 = vmul.f32 %v1470, %v1490
      %1500 = vset.pattern.permute.xlu0 1
      %1501 = vperm.xlu0 %1500, %v305
      %v1502 = vpop.permute.xlu0 %1501
      %1504 = vset.pattern.permute.xlu0 1
      %1505 = vperm.xlu0 %1504, %v306
      %v1506 = vpop.permute.xlu0 %1505
      %1508 = vset.pattern.permute.xlu0 1
      %1509 = vperm.xlu0 %1508, %v307
      %v1510 = vpop.permute.xlu0 %1509
      %1512 = vset.pattern.permute.xlu0 1
      %1513 = vperm.xlu0 %1512, %v308
      %v1514 = vpop.permute.xlu0 %1513
      %v1516 = vadd.f32 %v1492, %v1502
      %v1517 = vadd.f32 %v1493, %v1502
      %v1518 = vadd.f32 %v1494, %v1506
      %v1519 = vadd.f32 %v1495, %v1506
      %v1520 = vadd.f32 %v1496, %v1510
      %v1521 = vadd.f32 %v1497, %v1510
      %v1522 = vadd.f32 %v1498, %v1514
      %v1523 = vadd.f32 %v1499, %v1514
      %vm1524 = vcmp.ge.f32.partialorder %v1516, 0.0
      %vm1525 = vcmp.ge.f32.partialorder %v1517, 0.0
      %vm1526 = vcmp.ge.f32.partialorder %v1518, 0.0
      %vm1527 = vcmp.ge.f32.partialorder %v1519, 0.0
      %vm1528 = vcmp.ge.f32.partialorder %v1520, 0.0
      %vm1529 = vcmp.ge.f32.partialorder %v1521, 0.0
      %vm1530 = vcmp.ge.f32.partialorder %v1522, 0.0
      %vm1531 = vcmp.ge.f32.partialorder %v1523, 0.0
      %v1532 = vmul.f32 %v1516, 0.2
      %v1533 = vmul.f32 %v1517, 0.2
      %v1534 = vmul.f32 %v1518, 0.2
      %v1535 = vmul.f32 %v1519, 0.2
      %v1536 = vmul.f32 %v1520, 0.2
      %v1537 = vmul.f32 %v1521, 0.2
      %v1538 = vmul.f32 %v1522, 0.2
      %v1539 = vmul.f32 %v1523, 0.2
      %v1540 = vsel %vm1524, %v1516, %v1532
      %v1541 = vsel %vm1525, %v1517, %v1533
      %v1542 = vsel %vm1526, %v1518, %v1534
      %v1543 = vsel %vm1527, %v1519, %v1535
      %v1544 = vsel %vm1528, %v1520, %v1536
      %v1545 = vsel %vm1529, %v1521, %v1537
      %v1546 = vsel %vm1530, %v1522, %v1538
      %v1547 = vsel %vm1531, %v1523, %v1539
      %v1548 = vpack.c.bf16 %v1542, %v1540
      %v1549 = vpack.c.bf16 %v1543, %v1541
      %v1550 = vpack.c.bf16 %v1546, %v1544
      %v1551 = vpack.c.bf16 %v1547, %v1545
      %1552 = vst [vmem:[#allocation2] sm:$0xff] %v1548
      %1553 = vst [vmem:[#allocation2 + $0x8] sm:$0xff] %v1549
      %1554 = vst [vmem:[#allocation2 + $0x10] sm:$0xff] %v1550
      %1555 = vst [vmem:[#allocation2 + $0x18] sm:$0xff] %v1551
      %v1556 = vld [vmem:[#allocation2] sm:$0xff]
      %v1557 = vld [vmem:[#allocation2 + $0x8] sm:$0xff]
      %v1558 = vld [vmem:[#allocation2 + $0x10] sm:$0xff]
      %v1559 = vld [vmem:[#allocation2 + $0x18] sm:$0xff]
      %1564 = vrot.lane.b32.xlu0 %v1556, 64
      %v1565 = vpop.permute.xlu0 %1564
      %1566 = vrot.lane.b32.xlu0 %v1557, 64
      %v1567 = vpop.permute.xlu0 %1566
      %1568 = vrot.lane.b32.xlu0 %v1558, 64
      %v1569 = vpop.permute.xlu0 %1568
      %1570 = vrot.lane.b32.xlu0 %v1559, 64
      %v1571 = vpop.permute.xlu0 %1570
      %vm1572 = vcmask 523264
      %v1573 = vsel %vm1572, %v1565, %v1567
      %v1574 = vsel %vm1572, %v1569, %v1571
      %vm1577 = vcmask 523264
      %v1579 = vsel %vm1577, 0, %v1565
      %v1582 = vsel %vm1577, 0, %v1569
      %1586 = vrot.lane.b32.xlu0 %v1579, 4
      %v1587 = vpop.permute.xlu0 %1586
      %1588 = vrot.lane.b32.xlu0 %v1573, 4
      %v1589 = vpop.permute.xlu0 %1588
      %1590 = vrot.lane.b32.xlu0 %v1582, 4
      %v1591 = vpop.permute.xlu0 %1590
      %1592 = vrot.lane.b32.xlu0 %v1574, 4
      %v1593 = vpop.permute.xlu0 %1592
      %vm1594 = vcmask 31744
      %v1595 = vsel %vm1594, %v1587, %v1589
      %v1596 = vsel %vm1594, %v1591, %v1593
      %vm1599 = vcmask 31744
      %v1601 = vsel %vm1599, 0, %v1587
      %v1604 = vsel %vm1599, 0, %v1591
      %vm1606 = vcmp.ge.s32.totalorder %v326, 4
      %v1607 = vsel %vm1606, 1, 0
      %v1608 = vlaneseq
      %v1609 = vshrl.u32 %v1608, 7
      %v1610 = vsub.s32 0, %v1609
      %v1611 = vrot.slane %v1607, %v1610
      %v1612 = vlaneseq
      %v1613 = vshrl.u32 %v1612, 7
      %v1614 = vsub.s32 1, %v1613
      %v1615 = vrot.slane %v1607, %v1614
      %vm1616 = vcmp.eq.s32.totalorder %v1611, 1
      %vm1617 = vcmp.eq.s32.totalorder %v1615, 1
      %vm1618 = vmpackc.low %vm1617, %vm1616
      %v1619 = vsel %vm1618, 65537, 0
      %v1620 = vlaneseq
      %v1621 = vshrl.u32 %v1620, 7
      %v1622 = vsub.s32 0, %v1621
      %v1623 = vrot.slane %v1619, %v1622
      %v1624 = vlaneseq
      %v1625 = vshrl.u32 %v1624, 7
      %v1626 = vsub.s32 4, %v1625
      %v1627 = vrot.slane %v1619, %v1626
      %vm1628 = vcmp.ne.s16.totalorder %v1623, 0
      %vm1629 = vcmp.ne.s16.totalorder %v1627, 0
      %v1630 = vsel %vm1628, %v1601, 0
      %v1631 = vsel %vm1629, %v1595, 0
      %v1632 = vsel %vm1628, %v1604, 0
      %v1633 = vsel %vm1629, %v1596, 0
      %1634 = vrot.lane.b32.xlu0 %v1579, 124
      %v1635 = vpop.permute.xlu0 %1634
      %1636 = vrot.lane.b32.xlu0 %v1573, 124
      %v1637 = vpop.permute.xlu0 %1636
      %1638 = vrot.lane.b32.xlu0 %v1582, 124
      %v1639 = vpop.permute.xlu0 %1638
      %1640 = vrot.lane.b32.xlu0 %v1574, 124
      %v1641 = vpop.permute.xlu0 %1640
      %vm1642 = vcmask 1014784
      %v1643 = vsel %vm1642, %v1635, %v1637
      %v1644 = vsel %vm1642, %v1639, %v1641
      %vm1647 = vcmask 1014784
      %v1649 = vsel %vm1647, %v1637, 0
      %v1652 = vsel %vm1647, %v1641, 0
      %vm1654 = vcmp.lt.s32.totalorder %v326, 12
      %v1655 = vsel %vm1654, 1, 0
      %v1656 = vlaneseq
      %v1657 = vshrl.u32 %v1656, 7
      %v1658 = vsub.s32 0, %v1657
      %v1659 = vrot.slane %v1655, %v1658
      %v1660 = vlaneseq
      %v1661 = vshrl.u32 %v1660, 7
      %v1662 = vsub.s32 1, %v1661
      %v1663 = vrot.slane %v1655, %v1662
      %vm1664 = vcmp.eq.s32.totalorder %v1659, 1
      %vm1665 = vcmp.eq.s32.totalorder %v1663, 1
      %vm1666 = vmpackc.low %vm1665, %vm1664
      %v1667 = vsel %vm1666, 65537, 0
      %v1668 = vlaneseq
      %v1669 = vshrl.u32 %v1668, 7
      %v1670 = vsub.s32 0, %v1669
      %v1671 = vrot.slane %v1667, %v1670
      %v1672 = vlaneseq
      %v1673 = vshrl.u32 %v1672, 7
      %v1674 = vsub.s32 4, %v1673
      %v1675 = vrot.slane %v1667, %v1674
      %vm1676 = vcmp.ne.s16.totalorder %v1671, 0
      %vm1677 = vcmp.ne.s16.totalorder %v1675, 0
      %v1678 = vsel %vm1676, %v1643, 0
      %v1679 = vsel %vm1677, %v1649, 0
      %v1680 = vsel %vm1676, %v1644, 0
      %v1681 = vsel %vm1677, %v1652, 0
      %1682 = vrot.lane.b32.xlu0 %v1556, 4
      %v1683 = vpop.permute.xlu0 %1682
      %1684 = vrot.lane.b32.xlu0 %v1557, 4
      %v1685 = vpop.permute.xlu0 %1684
      %1686 = vrot.lane.b32.xlu0 %v1558, 4
      %v1687 = vpop.permute.xlu0 %1686
      %1688 = vrot.lane.b32.xlu0 %v1559, 4
      %v1689 = vpop.permute.xlu0 %1688
      %v1690 = vsel %vm1594, %v1683, %v1685
      %v1691 = vsel %vm1594, %v1687, %v1689
      %v1695 = vsel %vm1599, 0, %v1683
      %v1698 = vsel %vm1599, 0, %v1687
      %v1700 = vsel %vm1628, %v1695, 0
      %v1701 = vsel %vm1629, %v1690, 0
      %v1702 = vsel %vm1628, %v1698, 0
      %v1703 = vsel %vm1629, %v1691, 0
      %1704 = vrot.lane.b32.xlu0 %v1556, 124
      %v1705 = vpop.permute.xlu0 %1704
      %1706 = vrot.lane.b32.xlu0 %v1557, 124
      %v1707 = vpop.permute.xlu0 %1706
      %1708 = vrot.lane.b32.xlu0 %v1558, 124
      %v1709 = vpop.permute.xlu0 %1708
      %1710 = vrot.lane.b32.xlu0 %v1559, 124
      %v1711 = vpop.permute.xlu0 %1710
      %v1712 = vsel %vm1642, %v1705, %v1707
      %v1713 = vsel %vm1642, %v1709, %v1711
      %v1717 = vsel %vm1647, %v1707, 0
      %v1720 = vsel %vm1647, %v1711, 0
      %v1722 = vsel %vm1676, %v1712, 0
      %v1723 = vsel %vm1677, %v1717, 0
      %v1724 = vsel %vm1676, %v1713, 0
      %v1725 = vsel %vm1677, %v1720, 0
      %v1727 = vsel %vm1577, %v1567, 0
      %v1730 = vsel %vm1577, %v1571, 0
      %1734 = vrot.lane.b32.xlu0 %v1727, 4
      %v1735 = vpop.permute.xlu0 %1734
      %1736 = vrot.lane.b32.xlu0 %v1730, 4
      %v1737 = vpop.permute.xlu0 %1736
      %v1738 = vsel %vm1594, %v1589, %v1735
      %v1739 = vsel %vm1594, %v1593, %v1737
      %v1743 = vsel %vm1599, 0, %v1589
      %v1746 = vsel %vm1599, 0, %v1593
      %v1748 = vsel %vm1628, %v1743, 0
      %v1749 = vsel %vm1629, %v1738, 0
      %v1750 = vsel %vm1628, %v1746, 0
      %v1751 = vsel %vm1629, %v1739, 0
      %1752 = vrot.lane.b32.xlu0 %v1727, 124
      %v1753 = vpop.permute.xlu0 %1752
      %1754 = vrot.lane.b32.xlu0 %v1730, 124
      %v1755 = vpop.permute.xlu0 %1754
      %v1756 = vsel %vm1642, %v1637, %v1753
      %v1757 = vsel %vm1642, %v1641, %v1755
      %v1761 = vsel %vm1647, %v1753, 0
      %v1764 = vsel %vm1647, %v1755, 0
      %v1766 = vsel %vm1676, %v1756, 0
      %v1767 = vsel %vm1677, %v1761, 0
      %v1768 = vsel %vm1676, %v1757, 0
      %v1769 = vsel %vm1677, %v1764, 0
      %s1770 = scalar_lea.vmem %s2, 96
      %v1771 = vld [vmem:[%s1770] sm:$0xff]
      %v1772 = vld [vmem:[%s1770 + $0x8] sm:$0xf]
      %v1773 = vld [vmem:[%s1770 + $0xc] sm:$0xff]
      %v1774 = vld [vmem:[%s1770 + $0x14] sm:$0xf]
      %v1775 = vld [vmem:[%s1770 + $0x18] sm:$0xff]
      %v1776 = vld [vmem:[%s1770 + $0x20] sm:$0xf]
      %v1777 = vld [vmem:[%s1770 + $0x24] sm:$0xff]
      %v1778 = vld [vmem:[%s1770 + $0x2c] sm:$0xf]
      %v1787 = vunpack.c.l.b16 %v1771
      %v1788 = vunpack.c.h.b16 %v1771
      %v1789 = vunpack.c.l.b16 %v1772
      %v1790 = vunpack.c.l.b16 %v1773
      %v1791 = vunpack.c.h.b16 %v1773
      %v1792 = vunpack.c.l.b16 %v1774
      %v1793 = vunpack.c.l.b16 %v1775
      %v1794 = vunpack.c.h.b16 %v1775
      %v1795 = vunpack.c.l.b16 %v1776
      %v1796 = vunpack.c.l.b16 %v1777
      %v1797 = vunpack.c.h.b16 %v1777
      %v1798 = vunpack.c.l.b16 %v1778
      %v1799 = vpack.c.b16 %v1790, %v1787
      %v1800 = vpack.c.b16 %v1791, %v1788
      %v1801 = vpack.c.b16 %v1792, %v1789
      %v1802 = vpack.c.b16 %v1796, %v1793
      %v1803 = vpack.c.b16 %v1797, %v1794
      %v1804 = vpack.c.b16 %v1798, %v1795
      %v1810 = vsel %vm889, %v1801, 0
      %v1813 = vsel %vm889, %v1804, 0
      %1815 = vmatprep.subr.bf16.mxu0 %v1631
      %1816 = vmatpush1.bf16.msra.mxu0 %v1630
      %1817 = vmatprep.subr.bf16.mxu0 %v1633
      %1818 = vmatpush1.bf16.msra.mxu0 %v1632
      %1819 = vmatprep.subr.bf16.mxu0 %v1573
      %1820 = vmatpush1.bf16.msra.mxu0 %v1579
      %1821 = vmatprep.subr.bf16.mxu0 %v1574
      %1822 = vmatpush1.bf16.msra.mxu0 %v1582
      %1823 = vmatprep.subr.bf16.mxu0 %v1679
      %1824 = vmatpush1.bf16.msra.mxu0 %v1678
      %1825 = vmatprep.subr.bf16.mxu0 %v1681
      %1826 = vmatpush1.bf16.msra.mxu0 %v1680
      %1827 = vmatprep.subr.bf16.mxu0 %v1701
      %1828 = vmatpush1.bf16.msra.mxu0 %v1700
      %1829 = vmatprep.subr.bf16.mxu0 %v1703
      %1830 = vmatpush1.bf16.msra.mxu0 %v1702
      %1831 = vmatprep.subr.bf16.mxu0 %v1557
      %1832 = vmatpush1.bf16.msra.mxu0 %v1556
      %1833 = vmatprep.subr.bf16.mxu0 %v1559
      %1834 = vmatpush1.bf16.msra.mxu0 %v1558
      %1835 = vmatprep.subr.bf16.mxu0 %v1723
      %1836 = vmatpush1.bf16.msra.mxu0 %v1722
      %1837 = vmatprep.subr.bf16.mxu0 %v1725
      %1838 = vmatpush1.bf16.msra.mxu0 %v1724
      %1839 = vmatprep.subr.bf16.mxu0 %v1749
      %1840 = vmatpush1.bf16.msra.mxu0 %v1748
      %1841 = vmatprep.subr.bf16.mxu0 %v1751
      %1842 = vmatpush1.bf16.msra.mxu0 %v1750
      %1843 = vmatprep.subr.bf16.mxu0 %v1727
      %1844 = vmatpush1.bf16.msra.mxu0 %v1573
      %1845 = vmatprep.subr.bf16.mxu0 %v1730
      %1846 = vmatpush1.bf16.msra.mxu0 %v1574
      %1847 = vmatprep.mubr.bf16.mxu0 %v1800
      %1848 = vmatmul.mubr.bf16.gmra.mrb[0].mxu0 %v1799
      %v1849 = vpop.f32.mrb[0].mxu0
      %v1850 = vadd.f32 0.0, %v1849
      %v1851 = vpop.f32.mrb[0].mxu0
      %v1852 = vadd.f32 0.0, %v1851
      %v1853 = vpop.f32.mrb[0].mxu0
      %v1854 = vadd.f32 0.0, %v1853
      %v1855 = vpop.f32.mrb[0].mxu0
      %v1856 = vadd.f32 0.0, %v1855
      %1857 = vmatprep.mubr.bf16.mxu0 %v1803
      %1858 = vmatmul.mubr.bf16.gmra.mrb[0].mxu0 %v1802
      %v1859 = vpop.f32.mrb[0].mxu0
      %v1860 = vadd.f32 0.0, %v1859
      %v1861 = vpop.f32.mrb[0].mxu0
      %v1862 = vadd.f32 0.0, %v1861
      %v1863 = vpop.f32.mrb[0].mxu0
      %v1864 = vadd.f32 0.0, %v1863
      %v1865 = vpop.f32.mrb[0].mxu0
      %v1866 = vadd.f32 0.0, %v1865
      %1867 = vdwg.mxu0
      %1868 = vmatprep.subr.bf16.mxu0 %v1767
      %1869 = vmatpush1.bf16.msra.mxu0 %v1766
      %1870 = vmatprep.subr.bf16.mxu0 %v1769
      %1871 = vmatpush1.bf16.msra.mxu0 %v1768
      %1872 = vmatprep.subr.bf16.mxu0 0
      %1873 = vmatpush1.bf16.msra.mxu0 0
      %1874 = vmatprep.subr.bf16.mxu0 0
      %1875 = vmatpush1.bf16.msra.mxu0 0
      %1876 = vmatprep.subr.bf16.mxu0 0
      %1877 = vmatpush1.bf16.msra.mxu0 0
      %1878 = vmatprep.subr.bf16.mxu0 0
      %1879 = vmatpush1.bf16.msra.mxu0 0
      %1880 = vmatprep.subr.bf16.mxu0 0
      %1881 = vmatpush1.bf16.msra.mxu0 0
      %1882 = vmatprep.subr.bf16.mxu0 0
      %1883 = vmatpush1.bf16.msra.mxu0 0
      %1884 = vmatprep.subr.bf16.mxu0 0
      %1885 = vmatpush1.bf16.msra.mxu0 0
      %1886 = vmatprep.subr.bf16.mxu0 0
      %1887 = vmatpush1.bf16.msra.mxu0 0
      %1888 = vmatprep.subr.bf16.mxu0 0
      %1889 = vmatpush1.bf16.msra.mxu0 0
      %1890 = vmatprep.subr.bf16.mxu0 0
      %1891 = vmatpush1.bf16.msra.mxu0 0
      %1892 = vmatprep.subr.bf16.mxu0 0
      %1893 = vmatpush1.bf16.msra.mxu0 0
      %1894 = vmatprep.subr.bf16.mxu0 0
      %1895 = vmatpush1.bf16.msra.mxu0 0
      %1896 = vmatprep.subr.bf16.mxu0 0
      %1897 = vmatpush1.bf16.msra.mxu0 0
      %1898 = vmatprep.subr.bf16.mxu0 0
      %1899 = vmatpush1.bf16.msra.mxu0 0
      %1900 = vmatprep.mubr.bf16.mxu0 0
      %1901 = vmatmul.mubr.bf16.gmra.mrb[0].mxu0 %v1810
      %v1902 = vpop.f32.mrb[0].mxu0
      %v1903 = vadd.f32 %v1850, %v1902
      %v1904 = vpop.f32.mrb[0].mxu0
      %v1905 = vadd.f32 %v1852, %v1904
      %v1906 = vpop.f32.mrb[0].mxu0
      %v1907 = vadd.f32 %v1854, %v1906
      %v1908 = vpop.f32.mrb[0].mxu0
      %v1909 = vadd.f32 %v1856, %v1908
      %1910 = vmatprep.mubr.bf16.mxu0 0
      %1911 = vmatmul.mubr.bf16.gmra.mrb[0].mxu0 %v1813
      %v1912 = vpop.f32.mrb[0].mxu0
      %v1913 = vadd.f32 %v1860, %v1912
      %v1914 = vpop.f32.mrb[0].mxu0
      %v1915 = vadd.f32 %v1862, %v1914
      %v1916 = vpop.f32.mrb[0].mxu0
      %v1917 = vadd.f32 %v1864, %v1916
      %v1918 = vpop.f32.mrb[0].mxu0
      %v1919 = vadd.f32 %v1866, %v1918
      %1920 = vdwg.mxu0
      %1922 = vset.pattern.permute.xlu0 0
      %1923 = vperm.xlu0 %1922, %v309
      %v1924 = vpop.permute.xlu0 %1923
      %1927 = vset.pattern.permute.xlu0 0
      %1928 = vperm.xlu0 %1927, %v310
      %v1929 = vpop.permute.xlu0 %1928
      %1932 = vset.pattern.permute.xlu0 0
      %1933 = vperm.xlu0 %1932, %v311
      %v1934 = vpop.permute.xlu0 %1933
      %1937 = vset.pattern.permute.xlu0 0
      %1938 = vperm.xlu0 %1937, %v312
      %v1939 = vpop.permute.xlu0 %1938
      %v1941 = vmul.f32 %v1903, %v1924
      %v1942 = vmul.f32 %v1905, %v1924
      %v1943 = vmul.f32 %v1907, %v1929
      %v1944 = vmul.f32 %v1909, %v1929
      %v1945 = vmul.f32 %v1913, %v1934
      %v1946 = vmul.f32 %v1915, %v1934
      %v1947 = vmul.f32 %v1917, %v1939
      %v1948 = vmul.f32 %v1919, %v1939
      %1949 = vset.pattern.permute.xlu0 1
      %1950 = vperm.xlu0 %1949, %v309
      %v1951 = vpop.permute.xlu0 %1950
      %1953 = vset.pattern.permute.xlu0 1
      %1954 = vperm.xlu0 %1953, %v310
      %v1955 = vpop.permute.xlu0 %1954
      %1957 = vset.pattern.permute.xlu0 1
      %1958 = vperm.xlu0 %1957, %v311
      %v1959 = vpop.permute.xlu0 %1958
      %1961 = vset.pattern.permute.xlu0 1
      %1962 = vperm.xlu0 %1961, %v312
      %v1963 = vpop.permute.xlu0 %1962
      %v1965 = vadd.f32 %v1941, %v1951
      %v1966 = vadd.f32 %v1942, %v1951
      %v1967 = vadd.f32 %v1943, %v1955
      %v1968 = vadd.f32 %v1944, %v1955
      %v1969 = vadd.f32 %v1945, %v1959
      %v1970 = vadd.f32 %v1946, %v1959
      %v1971 = vadd.f32 %v1947, %v1963
      %v1972 = vadd.f32 %v1948, %v1963
      %vm1973 = vcmp.ge.f32.partialorder %v1965, 0.0
      %vm1974 = vcmp.ge.f32.partialorder %v1966, 0.0
      %vm1975 = vcmp.ge.f32.partialorder %v1967, 0.0
      %vm1976 = vcmp.ge.f32.partialorder %v1968, 0.0
      %vm1977 = vcmp.ge.f32.partialorder %v1969, 0.0
      %vm1978 = vcmp.ge.f32.partialorder %v1970, 0.0
      %vm1979 = vcmp.ge.f32.partialorder %v1971, 0.0
      %vm1980 = vcmp.ge.f32.partialorder %v1972, 0.0
      %v1981 = vmul.f32 %v1965, 0.2
      %v1982 = vmul.f32 %v1966, 0.2
      %v1983 = vmul.f32 %v1967, 0.2
      %v1984 = vmul.f32 %v1968, 0.2
      %v1985 = vmul.f32 %v1969, 0.2
      %v1986 = vmul.f32 %v1970, 0.2
      %v1987 = vmul.f32 %v1971, 0.2
      %v1988 = vmul.f32 %v1972, 0.2
      %v1989 = vsel %vm1973, %v1965, %v1981
      %v1990 = vsel %vm1974, %v1966, %v1982
      %v1991 = vsel %vm1975, %v1967, %v1983
      %v1992 = vsel %vm1976, %v1968, %v1984
      %v1993 = vsel %vm1977, %v1969, %v1985
      %v1994 = vsel %vm1978, %v1970, %v1986
      %v1995 = vsel %vm1979, %v1971, %v1987
      %v1996 = vsel %vm1980, %v1972, %v1988
      %v1997 = vpack.c.bf16 %v1991, %v1989
      %v1998 = vpack.c.bf16 %v1992, %v1990
      %v1999 = vpack.c.bf16 %v1995, %v1993
      %v2000 = vpack.c.bf16 %v1996, %v1994
      %2001 = vst [vmem:[#allocation2] sm:$0xff] %v1997
      %2002 = vst [vmem:[#allocation2 + $0x8] sm:$0xff] %v1998
      %2003 = vst [vmem:[#allocation2 + $0x10] sm:$0xff] %v1999
      %2004 = vst [vmem:[#allocation2 + $0x18] sm:$0xff] %v2000
      %v2005 = vld [vmem:[#allocation2] sm:$0xff]
      %v2006 = vld [vmem:[#allocation2 + $0x8] sm:$0xff]
      %v2007 = vld [vmem:[#allocation2 + $0x10] sm:$0xff]
      %v2008 = vld [vmem:[#allocation2 + $0x18] sm:$0xff]
      %2012 = vrot.lane.b32.xlu0 0, 8
      %v2013 = vpop.permute.xlu0 %2012
      %2014 = vrot.lane.b32.xlu0 %v2005, 8
      %v2015 = vpop.permute.xlu0 %2014
      %2016 = vrot.lane.b32.xlu0 %v2007, 8
      %v2017 = vpop.permute.xlu0 %2016
      %vm2018 = vcmask 64512
      %v2019 = vsel %vm2018, %v2013, %v2015
      %v2020 = vsel %vm2018, %v2013, %v2017
      %vm2023 = vcmask 64512
      %v2025 = vsel %vm2023, 0, %v2013
      %vm2027 = vcmp.ge.s32.totalorder %v326, 8
      %v2028 = vsel %vm2027, 1, 0
      %v2029 = vlaneseq
      %v2030 = vshrl.u32 %v2029, 7
      %v2031 = vsub.s32 0, %v2030
      %v2032 = vrot.slane %v2028, %v2031
      %v2033 = vlaneseq
      %v2034 = vshrl.u32 %v2033, 7
      %v2035 = vsub.s32 1, %v2034
      %v2036 = vrot.slane %v2028, %v2035
      %vm2037 = vcmp.eq.s32.totalorder %v2032, 1
      %vm2038 = vcmp.eq.s32.totalorder %v2036, 1
      %vm2039 = vmpackc.low %vm2038, %vm2037
      %v2040 = vsel %vm2039, 65537, 0
      %v2041 = vlaneseq
      %v2042 = vshrl.u32 %v2041, 7
      %v2043 = vsub.s32 0, %v2042
      %v2044 = vrot.slane %v2040, %v2043
      %v2045 = vlaneseq
      %v2046 = vshrl.u32 %v2045, 7
      %v2047 = vsub.s32 4, %v2046
      %v2048 = vrot.slane %v2040, %v2047
      %vm2049 = vcmp.ne.s16.totalorder %v2044, 0
      %vm2050 = vcmp.ne.s16.totalorder %v2048, 0
      %v2051 = vsel %vm2049, %v2025, 0
      %v2052 = vsel %vm2050, %v2019, 0
      %v2053 = vsel %vm2050, %v2020, 0
      %2054 = vrot.lane.b32.xlu0 0, 120
      %v2055 = vpop.permute.xlu0 %2054
      %2056 = vrot.lane.b32.xlu0 %v2005, 120
      %v2057 = vpop.permute.xlu0 %2056
      %2058 = vrot.lane.b32.xlu0 %v2007, 120
      %v2059 = vpop.permute.xlu0 %2058
      %vm2060 = vcmask 982016
      %v2061 = vsel %vm2060, %v2055, %v2057
      %v2062 = vsel %vm2060, %v2055, %v2059
      %vm2065 = vcmask 982016
      %v2067 = vsel %vm2065, %v2057, 0
      %v2070 = vsel %vm2065, %v2059, 0
      %vm2072 = vcmp.lt.s32.totalorder %v326, 8
      %v2073 = vsel %vm2072, 1, 0
      %v2074 = vlaneseq
      %v2075 = vshrl.u32 %v2074, 7
      %v2076 = vsub.s32 0, %v2075
      %v2077 = vrot.slane %v2073, %v2076
      %v2078 = vlaneseq
      %v2079 = vshrl.u32 %v2078, 7
      %v2080 = vsub.s32 1, %v2079
      %v2081 = vrot.slane %v2073, %v2080
      %vm2082 = vcmp.eq.s32.totalorder %v2077, 1
      %vm2083 = vcmp.eq.s32.totalorder %v2081, 1
      %vm2084 = vmpackc.low %vm2083, %vm2082
      %v2085 = vsel %vm2084, 65537, 0
      %v2086 = vlaneseq
      %v2087 = vshrl.u32 %v2086, 7
      %v2088 = vsub.s32 0, %v2087
      %v2089 = vrot.slane %v2085, %v2088
      %v2090 = vlaneseq
      %v2091 = vshrl.u32 %v2090, 7
      %v2092 = vsub.s32 4, %v2091
      %v2093 = vrot.slane %v2085, %v2092
      %vm2094 = vcmp.ne.s16.totalorder %v2089, 0
      %vm2095 = vcmp.ne.s16.totalorder %v2093, 0
      %v2096 = vsel %vm2094, %v2061, 0
      %v2097 = vsel %vm2095, %v2067, 0
      %v2098 = vsel %vm2094, %v2062, 0
      %v2099 = vsel %vm2095, %v2070, 0
      %2102 = vrot.lane.b32.xlu0 %v2006, 8
      %v2103 = vpop.permute.xlu0 %2102
      %2104 = vrot.lane.b32.xlu0 %v2008, 8
      %v2105 = vpop.permute.xlu0 %2104
      %v2106 = vsel %vm2018, %v2015, %v2103
      %v2107 = vsel %vm2018, %v2017, %v2105
      %v2111 = vsel %vm2023, 0, %v2015
      %v2114 = vsel %vm2023, 0, %v2017
      %v2116 = vsel %vm2049, %v2111, 0
      %v2117 = vsel %vm2050, %v2106, 0
      %v2118 = vsel %vm2049, %v2114, 0
      %v2119 = vsel %vm2050, %v2107, 0
      %2120 = vrot.lane.b32.xlu0 %v2006, 120
      %v2121 = vpop.permute.xlu0 %2120
      %2122 = vrot.lane.b32.xlu0 %v2008, 120
      %v2123 = vpop.permute.xlu0 %2122
      %v2124 = vsel %vm2060, %v2057, %v2121
      %v2125 = vsel %vm2060, %v2059, %v2123
      %v2129 = vsel %vm2065, %v2121, 0
      %v2132 = vsel %vm2065, %v2123, 0
      %v2134 = vsel %vm2094, %v2124, 0
      %v2135 = vsel %vm2095, %v2129, 0
      %v2136 = vsel %vm2094, %v2125, 0
      %v2137 = vsel %vm2095, %v2132, 0
      %v2138 = vsel %vm2018, %v2103, %v2013
      %v2139 = vsel %vm2018, %v2105, %v2013
      %v2143 = vsel %vm2023, 0, %v2103
      %v2146 = vsel %vm2023, 0, %v2105
      %v2148 = vsel %vm2049, %v2143, 0
      %v2149 = vsel %vm2050, %v2138, 0
      %v2150 = vsel %vm2049, %v2146, 0
      %v2151 = vsel %vm2050, %v2139, 0
      %v2152 = vsel %vm2060, %v2121, %v2055
      %v2153 = vsel %vm2060, %v2123, %v2055
      %v2157 = vsel %vm2065, %v2055, 0
      %v2159 = vsel %vm2094, %v2152, 0
      %v2160 = vsel %vm2095, %v2157, 0
      %v2161 = vsel %vm2094, %v2153, 0
      %s2162 = scalar_lea.vmem %s2, 144
      %v2163 = vld [vmem:[%s2162] sm:$0xff]
      %v2164 = vld [vmem:[%s2162 + $0x8] sm:$0xf]
      %v2165 = vld [vmem:[%s2162 + $0xc] sm:$0xff]
      %v2166 = vld [vmem:[%s2162 + $0x14] sm:$0xf]
      %v2167 = vld [vmem:[%s2162 + $0x18] sm:$0xff]
      %v2168 = vld [vmem:[%s2162 + $0x20] sm:$0xf]
      %v2169 = vld [vmem:[%s2162 + $0x24] sm:$0xff]
      %v2170 = vld [vmem:[%s2162 + $0x2c] sm:$0xf]
      %v2179 = vunpack.c.l.b16 %v2163
      %v2180 = vunpack.c.h.b16 %v2163
      %v2181 = vunpack.c.l.b16 %v2164
      %v2182 = vunpack.c.l.b16 %v2165
      %v2183 = vunpack.c.h.b16 %v2165
      %v2184 = vunpack.c.l.b16 %v2166
      %v2185 = vunpack.c.l.b16 %v2167
      %v2186 = vunpack.c.h.b16 %v2167
      %v2187 = vunpack.c.l.b16 %v2168
      %v2188 = vunpack.c.l.b16 %v2169
      %v2189 = vunpack.c.h.b16 %v2169
      %v2190 = vunpack.c.l.b16 %v2170
      %v2191 = vpack.c.b16 %v2182, %v2179
      %v2192 = vpack.c.b16 %v2183, %v2180
      %v2193 = vpack.c.b16 %v2184, %v2181
      %v2194 = vpack.c.b16 %v2188, %v2185
      %v2195 = vpack.c.b16 %v2189, %v2186
      %v2196 = vpack.c.b16 %v2190, %v2187
      %v2202 = vsel %vm889, %v2193, 0
      %v2205 = vsel %vm889, %v2196, 0
      %2207 = vmatprep.subr.bf16.mxu0 %v2052
      %2208 = vmatpush1.bf16.msra.mxu0 %v2051
      %2209 = vmatprep.subr.bf16.mxu0 %v2053
      %2210 = vmatpush1.bf16.msra.mxu0 %v2051
      %2211 = vmatprep.subr.bf16.mxu0 %v2005
      %2212 = vmatpush1.bf16.msra.mxu0 0
      %2213 = vmatprep.subr.bf16.mxu0 %v2007
      %2214 = vmatpush1.bf16.msra.mxu0 0
      %2215 = vmatprep.subr.bf16.mxu0 %v2097
      %2216 = vmatpush1.bf16.msra.mxu0 %v2096
      %2217 = vmatprep.subr.bf16.mxu0 %v2099
      %2218 = vmatpush1.bf16.msra.mxu0 %v2098
      %2219 = vmatprep.subr.bf16.mxu0 %v2117
      %2220 = vmatpush1.bf16.msra.mxu0 %v2116
      %2221 = vmatprep.subr.bf16.mxu0 %v2119
      %2222 = vmatpush1.bf16.msra.mxu0 %v2118
      %2223 = vmatprep.subr.bf16.mxu0 %v2006
      %2224 = vmatpush1.bf16.msra.mxu0 %v2005
      %2225 = vmatprep.subr.bf16.mxu0 %v2008
      %2226 = vmatpush1.bf16.msra.mxu0 %v2007
      %2227 = vmatprep.subr.bf16.mxu0 %v2135
      %2228 = vmatpush1.bf16.msra.mxu0 %v2134
      %2229 = vmatprep.subr.bf16.mxu0 %v2137
      %2230 = vmatpush1.bf16.msra.mxu0 %v2136
      %2231 = vmatprep.subr.bf16.mxu0 %v2149
      %2232 = vmatpush1.bf16.msra.mxu0 %v2148
      %2233 = vmatprep.subr.bf16.mxu0 %v2151
      %2234 = vmatpush1.bf16.msra.mxu0 %v2150
      %2235 = vmatprep.subr.bf16.mxu0 0
      %2236 = vmatpush1.bf16.msra.mxu0 %v2006
      %2237 = vmatprep.subr.bf16.mxu0 0
      %2238 = vmatpush1.bf16.msra.mxu0 %v2008
      %2239 = vmatprep.mubr.bf16.mxu0 %v2192
      %2240 = vmatmul.mubr.bf16.gmra.mrb[0].mxu0 %v2191
      %v2241 = vpop.f32.mrb[0].mxu0
      %v2242 = vadd.f32 0.0, %v2241
      %v2243 = vpop.f32.mrb[0].mxu0
      %v2244 = vadd.f32 0.0, %v2243
      %v2245 = vpop.f32.mrb[0].mxu0
      %v2246 = vadd.f32 0.0, %v2245
      %v2247 = vpop.f32.mrb[0].mxu0
      %v2248 = vadd.f32 0.0, %v2247
      %2249 = vmatprep.mubr.bf16.mxu0 %v2195
      %2250 = vmatmul.mubr.bf16.gmra.mrb[0].mxu0 %v2194
      %v2251 = vpop.f32.mrb[0].mxu0
      %v2252 = vadd.f32 0.0, %v2251
      %v2253 = vpop.f32.mrb[0].mxu0
      %v2254 = vadd.f32 0.0, %v2253
      %v2255 = vpop.f32.mrb[0].mxu0
      %v2256 = vadd.f32 0.0, %v2255
      %v2257 = vpop.f32.mrb[0].mxu0
      %v2258 = vadd.f32 0.0, %v2257
      %2259 = vdwg.mxu0
      %2260 = vmatprep.subr.bf16.mxu0 %v2160
      %2261 = vmatpush1.bf16.msra.mxu0 %v2159
      %2262 = vmatprep.subr.bf16.mxu0 %v2160
      %2263 = vmatpush1.bf16.msra.mxu0 %v2161
      %2264 = vmatprep.subr.bf16.mxu0 0
      %2265 = vmatpush1.bf16.msra.mxu0 0
      %2266 = vmatprep.subr.bf16.mxu0 0
      %2267 = vmatpush1.bf16.msra.mxu0 0
      %2268 = vmatprep.subr.bf16.mxu0 0
      %2269 = vmatpush1.bf16.msra.mxu0 0
      %2270 = vmatprep.subr.bf16.mxu0 0
      %2271 = vmatpush1.bf16.msra.mxu0 0
      %2272 = vmatprep.subr.bf16.mxu0 0
      %2273 = vmatpush1.bf16.msra.mxu0 0
      %2274 = vmatprep.subr.bf16.mxu0 0
      %2275 = vmatpush1.bf16.msra.mxu0 0
      %2276 = vmatprep.subr.bf16.mxu0 0
      %2277 = vmatpush1.bf16.msra.mxu0 0
      %2278 = vmatprep.subr.bf16.mxu0 0
      %2279 = vmatpush1.bf16.msra.mxu0 0
      %2280 = vmatprep.subr.bf16.mxu0 0
      %2281 = vmatpush1.bf16.msra.mxu0 0
      %2282 = vmatprep.subr.bf16.mxu0 0
      %2283 = vmatpush1.bf16.msra.mxu0 0
      %2284 = vmatprep.subr.bf16.mxu0 0
      %2285 = vmatpush1.bf16.msra.mxu0 0
      %2286 = vmatprep.subr.bf16.mxu0 0
      %2287 = vmatpush1.bf16.msra.mxu0 0
      %2288 = vmatprep.subr.bf16.mxu0 0
      %2289 = vmatpush1.bf16.msra.mxu0 0
      %2290 = vmatprep.subr.bf16.mxu0 0
      %2291 = vmatpush1.bf16.msra.mxu0 0
      %2292 = vmatprep.mubr.bf16.mxu0 0
      %2293 = vmatmul.mubr.bf16.gmra.mrb[0].mxu0 %v2202
      %v2294 = vpop.f32.mrb[0].mxu0
      %v2295 = vadd.f32 %v2242, %v2294
      %v2296 = vpop.f32.mrb[0].mxu0
      %v2297 = vadd.f32 %v2244, %v2296
      %v2298 = vpop.f32.mrb[0].mxu0
      %v2299 = vadd.f32 %v2246, %v2298
      %v2300 = vpop.f32.mrb[0].mxu0
      %v2301 = vadd.f32 %v2248, %v2300
      %2302 = vmatprep.mubr.bf16.mxu0 0
      %2303 = vmatmul.mubr.bf16.gmra.mrb[0].mxu0 %v2205
      %v2304 = vpop.f32.mrb[0].mxu0
      %v2305 = vadd.f32 %v2252, %v2304
      %v2306 = vpop.f32.mrb[0].mxu0
      %v2307 = vadd.f32 %v2254, %v2306
      %v2308 = vpop.f32.mrb[0].mxu0
      %v2309 = vadd.f32 %v2256, %v2308
      %v2310 = vpop.f32.mrb[0].mxu0
      %v2311 = vadd.f32 %v2258, %v2310
      %2312 = vdwg.mxu0
      %2314 = vset.pattern.permute.xlu0 0
      %2315 = vperm.xlu0 %2314, %v313
      %v2316 = vpop.permute.xlu0 %2315
      %2319 = vset.pattern.permute.xlu0 0
      %2320 = vperm.xlu0 %2319, %v314
      %v2321 = vpop.permute.xlu0 %2320
      %2324 = vset.pattern.permute.xlu0 0
      %2325 = vperm.xlu0 %2324, %v315
      %v2326 = vpop.permute.xlu0 %2325
      %2329 = vset.pattern.permute.xlu0 0
      %2330 = vperm.xlu0 %2329, %v316
      %v2331 = vpop.permute.xlu0 %2330
      %v2333 = vmul.f32 %v2295, %v2316
      %v2334 = vmul.f32 %v2297, %v2316
      %v2335 = vmul.f32 %v2299, %v2321
      %v2336 = vmul.f32 %v2301, %v2321
      %v2337 = vmul.f32 %v2305, %v2326
      %v2338 = vmul.f32 %v2307, %v2326
      %v2339 = vmul.f32 %v2309, %v2331
      %v2340 = vmul.f32 %v2311, %v2331
      %2341 = vset.pattern.permute.xlu0 1
      %2342 = vperm.xlu0 %2341, %v313
      %v2343 = vpop.permute.xlu0 %2342
      %2345 = vset.pattern.permute.xlu0 1
      %2346 = vperm.xlu0 %2345, %v314
      %v2347 = vpop.permute.xlu0 %2346
      %2349 = vset.pattern.permute.xlu0 1
      %2350 = vperm.xlu0 %2349, %v315
      %v2351 = vpop.permute.xlu0 %2350
      %2353 = vset.pattern.permute.xlu0 1
      %2354 = vperm.xlu0 %2353, %v316
      %v2355 = vpop.permute.xlu0 %2354
      %v2357 = vadd.f32 %v2333, %v2343
      %v2358 = vadd.f32 %v2334, %v2343
      %v2359 = vadd.f32 %v2335, %v2347
      %v2360 = vadd.f32 %v2336, %v2347
      %v2361 = vadd.f32 %v2337, %v2351
      %v2362 = vadd.f32 %v2338, %v2351
      %v2363 = vadd.f32 %v2339, %v2355
      %v2364 = vadd.f32 %v2340, %v2355
      %vm2365 = vcmp.ge.f32.partialorder %v2357, 0.0
      %vm2366 = vcmp.ge.f32.partialorder %v2358, 0.0
      %vm2367 = vcmp.ge.f32.partialorder %v2359, 0.0
      %vm2368 = vcmp.ge.f32.partialorder %v2360, 0.0
      %vm2369 = vcmp.ge.f32.partialorder %v2361, 0.0
      %vm2370 = vcmp.ge.f32.partialorder %v2362, 0.0
      %vm2371 = vcmp.ge.f32.partialorder %v2363, 0.0
      %vm2372 = vcmp.ge.f32.partialorder %v2364, 0.0
      %v2373 = vmul.f32 %v2357, 0.2
      %v2374 = vmul.f32 %v2358, 0.2
      %v2375 = vmul.f32 %v2359, 0.2
      %v2376 = vmul.f32 %v2360, 0.2
      %v2377 = vmul.f32 %v2361, 0.2
      %v2378 = vmul.f32 %v2362, 0.2
      %v2379 = vmul.f32 %v2363, 0.2
      %v2380 = vmul.f32 %v2364, 0.2
      %v2381 = vsel %vm2365, %v2357, %v2373
      %v2382 = vsel %vm2366, %v2358, %v2374
      %v2383 = vsel %vm2367, %v2359, %v2375
      %v2384 = vsel %vm2368, %v2360, %v2376
      %v2385 = vsel %vm2369, %v2361, %v2377
      %v2386 = vsel %vm2370, %v2362, %v2378
      %v2387 = vsel %vm2371, %v2363, %v2379
      %v2388 = vsel %vm2372, %v2364, %v2380
      %v2389 = vpack.c.bf16 %v2383, %v2381
      %v2390 = vpack.c.bf16 %v2384, %v2382
      %v2391 = vpack.c.bf16 %v2387, %v2385
      %v2392 = vpack.c.bf16 %v2388, %v2386
      %2393 = vst [vmem:[#allocation2] sm:$0xff] %v2389
      %2394 = vst [vmem:[#allocation2 + $0x8] sm:$0xff] %v2390
      %2395 = vst [vmem:[#allocation2 + $0x10] sm:$0xff] %v2391
      %2396 = vst [vmem:[#allocation2 + $0x18] sm:$0xff] %v2392
      %v2397 = vld [vmem:[#allocation2] sm:$0xff]
      %v2398 = vld [vmem:[#allocation2 + $0x8] sm:$0xff]
      %v2399 = vld [vmem:[#allocation2 + $0x10] sm:$0xff]
      %v2400 = vld [vmem:[#allocation2 + $0x18] sm:$0xff]
      %2405 = vrot.lane.b32.xlu0 %v2397, 16
      %v2406 = vpop.permute.xlu0 %2405
      %2407 = vrot.lane.b32.xlu0 %v2398, 16
      %v2408 = vpop.permute.xlu0 %2407
      %2409 = vrot.lane.b32.xlu0 %v2399, 16
      %v2410 = vpop.permute.xlu0 %2409
      %2411 = vrot.lane.b32.xlu0 %v2400, 16
      %v2412 = vpop.permute.xlu0 %2411
      %v2413 = vsel %vm341, %v2406, %v2408
      %v2414 = vsel %vm341, %v2410, %v2412
      %v2418 = vsel %vm343, 0, %v2406
      %v2421 = vsel %vm343, 0, %v2410
      %2425 = vrot.lane.b32.xlu0 %v2418, 1
      %v2426 = vpop.permute.xlu0 %2425
      %2427 = vrot.lane.b32.xlu0 %v2413, 1
      %v2428 = vpop.permute.xlu0 %2427
      %2429 = vrot.lane.b32.xlu0 %v2421, 1
      %v2430 = vpop.permute.xlu0 %2429
      %2431 = vrot.lane.b32.xlu0 %v2414, 1
      %v2432 = vpop.permute.xlu0 %2431
      %v2433 = vsel %vm352, %v2426, %v2428
      %v2434 = vsel %vm352, %v2430, %v2432
      %v2438 = vsel %vm355, 0, %v2426
      %v2441 = vsel %vm355, 0, %v2430
      %v2443 = vsel %vm381, %v2438, 0
      %v2444 = vsel %vm382, %v2433, 0
      %v2445 = vsel %vm381, %v2441, 0
      %v2446 = vsel %vm382, %v2434, 0
      %2447 = vrot.lane.b32.xlu0 %v2418, 127
      %v2448 = vpop.permute.xlu0 %2447
      %2449 = vrot.lane.b32.xlu0 %v2413, 127
      %v2450 = vpop.permute.xlu0 %2449
      %2451 = vrot.lane.b32.xlu0 %v2421, 127
      %v2452 = vpop.permute.xlu0 %2451
      %2453 = vrot.lane.b32.xlu0 %v2414, 127
      %v2454 = vpop.permute.xlu0 %2453
      %v2455 = vsel %vm389, %v2448, %v2450
      %v2456 = vsel %vm389, %v2452, %v2454
      %v2460 = vsel %vm392, %v2450, 0
      %v2463 = vsel %vm392, %v2454, 0
      %v2465 = vsel %vm418, %v2455, 0
      %v2466 = vsel %vm419, %v2460, 0
      %v2467 = vsel %vm418, %v2456, 0
      %v2468 = vsel %vm419, %v2463, 0
      %2469 = vrot.lane.b32.xlu0 %v2397, 1
      %v2470 = vpop.permute.xlu0 %2469
      %2471 = vrot.lane.b32.xlu0 %v2398, 1
      %v2472 = vpop.permute.xlu0 %2471
      %2473 = vrot.lane.b32.xlu0 %v2399, 1
      %v2474 = vpop.permute.xlu0 %2473
      %2475 = vrot.lane.b32.xlu0 %v2400, 1
      %v2476 = vpop.permute.xlu0 %2475
      %v2477 = vsel %vm352, %v2470, %v2472
      %v2478 = vsel %vm352, %v2474, %v2476
      %v2482 = vsel %vm355, 0, %v2470
      %v2485 = vsel %vm355, 0, %v2474
      %v2487 = vsel %vm381, %v2482, 0
      %v2488 = vsel %vm382, %v2477, 0
      %v2489 = vsel %vm381, %v2485, 0
      %v2490 = vsel %vm382, %v2478, 0
      %2491 = vrot.lane.b32.xlu0 %v2397, 127
      %v2492 = vpop.permute.xlu0 %2491
      %2493 = vrot.lane.b32.xlu0 %v2398, 127
      %v2494 = vpop.permute.xlu0 %2493
      %2495 = vrot.lane.b32.xlu0 %v2399, 127
      %v2496 = vpop.permute.xlu0 %2495
      %2497 = vrot.lane.b32.xlu0 %v2400, 127
      %v2498 = vpop.permute.xlu0 %2497
      %v2499 = vsel %vm389, %v2492, %v2494
      %v2500 = vsel %vm389, %v2496, %v2498
      %v2504 = vsel %vm392, %v2494, 0
      %v2507 = vsel %vm392, %v2498, 0
      %v2509 = vsel %vm418, %v2499, 0
      %v2510 = vsel %vm419, %v2504, 0
      %v2511 = vsel %vm418, %v2500, 0
      %v2512 = vsel %vm419, %v2507, 0
      %2513 = vrot.lane.b32.xlu0 %v2397, 112
      %v2514 = vpop.permute.xlu0 %2513
      %2515 = vrot.lane.b32.xlu0 %v2398, 112
      %v2516 = vpop.permute.xlu0 %2515
      %2517 = vrot.lane.b32.xlu0 %v2399, 112
      %v2518 = vpop.permute.xlu0 %2517
      %2519 = vrot.lane.b32.xlu0 %v2400, 112
      %v2520 = vpop.permute.xlu0 %2519
      %v2521 = vsel %vm448, %v2514, %v2516
      %v2522 = vsel %vm448, %v2518, %v2520
      %v2526 = vsel %vm450, %v2516, 0
      %v2529 = vsel %vm450, %v2520, 0
      %2533 = vrot.lane.b32.xlu0 %v2521, 1
      %v2534 = vpop.permute.xlu0 %2533
      %2535 = vrot.lane.b32.xlu0 %v2526, 1
      %v2536 = vpop.permute.xlu0 %2535
      %2537 = vrot.lane.b32.xlu0 %v2522, 1
      %v2538 = vpop.permute.xlu0 %2537
      %2539 = vrot.lane.b32.xlu0 %v2529, 1
      %v2540 = vpop.permute.xlu0 %2539
      %v2541 = vsel %vm352, %v2534, %v2536
      %v2542 = vsel %vm352, %v2538, %v2540
      %v2546 = vsel %vm355, 0, %v2534
      %v2549 = vsel %vm355, 0, %v2538
      %v2551 = vsel %vm381, %v2546, 0
      %v2552 = vsel %vm382, %v2541, 0
      %v2553 = vsel %vm381, %v2549, 0
      %v2554 = vsel %vm382, %v2542, 0
      %2555 = vrot.lane.b32.xlu0 %v2521, 127
      %v2556 = vpop.permute.xlu0 %2555
      %2557 = vrot.lane.b32.xlu0 %v2526, 127
      %v2558 = vpop.permute.xlu0 %2557
      %2559 = vrot.lane.b32.xlu0 %v2522, 127
      %v2560 = vpop.permute.xlu0 %2559
      %2561 = vrot.lane.b32.xlu0 %v2529, 127
      %v2562 = vpop.permute.xlu0 %2561
      %v2563 = vsel %vm389, %v2556, %v2558
      %v2564 = vsel %vm389, %v2560, %v2562
      %v2568 = vsel %vm392, %v2558, 0
      %v2571 = vsel %vm392, %v2562, 0
      %v2573 = vsel %vm418, %v2563, 0
      %v2574 = vsel %vm419, %v2568, 0
      %v2575 = vsel %vm418, %v2564, 0
      %v2576 = vsel %vm419, %v2571, 0
      %s2577 = scalar_lea.vmem %s2, 192
      %v2578 = vld [vmem:[%s2577] sm:$0xff]
      %v2579 = vld [vmem:[%s2577 + $0x8] sm:$0xf]
      %v2580 = vld [vmem:[%s2577 + $0xc] sm:$0xff]
      %v2581 = vld [vmem:[%s2577 + $0x14] sm:$0xf]
      %v2582 = vld [vmem:[%s2577 + $0x18] sm:$0xff]
      %v2583 = vld [vmem:[%s2577 + $0x20] sm:$0xf]
      %v2584 = vld [vmem:[%s2577 + $0x24] sm:$0xff]
      %v2585 = vld [vmem:[%s2577 + $0x2c] sm:$0xf]
      %v2594 = vunpack.c.l.b16 %v2578
      %v2595 = vunpack.c.h.b16 %v2578
      %v2596 = vunpack.c.l.b16 %v2579
      %v2597 = vunpack.c.l.b16 %v2580
      %v2598 = vunpack.c.h.b16 %v2580
      %v2599 = vunpack.c.l.b16 %v2581
      %v2600 = vunpack.c.l.b16 %v2582
      %v2601 = vunpack.c.h.b16 %v2582
      %v2602 = vunpack.c.l.b16 %v2583
      %v2603 = vunpack.c.l.b16 %v2584
      %v2604 = vunpack.c.h.b16 %v2584
      %v2605 = vunpack.c.l.b16 %v2585
      %v2606 = vpack.c.b16 %v2597, %v2594
      %v2607 = vpack.c.b16 %v2598, %v2595
      %v2608 = vpack.c.b16 %v2599, %v2596
      %v2609 = vpack.c.b16 %v2603, %v2600
      %v2610 = vpack.c.b16 %v2604, %v2601
      %v2611 = vpack.c.b16 %v2605, %v2602
      %v2617 = vsel %vm889, %v2608, 0
      %v2620 = vsel %vm889, %v2611, 0
      %2622 = vmatprep.subr.bf16.mxu0 %v2444
      %2623 = vmatpush1.bf16.msra.mxu0 %v2443
      %2624 = vmatprep.subr.bf16.mxu0 %v2446
      %2625 = vmatpush1.bf16.msra.mxu0 %v2445
      %2626 = vmatprep.subr.bf16.mxu0 %v2413
      %2627 = vmatpush1.bf16.msra.mxu0 %v2418
      %2628 = vmatprep.subr.bf16.mxu0 %v2414
      %2629 = vmatpush1.bf16.msra.mxu0 %v2421
      %2630 = vmatprep.subr.bf16.mxu0 %v2466
      %2631 = vmatpush1.bf16.msra.mxu0 %v2465
      %2632 = vmatprep.subr.bf16.mxu0 %v2468
      %2633 = vmatpush1.bf16.msra.mxu0 %v2467
      %2634 = vmatprep.subr.bf16.mxu0 %v2488
      %2635 = vmatpush1.bf16.msra.mxu0 %v2487
      %2636 = vmatprep.subr.bf16.mxu0 %v2490
      %2637 = vmatpush1.bf16.msra.mxu0 %v2489
      %2638 = vmatprep.subr.bf16.mxu0 %v2398
      %2639 = vmatpush1.bf16.msra.mxu0 %v2397
      %2640 = vmatprep.subr.bf16.mxu0 %v2400
      %2641 = vmatpush1.bf16.msra.mxu0 %v2399
      %2642 = vmatprep.subr.bf16.mxu0 %v2510
      %2643 = vmatpush1.bf16.msra.mxu0 %v2509
      %2644 = vmatprep.subr.bf16.mxu0 %v2512
      %2645 = vmatpush1.bf16.msra.mxu0 %v2511
      %2646 = vmatprep.subr.bf16.mxu0 %v2552
      %2647 = vmatpush1.bf16.msra.mxu0 %v2551
      %2648 = vmatprep.subr.bf16.mxu0 %v2554
      %2649 = vmatpush1.bf16.msra.mxu0 %v2553
      %2650 = vmatprep.subr.bf16.mxu0 %v2526
      %2651 = vmatpush1.bf16.msra.mxu0 %v2521
      %2652 = vmatprep.subr.bf16.mxu0 %v2529
      %2653 = vmatpush1.bf16.msra.mxu0 %v2522
      %2654 = vmatprep.mubr.bf16.mxu0 %v2607
      %2655 = vmatmul.mubr.bf16.gmra.mrb[0].mxu0 %v2606
      %v2656 = vpop.f32.mrb[0].mxu0
      %v2657 = vadd.f32 0.0, %v2656
      %v2658 = vpop.f32.mrb[0].mxu0
      %v2659 = vadd.f32 0.0, %v2658
      %v2660 = vpop.f32.mrb[0].mxu0
      %v2661 = vadd.f32 0.0, %v2660
      %v2662 = vpop.f32.mrb[0].mxu0
      %v2663 = vadd.f32 0.0, %v2662
      %2664 = vmatprep.mubr.bf16.mxu0 %v2610
      %2665 = vmatmul.mubr.bf16.gmra.mrb[0].mxu0 %v2609
      %v2666 = vpop.f32.mrb[0].mxu0
      %v2667 = vadd.f32 0.0, %v2666
      %v2668 = vpop.f32.mrb[0].mxu0
      %v2669 = vadd.f32 0.0, %v2668
      %v2670 = vpop.f32.mrb[0].mxu0
      %v2671 = vadd.f32 0.0, %v2670
      %v2672 = vpop.f32.mrb[0].mxu0
      %v2673 = vadd.f32 0.0, %v2672
      %2674 = vdwg.mxu0
      %2675 = vmatprep.subr.bf16.mxu0 %v2574
      %2676 = vmatpush1.bf16.msra.mxu0 %v2573
      %2677 = vmatprep.subr.bf16.mxu0 %v2576
      %2678 = vmatpush1.bf16.msra.mxu0 %v2575
      %2679 = vmatprep.subr.bf16.mxu0 0
      %2680 = vmatpush1.bf16.msra.mxu0 0
      %2681 = vmatprep.subr.bf16.mxu0 0
      %2682 = vmatpush1.bf16.msra.mxu0 0
      %2683 = vmatprep.subr.bf16.mxu0 0
      %2684 = vmatpush1.bf16.msra.mxu0 0
      %2685 = vmatprep.subr.bf16.mxu0 0
      %2686 = vmatpush1.bf16.msra.mxu0 0
      %2687 = vmatprep.subr.bf16.mxu0 0
      %2688 = vmatpush1.bf16.msra.mxu0 0
      %2689 = vmatprep.subr.bf16.mxu0 0
      %2690 = vmatpush1.bf16.msra.mxu0 0
      %2691 = vmatprep.subr.bf16.mxu0 0
      %2692 = vmatpush1.bf16.msra.mxu0 0
      %2693 = vmatprep.subr.bf16.mxu0 0
      %2694 = vmatpush1.bf16.msra.mxu0 0
      %2695 = vmatprep.subr.bf16.mxu0 0
      %2696 = vmatpush1.bf16.msra.mxu0 0
      %2697 = vmatprep.subr.bf16.mxu0 0
      %2698 = vmatpush1.bf16.msra.mxu0 0
      %2699 = vmatprep.subr.bf16.mxu0 0
      %2700 = vmatpush1.bf16.msra.mxu0 0
      %2701 = vmatprep.subr.bf16.mxu0 0
      %2702 = vmatpush1.bf16.msra.mxu0 0
      %2703 = vmatprep.subr.bf16.mxu0 0
      %2704 = vmatpush1.bf16.msra.mxu0 0
      %2705 = vmatprep.subr.bf16.mxu0 0
      %2706 = vmatpush1.bf16.msra.mxu0 0
      %2707 = vmatprep.mubr.bf16.mxu0 0
      %2708 = vmatmul.mubr.bf16.gmra.mrb[0].mxu0 %v2617
      %v2709 = vpop.f32.mrb[0].mxu0
      %v2710 = vadd.f32 %v2657, %v2709
      %v2711 = vpop.f32.mrb[0].mxu0
      %v2712 = vadd.f32 %v2659, %v2711
      %v2713 = vpop.f32.mrb[0].mxu0
      %v2714 = vadd.f32 %v2661, %v2713
      %v2715 = vpop.f32.mrb[0].mxu0
      %v2716 = vadd.f32 %v2663, %v2715
      %2717 = vmatprep.mubr.bf16.mxu0 0
      %2718 = vmatmul.mubr.bf16.gmra.mrb[0].mxu0 %v2620
      %v2719 = vpop.f32.mrb[0].mxu0
      %v2720 = vadd.f32 %v2667, %v2719
      %v2721 = vpop.f32.mrb[0].mxu0
      %v2722 = vadd.f32 %v2669, %v2721
      %v2723 = vpop.f32.mrb[0].mxu0
      %v2724 = vadd.f32 %v2671, %v2723
      %v2725 = vpop.f32.mrb[0].mxu0
      %v2726 = vadd.f32 %v2673, %v2725
      %2727 = vdwg.mxu0
      %2729 = vset.pattern.permute.xlu0 0
      %2730 = vperm.xlu0 %2729, %v317
      %v2731 = vpop.permute.xlu0 %2730
      %2734 = vset.pattern.permute.xlu0 0
      %2735 = vperm.xlu0 %2734, %v318
      %v2736 = vpop.permute.xlu0 %2735
      %2739 = vset.pattern.permute.xlu0 0
      %2740 = vperm.xlu0 %2739, %v319
      %v2741 = vpop.permute.xlu0 %2740
      %2744 = vset.pattern.permute.xlu0 0
      %2745 = vperm.xlu0 %2744, %v320
      %v2746 = vpop.permute.xlu0 %2745
      %v2748 = vmul.f32 %v2710, %v2731
      %v2749 = vmul.f32 %v2712, %v2731
      %v2750 = vmul.f32 %v2714, %v2736
      %v2751 = vmul.f32 %v2716, %v2736
      %v2752 = vmul.f32 %v2720, %v2741
      %v2753 = vmul.f32 %v2722, %v2741
      %v2754 = vmul.f32 %v2724, %v2746
      %v2755 = vmul.f32 %v2726, %v2746
      %2756 = vset.pattern.permute.xlu0 1
      %2757 = vperm.xlu0 %2756, %v317
      %v2758 = vpop.permute.xlu0 %2757
      %2760 = vset.pattern.permute.xlu0 1
      %2761 = vperm.xlu0 %2760, %v318
      %v2762 = vpop.permute.xlu0 %2761
      %2764 = vset.pattern.permute.xlu0 1
      %2765 = vperm.xlu0 %2764, %v319
      %v2766 = vpop.permute.xlu0 %2765
      %2768 = vset.pattern.permute.xlu0 1
      %2769 = vperm.xlu0 %2768, %v320
      %v2770 = vpop.permute.xlu0 %2769
      %v2772 = vadd.f32 %v2748, %v2758
      %v2773 = vadd.f32 %v2749, %v2758
      %v2774 = vadd.f32 %v2750, %v2762
      %v2775 = vadd.f32 %v2751, %v2762
      %v2776 = vadd.f32 %v2752, %v2766
      %v2777 = vadd.f32 %v2753, %v2766
      %v2778 = vadd.f32 %v2754, %v2770
      %v2779 = vadd.f32 %v2755, %v2770
      %vm2780 = vcmp.ge.f32.partialorder %v2772, 0.0
      %vm2781 = vcmp.ge.f32.partialorder %v2773, 0.0
      %vm2782 = vcmp.ge.f32.partialorder %v2774, 0.0
      %vm2783 = vcmp.ge.f32.partialorder %v2775, 0.0
      %vm2784 = vcmp.ge.f32.partialorder %v2776, 0.0
      %vm2785 = vcmp.ge.f32.partialorder %v2777, 0.0
      %vm2786 = vcmp.ge.f32.partialorder %v2778, 0.0
      %vm2787 = vcmp.ge.f32.partialorder %v2779, 0.0
      %v2788 = vmul.f32 %v2772, 0.2
      %v2789 = vmul.f32 %v2773, 0.2
      %v2790 = vmul.f32 %v2774, 0.2
      %v2791 = vmul.f32 %v2775, 0.2
      %v2792 = vmul.f32 %v2776, 0.2
      %v2793 = vmul.f32 %v2777, 0.2
      %v2794 = vmul.f32 %v2778, 0.2
      %v2795 = vmul.f32 %v2779, 0.2
      %v2796 = vsel %vm2780, %v2772, %v2788
      %v2797 = vsel %vm2781, %v2773, %v2789
      %v2798 = vsel %vm2782, %v2774, %v2790
      %v2799 = vsel %vm2783, %v2775, %v2791
      %v2800 = vsel %vm2784, %v2776, %v2792
      %v2801 = vsel %vm2785, %v2777, %v2793
      %v2802 = vsel %vm2786, %v2778, %v2794
      %v2803 = vsel %vm2787, %v2779, %v2795
      %v2804 = vpack.c.bf16 %v2798, %v2796
      %v2805 = vpack.c.bf16 %v2799, %v2797
      %v2806 = vpack.c.bf16 %v2802, %v2800
      %v2807 = vpack.c.bf16 %v2803, %v2801
      %2808 = vst [vmem:[#allocation2] sm:$0xff] %v2804
      %2809 = vst [vmem:[#allocation2 + $0x8] sm:$0xff] %v2805
      %2810 = vst [vmem:[#allocation2 + $0x10] sm:$0xff] %v2806
      %2811 = vst [vmem:[#allocation2 + $0x18] sm:$0xff] %v2807
      %v2812 = vld [vmem:[#allocation2] sm:$0xff]
      %v2813 = vld [vmem:[#allocation2 + $0x8] sm:$0xff]
      %v2814 = vld [vmem:[#allocation2 + $0x10] sm:$0xff]
      %v2815 = vld [vmem:[#allocation2 + $0x18] sm:$0xff]
      %2820 = vrot.lane.b32.xlu0 %v2812, 16
      %v2821 = vpop.permute.xlu0 %2820
      %2822 = vrot.lane.b32.xlu0 %v2813, 16
      %v2823 = vpop.permute.xlu0 %2822
      %2824 = vrot.lane.b32.xlu0 %v2814, 16
      %v2825 = vpop.permute.xlu0 %2824
      %2826 = vrot.lane.b32.xlu0 %v2815, 16
      %v2827 = vpop.permute.xlu0 %2826
      %v2828 = vsel %vm341, %v2821, %v2823
      %v2829 = vsel %vm341, %v2825, %v2827
      %v2833 = vsel %vm343, 0, %v2821
      %v2836 = vsel %vm343, 0, %v2825
      %2840 = vrot.lane.b32.xlu0 %v2833, 1
      %v2841 = vpop.permute.xlu0 %2840
      %2842 = vrot.lane.b32.xlu0 %v2828, 1
      %v2843 = vpop.permute.xlu0 %2842
      %2844 = vrot.lane.b32.xlu0 %v2836, 1
      %v2845 = vpop.permute.xlu0 %2844
      %2846 = vrot.lane.b32.xlu0 %v2829, 1
      %v2847 = vpop.permute.xlu0 %2846
      %v2848 = vsel %vm352, %v2841, %v2843
      %v2849 = vsel %vm352, %v2845, %v2847
      %v2853 = vsel %vm355, 0, %v2841
      %v2856 = vsel %vm355, 0, %v2845
      %v2858 = vsel %vm381, %v2853, 0
      %v2859 = vsel %vm382, %v2848, 0
      %v2860 = vsel %vm381, %v2856, 0
      %v2861 = vsel %vm382, %v2849, 0
      %2862 = vrot.lane.b32.xlu0 %v2833, 127
      %v2863 = vpop.permute.xlu0 %2862
      %2864 = vrot.lane.b32.xlu0 %v2828, 127
      %v2865 = vpop.permute.xlu0 %2864
      %2866 = vrot.lane.b32.xlu0 %v2836, 127
      %v2867 = vpop.permute.xlu0 %2866
      %2868 = vrot.lane.b32.xlu0 %v2829, 127
      %v2869 = vpop.permute.xlu0 %2868
      %v2870 = vsel %vm389, %v2863, %v2865
      %v2871 = vsel %vm389, %v2867, %v2869
      %v2875 = vsel %vm392, %v2865, 0
      %v2878 = vsel %vm392, %v2869, 0
      %v2880 = vsel %vm418, %v2870, 0
      %v2881 = vsel %vm419, %v2875, 0
      %v2882 = vsel %vm418, %v2871, 0
      %v2883 = vsel %vm419, %v2878, 0
      %2884 = vrot.lane.b32.xlu0 %v2812, 1
      %v2885 = vpop.permute.xlu0 %2884
      %2886 = vrot.lane.b32.xlu0 %v2813, 1
      %v2887 = vpop.permute.xlu0 %2886
      %2888 = vrot.lane.b32.xlu0 %v2814, 1
      %v2889 = vpop.permute.xlu0 %2888
      %2890 = vrot.lane.b32.xlu0 %v2815, 1
      %v2891 = vpop.permute.xlu0 %2890
      %v2892 = vsel %vm352, %v2885, %v2887
      %v2893 = vsel %vm352, %v2889, %v2891
      %v2897 = vsel %vm355, 0, %v2885
      %v2900 = vsel %vm355, 0, %v2889
      %v2902 = vsel %vm381, %v2897, 0
      %v2903 = vsel %vm382, %v2892, 0
      %v2904 = vsel %vm381, %v2900, 0
      %v2905 = vsel %vm382, %v2893, 0
      %2906 = vrot.lane.b32.xlu0 %v2812, 127
      %v2907 = vpop.permute.xlu0 %2906
      %2908 = vrot.lane.b32.xlu0 %v2813, 127
      %v2909 = vpop.permute.xlu0 %2908
      %2910 = vrot.lane.b32.xlu0 %v2814, 127
      %v2911 = vpop.permute.xlu0 %2910
      %2912 = vrot.lane.b32.xlu0 %v2815, 127
      %v2913 = vpop.permute.xlu0 %2912
      %v2914 = vsel %vm389, %v2907, %v2909
      %v2915 = vsel %vm389, %v2911, %v2913
      %v2919 = vsel %vm392, %v2909, 0
      %v2922 = vsel %vm392, %v2913, 0
      %v2924 = vsel %vm418, %v2914, 0
      %v2925 = vsel %vm419, %v2919, 0
      %v2926 = vsel %vm418, %v2915, 0
      %v2927 = vsel %vm419, %v2922, 0
      %2928 = vrot.lane.b32.xlu0 %v2812, 112
      %v2929 = vpop.permute.xlu0 %2928
      %2930 = vrot.lane.b32.xlu0 %v2813, 112
      %v2931 = vpop.permute.xlu0 %2930
      %2932 = vrot.lane.b32.xlu0 %v2814, 112
      %v2933 = vpop.permute.xlu0 %2932
      %2934 = vrot.lane.b32.xlu0 %v2815, 112
      %v2935 = vpop.permute.xlu0 %2934
      %v2936 = vsel %vm448, %v2929, %v2931
      %v2937 = vsel %vm448, %v2933, %v2935
      %v2941 = vsel %vm450, %v2931, 0
      %v2944 = vsel %vm450, %v2935, 0
      %2948 = vrot.lane.b32.xlu0 %v2936, 1
      %v2949 = vpop.permute.xlu0 %2948
      %2950 = vrot.lane.b32.xlu0 %v2941, 1
      %v2951 = vpop.permute.xlu0 %2950
      %2952 = vrot.lane.b32.xlu0 %v2937, 1
      %v2953 = vpop.permute.xlu0 %2952
      %2954 = vrot.lane.b32.xlu0 %v2944, 1
      %v2955 = vpop.permute.xlu0 %2954
      %v2956 = vsel %vm352, %v2949, %v2951
      %v2957 = vsel %vm352, %v2953, %v2955
      %v2961 = vsel %vm355, 0, %v2949
      %v2964 = vsel %vm355, 0, %v2953
      %v2966 = vsel %vm381, %v2961, 0
      %v2967 = vsel %vm382, %v2956, 0
      %v2968 = vsel %vm381, %v2964, 0
      %v2969 = vsel %vm382, %v2957, 0
      %2970 = vrot.lane.b32.xlu0 %v2936, 127
      %v2971 = vpop.permute.xlu0 %2970
      %2972 = vrot.lane.b32.xlu0 %v2941, 127
      %v2973 = vpop.permute.xlu0 %2972
      %2974 = vrot.lane.b32.xlu0 %v2937, 127
      %v2975 = vpop.permute.xlu0 %2974
      %2976 = vrot.lane.b32.xlu0 %v2944, 127
      %v2977 = vpop.permute.xlu0 %2976
      %v2978 = vsel %vm389, %v2971, %v2973
      %v2979 = vsel %vm389, %v2975, %v2977
      %v2983 = vsel %vm392, %v2973, 0
      %v2986 = vsel %vm392, %v2977, 0
      %v2988 = vsel %vm418, %v2978, 0
      %v2989 = vsel %vm419, %v2983, 0
      %v2990 = vsel %vm418, %v2979, 0
      %v2991 = vsel %vm419, %v2986, 0
      %s2992 = scalar_lea.vmem %s2, 240
      %v2993 = vld [vmem:[%s2992] sm:$0xff]
      %v2994 = vld [vmem:[%s2992 + $0x8] sm:$0xf]
      %v2995 = vld [vmem:[%s2992 + $0xc] sm:$0xff]
      %v2996 = vld [vmem:[%s2992 + $0x14] sm:$0xf]
      %v2997 = vld [vmem:[%s2992 + $0x18] sm:$0xff]
      %v2998 = vld [vmem:[%s2992 + $0x20] sm:$0xf]
      %v2999 = vld [vmem:[%s2992 + $0x24] sm:$0xff]
      %v3000 = vld [vmem:[%s2992 + $0x2c] sm:$0xf]
      %v3009 = vunpack.c.l.b16 %v2993
      %v3010 = vunpack.c.h.b16 %v2993
      %v3011 = vunpack.c.l.b16 %v2994
      %v3012 = vunpack.c.l.b16 %v2995
      %v3013 = vunpack.c.h.b16 %v2995
      %v3014 = vunpack.c.l.b16 %v2996
      %v3015 = vunpack.c.l.b16 %v2997
      %v3016 = vunpack.c.h.b16 %v2997
      %v3017 = vunpack.c.l.b16 %v2998
      %v3018 = vunpack.c.l.b16 %v2999
      %v3019 = vunpack.c.h.b16 %v2999
      %v3020 = vunpack.c.l.b16 %v3000
      %v3021 = vpack.c.b16 %v3012, %v3009
      %v3022 = vpack.c.b16 %v3013, %v3010
      %v3023 = vpack.c.b16 %v3014, %v3011
      %v3024 = vpack.c.b16 %v3018, %v3015
      %v3025 = vpack.c.b16 %v3019, %v3016
      %v3026 = vpack.c.b16 %v3020, %v3017
      %v3032 = vsel %vm889, %v3023, 0
      %v3035 = vsel %vm889, %v3026, 0
      %3037 = vmatprep.subr.bf16.mxu0 %v2859
      %3038 = vmatpush1.bf16.msra.mxu0 %v2858
      %3039 = vmatprep.subr.bf16.mxu0 %v2861
      %3040 = vmatpush1.bf16.msra.mxu0 %v2860
      %3041 = vmatprep.subr.bf16.mxu0 %v2828
      %3042 = vmatpush1.bf16.msra.mxu0 %v2833
      %3043 = vmatprep.subr.bf16.mxu0 %v2829
      %3044 = vmatpush1.bf16.msra.mxu0 %v2836
      %3045 = vmatprep.subr.bf16.mxu0 %v2881
      %3046 = vmatpush1.bf16.msra.mxu0 %v2880
      %3047 = vmatprep.subr.bf16.mxu0 %v2883
      %3048 = vmatpush1.bf16.msra.mxu0 %v2882
      %3049 = vmatprep.subr.bf16.mxu0 %v2903
      %3050 = vmatpush1.bf16.msra.mxu0 %v2902
      %3051 = vmatprep.subr.bf16.mxu0 %v2905
      %3052 = vmatpush1.bf16.msra.mxu0 %v2904
      %3053 = vmatprep.subr.bf16.mxu0 %v2813
      %3054 = vmatpush1.bf16.msra.mxu0 %v2812
      %3055 = vmatprep.subr.bf16.mxu0 %v2815
      %3056 = vmatpush1.bf16.msra.mxu0 %v2814
      %3057 = vmatprep.subr.bf16.mxu0 %v2925
      %3058 = vmatpush1.bf16.msra.mxu0 %v2924
      %3059 = vmatprep.subr.bf16.mxu0 %v2927
      %3060 = vmatpush1.bf16.msra.mxu0 %v2926
      %3061 = vmatprep.subr.bf16.mxu0 %v2967
      %3062 = vmatpush1.bf16.msra.mxu0 %v2966
      %3063 = vmatprep.subr.bf16.mxu0 %v2969
      %3064 = vmatpush1.bf16.msra.mxu0 %v2968
      %3065 = vmatprep.subr.bf16.mxu0 %v2941
      %3066 = vmatpush1.bf16.msra.mxu0 %v2936
      %3067 = vmatprep.subr.bf16.mxu0 %v2944
      %3068 = vmatpush1.bf16.msra.mxu0 %v2937
      %3069 = vmatprep.mubr.bf16.mxu0 %v3022
      %3070 = vmatmul.mubr.bf16.gmra.mrb[0].mxu0 %v3021
      %v3071 = vpop.f32.mrb[0].mxu0
      %v3072 = vadd.f32 0.0, %v3071
      %v3073 = vpop.f32.mrb[0].mxu0
      %v3074 = vadd.f32 0.0, %v3073
      %v3075 = vpop.f32.mrb[0].mxu0
      %v3076 = vadd.f32 0.0, %v3075
      %v3077 = vpop.f32.mrb[0].mxu0
      %v3078 = vadd.f32 0.0, %v3077
      %3079 = vmatprep.mubr.bf16.mxu0 %v3025
      %3080 = vmatmul.mubr.bf16.gmra.mrb[0].mxu0 %v3024
      %v3081 = vpop.f32.mrb[0].mxu0
      %v3082 = vadd.f32 0.0, %v3081
      %v3083 = vpop.f32.mrb[0].mxu0
      %v3084 = vadd.f32 0.0, %v3083
      %v3085 = vpop.f32.mrb[0].mxu0
      %v3086 = vadd.f32 0.0, %v3085
      %v3087 = vpop.f32.mrb[0].mxu0
      %v3088 = vadd.f32 0.0, %v3087
      %3089 = vdwg.mxu0
      %3090 = vmatprep.subr.bf16.mxu0 %v2989
      %3091 = vmatpush1.bf16.msra.mxu0 %v2988
      %3092 = vmatprep.subr.bf16.mxu0 %v2991
      %3093 = vmatpush1.bf16.msra.mxu0 %v2990
      %3094 = vmatprep.subr.bf16.mxu0 0
      %3095 = vmatpush1.bf16.msra.mxu0 0
      %3096 = vmatprep.subr.bf16.mxu0 0
      %3097 = vmatpush1.bf16.msra.mxu0 0
      %3098 = vmatprep.subr.bf16.mxu0 0
      %3099 = vmatpush1.bf16.msra.mxu0 0
      %3100 = vmatprep.subr.bf16.mxu0 0
      %3101 = vmatpush1.bf16.msra.mxu0 0
      %3102 = vmatprep.subr.bf16.mxu0 0
      %3103 = vmatpush1.bf16.msra.mxu0 0
      %3104 = vmatprep.subr.bf16.mxu0 0
      %3105 = vmatpush1.bf16.msra.mxu0 0
      %3106 = vmatprep.subr.bf16.mxu0 0
      %3107 = vmatpush1.bf16.msra.mxu0 0
      %3108 = vmatprep.subr.bf16.mxu0 0
      %3109 = vmatpush1.bf16.msra.mxu0 0
      %3110 = vmatprep.subr.bf16.mxu0 0
      %3111 = vmatpush1.bf16.msra.mxu0 0
      %3112 = vmatprep.subr.bf16.mxu0 0
      %3113 = vmatpush1.bf16.msra.mxu0 0
      %3114 = vmatprep.subr.bf16.mxu0 0
      %3115 = vmatpush1.bf16.msra.mxu0 0
      %3116 = vmatprep.subr.bf16.mxu0 0
      %3117 = vmatpush1.bf16.msra.mxu0 0
      %3118 = vmatprep.subr.bf16.mxu0 0
      %3119 = vmatpush1.bf16.msra.mxu0 0
      %3120 = vmatprep.subr.bf16.mxu0 0
      %3121 = vmatpush1.bf16.msra.mxu0 0
      %3122 = vmatprep.mubr.bf16.mxu0 0
      %3123 = vmatmul.mubr.bf16.gmra.mrb[0].mxu0 %v3032
      %v3124 = vpop.f32.mrb[0].mxu0
      %v3125 = vadd.f32 %v3072, %v3124
      %v3126 = vpop.f32.mrb[0].mxu0
      %v3127 = vadd.f32 %v3074, %v3126
      %v3128 = vpop.f32.mrb[0].mxu0
      %v3129 = vadd.f32 %v3076, %v3128
      %v3130 = vpop.f32.mrb[0].mxu0
      %v3131 = vadd.f32 %v3078, %v3130
      %3132 = vmatprep.mubr.bf16.mxu0 0
      %3133 = vmatmul.mubr.bf16.gmra.mrb[0].mxu0 %v3035
      %v3134 = vpop.f32.mrb[0].mxu0
      %v3135 = vadd.f32 %v3082, %v3134
      %v3136 = vpop.f32.mrb[0].mxu0
      %v3137 = vadd.f32 %v3084, %v3136
      %v3138 = vpop.f32.mrb[0].mxu0
      %v3139 = vadd.f32 %v3086, %v3138
      %v3140 = vpop.f32.mrb[0].mxu0
      %v3141 = vadd.f32 %v3088, %v3140
      %3142 = vdwg.mxu0
      %3144 = vset.pattern.permute.xlu0 0
      %3145 = vperm.xlu0 %3144, %v321
      %v3146 = vpop.permute.xlu0 %3145
      %3149 = vset.pattern.permute.xlu0 0
      %3150 = vperm.xlu0 %3149, %v322
      %v3151 = vpop.permute.xlu0 %3150
      %3154 = vset.pattern.permute.xlu0 0
      %3155 = vperm.xlu0 %3154, %v323
      %v3156 = vpop.permute.xlu0 %3155
      %3159 = vset.pattern.permute.xlu0 0
      %3160 = vperm.xlu0 %3159, %v324
      %v3161 = vpop.permute.xlu0 %3160
      %v3163 = vmul.f32 %v3125, %v3146
      %v3164 = vmul.f32 %v3127, %v3146
      %v3165 = vmul.f32 %v3129, %v3151
      %v3166 = vmul.f32 %v3131, %v3151
      %v3167 = vmul.f32 %v3135, %v3156
      %v3168 = vmul.f32 %v3137, %v3156
      %v3169 = vmul.f32 %v3139, %v3161
      %v3170 = vmul.f32 %v3141, %v3161
      %3171 = vset.pattern.permute.xlu0 1
      %3172 = vperm.xlu0 %3171, %v321
      %v3173 = vpop.permute.xlu0 %3172
      %3175 = vset.pattern.permute.xlu0 1
      %3176 = vperm.xlu0 %3175, %v322
      %v3177 = vpop.permute.xlu0 %3176
      %3179 = vset.pattern.permute.xlu0 1
      %3180 = vperm.xlu0 %3179, %v323
      %v3181 = vpop.permute.xlu0 %3180
      %3183 = vset.pattern.permute.xlu0 1
      %3184 = vperm.xlu0 %3183, %v324
      %v3185 = vpop.permute.xlu0 %3184
      %v3187 = vadd.f32 %v3163, %v3173
      %v3188 = vadd.f32 %v3164, %v3173
      %v3189 = vadd.f32 %v3165, %v3177
      %v3190 = vadd.f32 %v3166, %v3177
      %v3191 = vadd.f32 %v3167, %v3181
      %v3192 = vadd.f32 %v3168, %v3181
      %v3193 = vadd.f32 %v3169, %v3185
      %v3194 = vadd.f32 %v3170, %v3185
      %vm3195 = vcmp.ge.f32.partialorder %v3187, 0.0
      %vm3196 = vcmp.ge.f32.partialorder %v3188, 0.0
      %vm3197 = vcmp.ge.f32.partialorder %v3189, 0.0
      %vm3198 = vcmp.ge.f32.partialorder %v3190, 0.0
      %vm3199 = vcmp.ge.f32.partialorder %v3191, 0.0
      %vm3200 = vcmp.ge.f32.partialorder %v3192, 0.0
      %vm3201 = vcmp.ge.f32.partialorder %v3193, 0.0
      %vm3202 = vcmp.ge.f32.partialorder %v3194, 0.0
      %v3203 = vmul.f32 %v3187, 0.2
      %v3204 = vmul.f32 %v3188, 0.2
      %v3205 = vmul.f32 %v3189, 0.2
      %v3206 = vmul.f32 %v3190, 0.2
      %v3207 = vmul.f32 %v3191, 0.2
      %v3208 = vmul.f32 %v3192, 0.2
      %v3209 = vmul.f32 %v3193, 0.2
      %v3210 = vmul.f32 %v3194, 0.2
      %v3211 = vsel %vm3195, %v3187, %v3203
      %v3212 = vsel %vm3196, %v3188, %v3204
      %v3213 = vsel %vm3197, %v3189, %v3205
      %v3214 = vsel %vm3198, %v3190, %v3206
      %v3215 = vsel %vm3199, %v3191, %v3207
      %v3216 = vsel %vm3200, %v3192, %v3208
      %v3217 = vsel %vm3201, %v3193, %v3209
      %v3218 = vsel %vm3202, %v3194, %v3210
      %v3219 = vpack.c.bf16 %v3213, %v3211
      %v3220 = vpack.c.bf16 %v3214, %v3212
      %v3221 = vpack.c.bf16 %v3217, %v3215
      %v3222 = vpack.c.bf16 %v3218, %v3216
      %3223 = vst [vmem:[#allocation2] sm:$0xff] %v3219
      %3224 = vst [vmem:[#allocation2 + $0x8] sm:$0xff] %v3220
      %3225 = vst [vmem:[#allocation2 + $0x10] sm:$0xff] %v3221
      %3226 = vst [vmem:[#allocation2 + $0x18] sm:$0xff] %v3222
      %v3227 = vld [vmem:[#allocation2] sm:$0xff]
      %v3228 = vld [vmem:[#allocation2 + $0x8] sm:$0xff]
      %v3229 = vld [vmem:[#allocation2 + $0x10] sm:$0xff]
      %v3230 = vld [vmem:[#allocation2 + $0x18] sm:$0xff]
      %3235 = vrot.lane.b32.xlu0 %v3227, 16
      %v3236 = vpop.permute.xlu0 %3235
      %3237 = vrot.lane.b32.xlu0 %v3228, 16
      %v3238 = vpop.permute.xlu0 %3237
      %3239 = vrot.lane.b32.xlu0 %v3229, 16
      %v3240 = vpop.permute.xlu0 %3239
      %3241 = vrot.lane.b32.xlu0 %v3230, 16
      %v3242 = vpop.permute.xlu0 %3241
      %v3243 = vsel %vm341, %v3236, %v3238
      %v3244 = vsel %vm341, %v3240, %v3242
      %v3248 = vsel %vm343, 0, %v3236
      %v3251 = vsel %vm343, 0, %v3240
      %3255 = vrot.lane.b32.xlu0 %v3248, 1
      %v3256 = vpop.permute.xlu0 %3255
      %3257 = vrot.lane.b32.xlu0 %v3243, 1
      %v3258 = vpop.permute.xlu0 %3257
      %3259 = vrot.lane.b32.xlu0 %v3251, 1
      %v3260 = vpop.permute.xlu0 %3259
      %3261 = vrot.lane.b32.xlu0 %v3244, 1
      %v3262 = vpop.permute.xlu0 %3261
      %v3263 = vsel %vm352, %v3256, %v3258
      %v3264 = vsel %vm352, %v3260, %v3262
      %v3268 = vsel %vm355, 0, %v3256
      %v3271 = vsel %vm355, 0, %v3260
      %v3273 = vsel %vm381, %v3268, 0
      %v3274 = vsel %vm382, %v3263, 0
      %v3275 = vsel %vm381, %v3271, 0
      %v3276 = vsel %vm382, %v3264, 0
      %3277 = vrot.lane.b32.xlu0 %v3248, 127
      %v3278 = vpop.permute.xlu0 %3277
      %3279 = vrot.lane.b32.xlu0 %v3243, 127
      %v3280 = vpop.permute.xlu0 %3279
      %3281 = vrot.lane.b32.xlu0 %v3251, 127
      %v3282 = vpop.permute.xlu0 %3281
      %3283 = vrot.lane.b32.xlu0 %v3244, 127
      %v3284 = vpop.permute.xlu0 %3283
      %v3285 = vsel %vm389, %v3278, %v3280
      %v3286 = vsel %vm389, %v3282, %v3284
      %v3290 = vsel %vm392, %v3280, 0
      %v3293 = vsel %vm392, %v3284, 0
      %v3295 = vsel %vm418, %v3285, 0
      %v3296 = vsel %vm419, %v3290, 0
      %v3297 = vsel %vm418, %v3286, 0
      %v3298 = vsel %vm419, %v3293, 0
      %3299 = vrot.lane.b32.xlu0 %v3227, 1
      %v3300 = vpop.permute.xlu0 %3299
      %3301 = vrot.lane.b32.xlu0 %v3228, 1
      %v3302 = vpop.permute.xlu0 %3301
      %3303 = vrot.lane.b32.xlu0 %v3229, 1
      %v3304 = vpop.permute.xlu0 %3303
      %3305 = vrot.lane.b32.xlu0 %v3230, 1
      %v3306 = vpop.permute.xlu0 %3305
      %v3307 = vsel %vm352, %v3300, %v3302
      %v3308 = vsel %vm352, %v3304, %v3306
      %v3312 = vsel %vm355, 0, %v3300
      %v3315 = vsel %vm355, 0, %v3304
      %v3317 = vsel %vm381, %v3312, 0
      %v3318 = vsel %vm382, %v3307, 0
      %v3319 = vsel %vm381, %v3315, 0
      %v3320 = vsel %vm382, %v3308, 0
      %3321 = vrot.lane.b32.xlu0 %v3227, 127
      %v3322 = vpop.permute.xlu0 %3321
      %3323 = vrot.lane.b32.xlu0 %v3228, 127
      %v3324 = vpop.permute.xlu0 %3323
      %3325 = vrot.lane.b32.xlu0 %v3229, 127
      %v3326 = vpop.permute.xlu0 %3325
      %3327 = vrot.lane.b32.xlu0 %v3230, 127
      %v3328 = vpop.permute.xlu0 %3327
      %v3329 = vsel %vm389, %v3322, %v3324
      %v3330 = vsel %vm389, %v3326, %v3328
      %v3334 = vsel %vm392, %v3324, 0
      %v3337 = vsel %vm392, %v3328, 0
      %v3339 = vsel %vm418, %v3329, 0
      %v3340 = vsel %vm419, %v3334, 0
      %v3341 = vsel %vm418, %v3330, 0
      %v3342 = vsel %vm419, %v3337, 0
      %3343 = vrot.lane.b32.xlu0 %v3227, 112
      %v3344 = vpop.permute.xlu0 %3343
      %3345 = vrot.lane.b32.xlu0 %v3228, 112
      %v3346 = vpop.permute.xlu0 %3345
      %3347 = vrot.lane.b32.xlu0 %v3229, 112
      %v3348 = vpop.permute.xlu0 %3347
      %3349 = vrot.lane.b32.xlu0 %v3230, 112
      %v3350 = vpop.permute.xlu0 %3349
      %v3351 = vsel %vm448, %v3344, %v3346
      %v3352 = vsel %vm448, %v3348, %v3350
      %v3356 = vsel %vm450, %v3346, 0
      %v3359 = vsel %vm450, %v3350, 0
      %3363 = vrot.lane.b32.xlu0 %v3351, 1
      %v3364 = vpop.permute.xlu0 %3363
      %3365 = vrot.lane.b32.xlu0 %v3356, 1
      %v3366 = vpop.permute.xlu0 %3365
      %3367 = vrot.lane.b32.xlu0 %v3352, 1
      %v3368 = vpop.permute.xlu0 %3367
      %3369 = vrot.lane.b32.xlu0 %v3359, 1
      %v3370 = vpop.permute.xlu0 %3369
      %v3371 = vsel %vm352, %v3364, %v3366
      %v3372 = vsel %vm352, %v3368, %v3370
      %v3376 = vsel %vm355, 0, %v3364
      %v3379 = vsel %vm355, 0, %v3368
      %v3381 = vsel %vm381, %v3376, 0
      %v3382 = vsel %vm382, %v3371, 0
      %v3383 = vsel %vm381, %v3379, 0
      %v3384 = vsel %vm382, %v3372, 0
      %3385 = vrot.lane.b32.xlu0 %v3351, 127
      %v3386 = vpop.permute.xlu0 %3385
      %3387 = vrot.lane.b32.xlu0 %v3356, 127
      %v3388 = vpop.permute.xlu0 %3387
      %3389 = vrot.lane.b32.xlu0 %v3352, 127
      %v3390 = vpop.permute.xlu0 %3389
      %3391 = vrot.lane.b32.xlu0 %v3359, 127
      %v3392 = vpop.permute.xlu0 %3391
      %v3393 = vsel %vm389, %v3386, %v3388
      %v3394 = vsel %vm389, %v3390, %v3392
      %v3398 = vsel %vm392, %v3388, 0
      %v3401 = vsel %vm392, %v3392, 0
      %v3403 = vsel %vm418, %v3393, 0
      %v3404 = vsel %vm419, %v3398, 0
      %v3405 = vsel %vm418, %v3394, 0
      %v3406 = vsel %vm419, %v3401, 0
      %v3407 = vld [vmem:[%s3] sm:$0x7]
      %v3408 = vld [vmem:[%s289] sm:$0x3]
      %v3411 = vunpack.c.l.s4 1966171168
      %v3412 = vunpack.c.0.s8 %v3411
      %v3413 = vlaneseq
      %v3414 = vshrl.u32 %v3413, 7
      %v3415 = vsub.s32 %v3412, %v3414
      %v3416 = vrot.slane %v3407, %v3415
      %v3417 = vcombine.high %v3416, %v3416
      %v3419 = vunpack.c.l.s4 1966171168
      %v3420 = vunpack.c.0.s8 %v3419
      %v3421 = vlaneseq
      %v3422 = vshrl.u32 %v3421, 7
      %v3423 = vsub.s32 %v3420, %v3422
      %v3424 = vrot.slane %v3416, %v3423
      %v3426 = vunpack.c.l.s4 1966171168
      %v3427 = vunpack.c.0.s8 %v3426
      %v3428 = vlaneseq
      %v3429 = vshrl.u32 %v3428, 7
      %v3430 = vsub.s32 %v3427, %v3429
      %v3431 = vrot.slane %v3417, %v3430
      %v3432 = vcombine.high %v3424, %v3424
      %v3436 = vlaneseq
      %v3437 = vshrl.u32 %v3436, 7
      %v3438 = vsub.s32 0, %v3437
      %v3439 = vrot.slane %v3408, %v3438
      %v3440 = vlaneseq
      %v3441 = vshrl.u32 %v3440, 7
      %v3442 = vsub.s32 1, %v3441
      %v3443 = vrot.slane %v3408, %v3442
      %v3447 = vsel %vm889, %v3432, 0
      %3449 = vmatprep.subr.bf16.mxu0 %v3274
      %3450 = vmatpush1.bf16.msra.mxu0 %v3273
      %3451 = vmatprep.subr.bf16.mxu0 %v3276
      %3452 = vmatpush1.bf16.msra.mxu0 %v3275
      %3453 = vmatprep.subr.bf16.mxu0 %v3243
      %3454 = vmatpush1.bf16.msra.mxu0 %v3248
      %3455 = vmatprep.subr.bf16.mxu0 %v3244
      %3456 = vmatpush1.bf16.msra.mxu0 %v3251
      %3457 = vmatprep.subr.bf16.mxu0 %v3296
      %3458 = vmatpush1.bf16.msra.mxu0 %v3295
      %3459 = vmatprep.subr.bf16.mxu0 %v3298
      %3460 = vmatpush1.bf16.msra.mxu0 %v3297
      %3461 = vmatprep.subr.bf16.mxu0 %v3318
      %3462 = vmatpush1.bf16.msra.mxu0 %v3317
      %3463 = vmatprep.subr.bf16.mxu0 %v3320
      %3464 = vmatpush1.bf16.msra.mxu0 %v3319
      %3465 = vmatprep.subr.bf16.mxu0 %v3228
      %3466 = vmatpush1.bf16.msra.mxu0 %v3227
      %3467 = vmatprep.subr.bf16.mxu0 %v3230
      %3468 = vmatpush1.bf16.msra.mxu0 %v3229
      %3469 = vmatprep.subr.bf16.mxu0 %v3340
      %3470 = vmatpush1.bf16.msra.mxu0 %v3339
      %3471 = vmatprep.subr.bf16.mxu0 %v3342
      %3472 = vmatpush1.bf16.msra.mxu0 %v3341
      %3473 = vmatprep.subr.bf16.mxu0 %v3382
      %3474 = vmatpush1.bf16.msra.mxu0 %v3381
      %3475 = vmatprep.subr.bf16.mxu0 %v3384
      %3476 = vmatpush1.bf16.msra.mxu0 %v3383
      %3477 = vmatprep.subr.bf16.mxu0 %v3356
      %3478 = vmatpush1.bf16.msra.mxu0 %v3351
      %3479 = vmatprep.subr.bf16.mxu0 %v3359
      %3480 = vmatpush1.bf16.msra.mxu0 %v3352
      %3481 = vmatprep.mubr.bf16.mxu0 %v3431
      %3482 = vmatmul.mubr.bf16.gmra.mrb[0].mxu0 %v3424
      %v3483 = vpop.f32.mrb[0].mxu0
      %v3484 = vadd.f32 %v3439, %v3483
      %v3485 = vpop.f32.mrb[0].mxu0
      %v3486 = vadd.f32 %v3443, %v3485
      %v3487 = vpop.f32.mrb[0].mxu0
      %v3488 = vpop.f32.mrb[0].mxu0
      %3489 = vdwg.mxu0
      %3490 = vmatprep.subr.bf16.mxu0 %v3404
      %3491 = vmatpush1.bf16.msra.mxu0 %v3403
      %3492 = vmatprep.subr.bf16.mxu0 %v3406
      %3493 = vmatpush1.bf16.msra.mxu0 %v3405
      %3494 = vmatprep.subr.bf16.mxu0 0
      %3495 = vmatpush1.bf16.msra.mxu0 0
      %3496 = vmatprep.subr.bf16.mxu0 0
      %3497 = vmatpush1.bf16.msra.mxu0 0
      %3498 = vmatprep.subr.bf16.mxu0 0
      %3499 = vmatpush1.bf16.msra.mxu0 0
      %3500 = vmatprep.subr.bf16.mxu0 0
      %3501 = vmatpush1.bf16.msra.mxu0 0
      %3502 = vmatprep.subr.bf16.mxu0 0
      %3503 = vmatpush1.bf16.msra.mxu0 0
      %3504 = vmatprep.subr.bf16.mxu0 0
      %3505 = vmatpush1.bf16.msra.mxu0 0
      %3506 = vmatprep.subr.bf16.mxu0 0
      %3507 = vmatpush1.bf16.msra.mxu0 0
      %3508 = vmatprep.subr.bf16.mxu0 0
      %3509 = vmatpush1.bf16.msra.mxu0 0
      %3510 = vmatprep.subr.bf16.mxu0 0
      %3511 = vmatpush1.bf16.msra.mxu0 0
      %3512 = vmatprep.subr.bf16.mxu0 0
      %3513 = vmatpush1.bf16.msra.mxu0 0
      %3514 = vmatprep.subr.bf16.mxu0 0
      %3515 = vmatpush1.bf16.msra.mxu0 0
      %3516 = vmatprep.subr.bf16.mxu0 0
      %3517 = vmatpush1.bf16.msra.mxu0 0
      %3518 = vmatprep.subr.bf16.mxu0 0
      %3519 = vmatpush1.bf16.msra.mxu0 0
      %3520 = vmatprep.subr.bf16.mxu0 0
      %3521 = vmatpush1.bf16.msra.mxu0 0
      %3522 = vmatprep.mubr.bf16.mxu0 0
      %3523 = vmatmul.mubr.bf16.gmra.mrb[0].mxu0 %v3447
      %v3524 = vpop.f32.mrb[0].mxu0
      %v3525 = vadd.f32 %v3484, %v3524
      %v3526 = vpop.f32.mrb[0].mxu0
      %v3527 = vadd.f32 %v3486, %v3526
      %v3528 = vpop.f32.mrb[0].mxu0
      %v3529 = vpop.f32.mrb[0].mxu0
      %3530 = vdwg.mxu0
      %3532 = vset.pattern.permute.xlu0 1
      %3533 = vperm.xlu0 %3532, %v325
      %v3534 = vpop.permute.xlu0 %3533
      %v3536 = vadd.f32 %v3525, %v3534
      %v3537 = vadd.f32 %v3527, %v3534
      %v3538 = vmax.f32 %v3536, 0.0
      %v3539 = vmax.f32 %v3537, 0.0
      %v3542 = vcombine.low %v3538, %v3539
      %v3544 = vunpack.c.l.s4 1966171168
      %v3545 = vunpack.c.0.s8 %v3544
      %v3546 = vlaneseq
      %v3547 = vshrl.u32 %v3546, 7
      %v3548 = vsub.s32 %v3545, %v3547
      %v3549 = vrot.slane %v3542, %v3548
      %v3551 = vunpack.c.l.s4 1966171168
      %v3552 = vunpack.c.0.s8 %v3551
      %v3553 = vlaneseq
      %v3554 = vshrl.u32 %v3553, 7
      %v3555 = vsub.s32 %v3552, %v3554
      %v3556 = vrot.slane %v3549, %v3555
      %v3558 = vlaneseq
      %vm3559 = vcmp.ge.s32.totalorder %v3558, 0
      %vm3560 = vcmp.lt.s32.totalorder %v3558, 256
      %vm3561 = vmand %vm3559, %vm3560
      %3562 = vst.msk [vmem:[%s293] sm:$0x3] %vm3561, %v3556
      %p3563 = scmp.lt.s32.totalorder %s18, 1
      %s3564 = scalar_select %p3563, %s18, 1
      %s3565 = smul.addr %s3564, 2
      %s3566 = scalar_lea.vmem %s7, %s3565
      // Predicated region
      $region49: #{dense_net_forward.1} parent=47 // pred_check
        %p3567 = pneg %p193
      $region50: #{dense_net_forward.1} parent=47 // pred_check_branch
        %3569 = sbr.rel (%p3567) target = $region52
      $region51: #{dense_net_forward.1} parent=47 // pred_region
        _
      $region52: #{dense_net_forward.1} parent=47 // pred_fallthru
        _
    $region48: #{dense_net_forward.1} parent=5 // pred_fallthru
      _
    %p3570 = scmp.le.s32.totalorder 2, %s13
    // Predicated region
    $region53: #{dense_net_forward.1} parent=5 // pred_check
      %p3571 = pneg %p3570
    $region54: #{dense_net_forward.1} parent=5 // pred_check_branch
      %3573 = sbr.rel (%p3571) target = $region56
    $region55: #{dense_net_forward.1} parent=5 // pred_region
      %s3574 = ssub.s32 %s13, 2
      // Predicated region
      $region57: #{dense_net_forward.1} parent=55 // pred_check
        %p3575 = pneg %p199
      $region58: #{dense_net_forward.1} parent=55 // pred_check_branch
        %3577 = sbr.rel (%p3575) target = $region60
      $region59: #{dense_net_forward.1} parent=55 // pred_region
        %p3578 = scmp.lt.s32.totalorder %s19, 1
        %s3579 = scalar_select %p3578, %s19, 1
        %s3580 = smul.addr %s3579, 2
        %s3581 = scalar_lea.vmem %s7, %s3580
      $region60: #{dense_net_forward.1} parent=55 // pred_fallthru
        _
    $region56: #{dense_net_forward.1} parent=5 // pred_fallthru
      _
  $region6: #{dense_net_forward.1} parent=0 // loop_footer
    %s17 = sadd.s32 1, %s13
  $region7: #{dense_net_forward.1} parent=0 // loop_footer_branch
    %12 = sbr.rel target = $region3
  $region8: #{dense_net_forward.1} parent=0 // loop_exit
    _

</llo_original>
